<compile_context>
chip_gen: v6e
topology: v6e:2x2x1
jax: 0.10.0
libtpu: 0.0.40
codegen_flags: <defaults>
</compile_context>

<pallas_src>
import numpy as np

import jax
import jax.numpy as jnp
from jax.experimental import pallas as pl
from jax.experimental.pallas import tpu as pltpu


# (Cin, Cout, kernel, stride, pad) for the three convs in the PyTorch module.
_CONV_SPECS = ((2, 8, 5, 1, 2), (8, 16, 5, 2, 2), (16, 32, 3, 2, 1))
_MLP_UNITS = (256, 128)   # make_mlp([256, 128])
_CNN_FC = 128             # nn.LazyLinear(128) after Flatten
_AM_HID = 128             # first layer of actor_mean

# Rows of the f32 "misc" slab that hold the (1, N) vectors, in this order,
# starting at row `state_dim` (mlp_w0 occupies rows [0, state_dim)).
_VEC_ROWS = ("mlp_b0", "mlp_g0", "mlp_be0",
             "mlp_b1", "mlp_g1", "mlp_be1",
             "c1_b", "c2_b", "c3_b",
             "cfc_b", "am_b0", "am_b1")


def _conv_out(n, k, s, p):
    return (n + 2 * p - k) // s + 1


def _conv_dims(map_hw):
    h, w = map_hw
    hs, ws = [h], [w]
    for (_, _, k, s, p) in _CONV_SPECS:
        hs.append(_conv_out(hs[-1], k, s, p))
        ws.append(_conv_out(ws[-1], k, s, p))
    return hs, ws


def _roundup(x, m):
    return ((x + m - 1) // m) * m


# --------------------------- static slab layout ------------------------------

def _layout(state_dim, map_hw):
    """Static row offsets of every parameter inside the two packed slabs."""
    hs, ws = _conv_dims(map_hw)
    (c1i, c1o, k1, _, _), (c2i, c2o, k2, _, _), (c3i, c3o, k3, _, _) = _CONV_SPECS
    lay = {"vec_base": state_dim,
           "misc_rows": _roundup(state_dim + len(_VEC_ROWS), 8)}
    off = 0

    def alloc(name, rows):
        nonlocal off
        lay[name] = off
        off = _roundup(off + rows, 16)   # bf16 sublane tile = 16 rows

    alloc("mlp_w1", _MLP_UNITS[0])
    alloc("am_w0_s", _MLP_UNITS[1])
    alloc("am_w0_m", _CNN_FC)
    alloc("am_w1", _AM_HID)
    alloc("c1_w", k1 * c1i * ws[0])
    alloc("c2_w", k2 * ws[1] * c2i)
    alloc("c3_w", k3 * ws[2] * c3i)
    alloc("cfc_w", hs[3] * ws[3] * c3o)
    lay["w_rows"] = _roundup(off, 16)
    return lay


# --------------------------- init-time weight packing ------------------------

def _pack_conv1_weight(w, win, stride, pad):
    """Fold conv1's horizontal taps / stride / padding into dense blocks.

    w: (Cout, Cin, kh, kw).  Returns (kh*Cin, win, wo*Cout) with block
    t = i*Cin + ci :  wm[t, wi, wo*Cout + co] = w[co, ci, i, wi - stride*wo + pad].
    """
    cout, cin, kh, kw = w.shape
    wo_n = _conv_out(win, kw, stride, pad)
    wm = np.zeros((kh * cin, win, wo_n * cout), np.float32)
    for i in range(kh):
        for ci in range(cin):
            for wo in range(wo_n):
                for j in range(kw):
                    wi = stride * wo + j - pad
                    if 0 <= wi < win:
                        wm[i * cin + ci, wi, wo * cout:(wo + 1) * cout] = w[:, ci, i, j]
    return wm


def _pack_conv_weight(w, win, stride, pad):
    """(Cout,Cin,kh,kw) -> (kh, win*Cin, wo*Cout); column convention
    (both input and output) is w-major: col = w*C + c."""
    cout, cin, kh, kw = w.shape
    wo_n = _conv_out(win, kw, stride, pad)
    wm = np.zeros((kh, win * cin, wo_n * cout), np.float32)
    for i in range(kh):
        for wo in range(wo_n):
            for j in range(kw):
                wi = stride * wo + j - pad
                if 0 <= wi < win:
                    wm[i, wi * cin:(wi + 1) * cin,
                       wo * cout:(wo + 1) * cout] = w[:, :, i, j].T
    return wm


def _pack_cfc_weight(w, ho, wo, c):
    """Fold torch.nn.Flatten's NCHW (c,h,w) ordering into the cfc weight.
    w: (c*ho*wo, N).  Returns (ho, wo*c, N)."""
    n = w.shape[1]
    wm = np.zeros((ho, wo * c, n), np.float32)
    for h in range(ho):
        for wx in range(wo):
            for ci in range(c):
                wm[h, wx * c + ci, :] = w[ci * ho * wo + h * wo + wx, :]
    return wm


# ------------------------- trace-time 0/1 row selectors ----------------------

def _conv1_selector(hin, hout, k, stride, pad, batch, cin):
    """Stacked selector for conv1.  Input rows follow obs_map's natural NCHW
    flatten ((b*Cin + c)*Hin + h); output rows are spatial-major (ho*B + b);
    blocks are (kernel row i, input channel c).  Also performs the NCHW ->
    conv layout change, so no host-side transpose is needed."""
    hob = hout * batch
    s = np.zeros((k * cin * hob, batch * cin * hin), np.float32)
    for i in range(k):
        for c in range(cin):
            blk = i * cin + c
            for ho in range(hout):
                hi = stride * ho + i - pad
                if 0 <= hi < hin:
                    for b in range(batch):
                        s[blk * hob + ho * batch + b, (b * cin + c) * hin + hi] = 1.0
    return s


def _conv_selector(hin, hout, k, stride, pad, batch):
    """Stacked selector for the strided convs (rows = h*B + b on both sides)."""
    hob = hout * batch
    s = np.zeros((k * hob, hin * batch), np.float32)
    for i in range(k):
        for ho in range(hout):
            hi = stride * ho + i - pad
            if 0 <= hi < hin:
                for b in range(batch):
                    s[i * hob + ho * batch + b, hi * batch + b] = 1.0
    return s


# --------------------------------- params ------------------------------------

def init_actor_params(key, state_dim, map_hw, action_dim):
    """Returns (packed_params, raw_params).

    raw_params mirror the PyTorch module tensors (used by the reference);
    packed_params hold the two slabs consumed by the fused kernel plus
    scale_row = exp(actor_std).  Raw weights are rounded to bf16 so the
    kernel's bf16 weight slab and the reference use identical values.
    """
    hs, ws = _conv_dims(map_hw)
    flat_dim = _CONV_SPECS[-1][1] * hs[-1] * ws[-1]
    f32 = jnp.float32

    def bf16r(x):
        return x.astype(jnp.bfloat16).astype(f32)

    def dense(k_, fi, fo):
        kw_, kb_ = jax.random.split(k_)
        lim = 1.0 / np.sqrt(fi)
        return (bf16r(jax.random.uniform(kw_, (fi, fo), f32, -lim, lim)),
                bf16r(jax.random.uniform(kb_, (fo,), f32, -lim, lim)))

    def convp(k_, ci, co, ksz):
        kw_, kb_ = jax.random.split(k_)
        lim = 1.0 / np.sqrt(ci * ksz * ksz)
        return (bf16r(jax.random.uniform(kw_, (co, ci, ksz, ksz), f32, -lim, lim)),
                bf16r(jax.random.uniform(kb_, (co,), f32, -lim, lim)))

    keys = jax.random.split(key, 8)
    raw = {}
    raw["mlp_w0"], raw["mlp_b0"] = dense(keys[0], state_dim, _MLP_UNITS[0])
    raw["mlp_g0"], raw["mlp_be0"] = jnp.ones((_MLP_UNITS[0],), f32), jnp.zeros((_MLP_UNITS[0],), f32)
    raw["mlp_w1"], raw["mlp_b1"] = dense(keys[1], _MLP_UNITS[0], _MLP_UNITS[1])
    raw["mlp_g1"], raw["mlp_be1"] = jnp.ones((_MLP_UNITS[1],), f32), jnp.zeros((_MLP_UNITS[1],), f32)
    for li, (ci, co, k, _, _) in enumerate(_CONV_SPECS, start=1):
        raw[f"c{li}_w"], raw[f"c{li}_b"] = convp(keys[1 + li], ci, co, k)
    raw["cfc_w"], raw["cfc_b"] = dense(keys[5], flat_dim, _CNN_FC)
    raw["am_w0"], raw["am_b0"] = dense(keys[6], _MLP_UNITS[1] + _CNN_FC, _AM_HID)
    raw["am_w1"], raw["am_b1"] = dense(keys[7], _AM_HID, action_dim)
    raw["actor_std"] = jnp.zeros((action_dim,), f32)

    lay = _layout(state_dim, map_hw)

    # ---- misc slab (f32): mlp_w0 + every bias / gamma / beta row ----
    misc = np.zeros((lay["misc_rows"], _MLP_UNITS[0]), np.float32)
    misc[0:state_dim, :] = np.asarray(raw["mlp_w0"], np.float32)
    vb = lay["vec_base"]

    def put_vec(name, v):
        v = np.asarray(v, np.float32).reshape(-1)
        misc[vb + _VEC_ROWS.index(name), :v.shape[0]] = v

    put_vec("mlp_b0", raw["mlp_b0"]); put_vec("mlp_g0", raw["mlp_g0"]); put_vec("mlp_be0", raw["mlp_be0"])
    put_vec("mlp_b1", raw["mlp_b1"]); put_vec("mlp_g1", raw["mlp_g1"]); put_vec("mlp_be1", raw["mlp_be1"])
    for li in range(1, 4):
        put_vec(f"c{li}_b", np.tile(np.asarray(raw[f"c{li}_b"], np.float32), ws[li]))
    put_vec("cfc_b", raw["cfc_b"]); put_vec("am_b0", raw["am_b0"]); put_vec("am_b1", raw["am_b1"])

    # ---- weight slab (bf16): every remaining weight matrix, 16-row aligned ----
    wsl = np.zeros((lay["w_rows"], 128), np.float32)

    def put_w(off, arr):
        arr = np.asarray(arr, np.float32)
        wsl[off:off + arr.shape[0], :arr.shape[1]] = arr

    mlp_out = _MLP_UNITS[1]
    put_w(lay["mlp_w1"], np.asarray(raw["mlp_w1"]))
    put_w(lay["am_w0_s"], np.asarray(raw["am_w0"])[:mlp_out])   # concat split at init
    put_w(lay["am_w0_m"], np.asarray(raw["am_w0"])[mlp_out:])
    put_w(lay["am_w1"], np.asarray(raw["am_w1"]))
    (c1i, c1o, k1, s1, p1), (c2i, c2o, k2, s2, p2), (c3i, c3o, k3, s3, p3) = _CONV_SPECS
    put_w(lay["c1_w"],
          _pack_conv1_weight(np.asarray(raw["c1_w"], np.float32), ws[0], s1, p1)
          .reshape(k1 * c1i * ws[0], ws[1] * c1o))
    put_w(lay["c2_w"],
          _pack_conv_weight(np.asarray(raw["c2_w"], np.float32), ws[1], s2, p2)
          .reshape(k2 * ws[1] * c2i, ws[2] * c2o))
    put_w(lay["c3_w"],
          _pack_conv_weight(np.asarray(raw["c3_w"], np.float32), ws[2], s3, p3)
          .reshape(k3 * ws[2] * c3i, ws[3] * c3o))
    put_w(lay["cfc_w"],
          _pack_cfc_weight(np.asarray(raw["cfc_w"], np.float32), hs[3], ws[3], c3o)
          .reshape(hs[3] * ws[3] * c3o, _CNN_FC))

    params = {
        "misc": jnp.asarray(misc, f32),
        "wslab": jnp.asarray(wsl, jnp.bfloat16),
        "scale_row": jnp.exp(raw["actor_std"]).reshape(1, -1).astype(f32),
    }
    return params, raw


# ------------------------------ fused Pallas kernel ---------------------------

def _build_kernel(lay, B, C, hs, ws, state_dim, act_dim):
    f32, bf16 = jnp.float32, jnp.bfloat16
    (c1i, c1o, k1, _, _), (c2i, c2o, k2, _, _), (c3i, c3o, k3, _, _) = _CONV_SPECS
    vb = lay["vec_base"]
    h1u, h2u = _MLP_UNITS

    conv_plan = (
        dict(s_off=lay["S1"], s_rows=k1 * c1i * hs[1] * B, s_cols=B * c1i * hs[0],
             w_off=lay["c1_w"], nblk=k1 * c1i, blk_rows=ws[0],
             hob=hs[1] * B, out_cols=ws[1] * c1o, bias="c1_b"),
        dict(s_off=lay["S2"], s_rows=k2 * hs[2] * B, s_cols=hs[1] * B,
             w_off=lay["c2_w"], nblk=k2, blk_rows=ws[1] * c2i,
             hob=hs[2] * B, out_cols=ws[2] * c2o, bias="c2_b"),
        dict(s_off=lay["S3"], s_rows=k3 * hs[3] * B, s_cols=hs[2] * B,
             w_off=lay["c3_w"], nblk=k3, blk_rows=ws[2] * c3i,
             hob=hs[3] * B, out_cols=ws[3] * c3o, bias="c3_b"),
    )
    fcols = ws[3] * c3o   # columns of y3 == rows of each cfc block

    def kernel(xs_ref, xmap_ref, misc_ref, wsl_ref, sel_ref, loc_ref):
        def dot(a, b):
            # bf16 operands + f32 accumulation (MXU-native on v5e/v6e/v7x).
            return jnp.dot(a.astype(bf16), b.astype(bf16), preferred_element_type=f32)

        def elu(v):  # PyTorch ELU, alpha=1 (exp arg clamped: unselected branch finite)
            return jnp.where(v > 0, v, jnp.exp(jnp.minimum(v, 0.0)) - 1.0)

        def layer_norm(v, g, be):  # eps=1e-5, biased variance (torch semantics)
            mu = jnp.mean(v, axis=-1, keepdims=True)
            var = jnp.mean((v - mu) ** 2, axis=-1, keepdims=True)
            return (v - mu) * jax.lax.rsqrt(var + 1e-5) * g + be

        def vec(name, n):          # (1, n) f32 bias / gamma / beta row of the misc slab
            r = vb + _VEC_ROWS.index(name)
            return misc_ref[r:r + 1, 0:n]

        def wblk(off, rows, cols):  # bf16 weight block of the packed weight slab
            return wsl_ref[off:off + rows, 0:cols]

        # ---- state MLP: (Linear -> ELU -> LayerNorm) x 2 ----
        h = elu(dot(xs_ref[...], misc_ref[0:state_dim, :]) + vec("mlp_b0", h1u))
        h = layer_norm(h, vec("mlp_g0", h1u), vec("mlp_be0", h1u))
        h = elu(dot(h, wblk(lay["mlp_w1"], h1u, h2u)) + vec("mlp_b1", h2u))
        h = layer_norm(h, vec("mlp_g1", h2u), vec("mlp_be1", h2u))

        # ---- CNN: conv(Y) = ELU( sum_t Z[t] @ W[t] + b ),  Z = S @ Y (one matmul) ----
        y = xmap_ref[...]                       # (B*Cin*H, W), natural NCHW flatten
        for cp in conv_plan:
            z = dot(sel_ref[cp["s_off"]:cp["s_off"] + cp["s_rows"], 0:cp["s_cols"]], y)
            acc = vec(cp["bias"], cp["out_cols"])
            for t in range(cp["nblk"]):         # kernel rows (x channels for conv1)
                acc = acc + dot(
                    z[t * cp["hob"]:(t + 1) * cp["hob"], :],
                    wblk(cp["w_off"] + t * cp["blk_rows"], cp["blk_rows"], cp["out_cols"]))
            y = elu(acc)                        # (Ho*B, Wo*Cout), rows = ho*B + b

        # ---- Flatten(NCHW) + Linear(., 128): NCHW order folded into cfc blocks ----
        fm = vec("cfc_b", _CNN_FC)
        for hh in range(hs[3]):
            fm = fm + dot(y[hh * B:(hh + 1) * B, :],
                          wblk(lay["cfc_w"] + hh * fcols, fcols, _CNN_FC))

        # ---- actor_mean head (feature concat folded into a split first linear) ----
        zf = elu(dot(h, wblk(lay["am_w0_s"], h2u, _AM_HID))
                 + dot(fm, wblk(lay["am_w0_m"], _CNN_FC, _AM_HID))
                 + vec("am_b0", _AM_HID))
        loc = dot(zf, wblk(lay["am_w1"], _AM_HID, act_dim)) + vec("am_b1", act_dim)
        loc_ref[...] = loc.astype(loc_ref.dtype)

    return kernel


def actor_forward(params, obs_state, obs_map):
    """obs_state: (B, state_dim) f32; obs_map: (B, 2, H, W) f32 (NCHW).
    One fused pallas_call for the whole network; returns (loc, scale)."""
    B, state_dim = obs_state.shape
    _, C, HM, WM = obs_map.shape
    act_dim = params["scale_row"].shape[-1]
    hs, ws = _conv_dims((HM, WM))
    lay = dict(_layout(state_dim, (HM, WM)))

    # Stacked 0/1 row selectors (trace-time constants; depend on batch size),
    # packed into one slab.
    (c1i, _, k1, s1, p1), (_, _, k2, s2, p2), (_, _, k3, s3, p3) = _CONV_SPECS
    sels = (("S1", _conv1_selector(hs[0], hs[1], k1, s1, p1, B, c1i)),
            ("S2", _conv_selector(hs[1], hs[2], k2, s2, p2, B)),
            ("S3", _conv_selector(hs[2], hs[3], k3, s3, p3, B)))
    off = 0
    for name, m in sels:
        lay[name] = off
        off = _roundup(off + m.shape[0], 16)
    sel_np = np.zeros((_roundup(off, 16), max(m.shape[1] for _, m in sels)), np.float32)
    for name, m in sels:
        sel_np[lay[name]:lay[name] + m.shape[0], :m.shape[1]] = m
    sel = jnp.asarray(sel_np, jnp.bfloat16)   # 0/1 selection is exact in bf16

    # obs_map enters the kernel as its natural NCHW flatten (free reshape);
    # the conv1 selector performs the layout change on the MXU.
    xmap = obs_map.reshape(B * C * HM, WM)

    kernel = _build_kernel(lay, B, C, hs, ws, state_dim, act_dim)

    # Rough cost hint so XLA schedules around the single custom call.
    couts = [c for (_, c, _, _, _) in _CONV_SPECS]
    macs = B * state_dim * _MLP_UNITS[0] + B * _MLP_UNITS[0] * _MLP_UNITS[1]
    macs += (k1 * c1i * hs[1] * B) * (B * c1i * hs[0]) * ws[0]
    macs += (k1 * c1i) * (hs[1] * B) * ws[0] * (ws[1] * couts[0])
    macs += (k2 * hs[2] * B) * (hs[1] * B) * (ws[1] * couts[0])
    macs += k2 * (hs[2] * B) * (ws[1] * couts[0]) * (ws[2] * couts[1])
    macs += (k3 * hs[3] * B) * (hs[2] * B) * (ws[2] * couts[1])
    macs += k3 * (hs[3] * B) * (ws[2] * couts[1]) * (ws[3] * couts[2])
    macs += hs[3] * B * (ws[3] * couts[2]) * _CNN_FC
    macs += B * (_MLP_UNITS[1] + _CNN_FC) * _AM_HID + B * _AM_HID * act_dim
    nbytes = (obs_state.size * 4 + xmap.size * 4 + params["misc"].size * 4
              + params["wslab"].size * 2 + sel.size * 2 + B * act_dim * 4)
    trans = (B * (_MLP_UNITS[0] + _MLP_UNITS[1] + _AM_HID)
             + B * 128 * (hs[1] + hs[2] + hs[3]))

    loc = pl.pallas_call(
        kernel,
        out_shape=jax.ShapeDtypeStruct((B, act_dim), jnp.float32),
        in_specs=[pl.BlockSpec(memory_space=pltpu.MemorySpace.VMEM)] * 5,
        out_specs=pl.BlockSpec(memory_space=pltpu.MemorySpace.VMEM),
        cost_estimate=pl.CostEstimate(flops=int(2 * macs),
                                      transcendentals=int(trans),
                                      bytes_accessed=int(nbytes)),
    )(obs_state, xmap, params["misc"], params["wslab"], sel)

    # scale = exp(actor_std) is input independent: precomputed at init.
    scale = jnp.broadcast_to(params["scale_row"].astype(loc.dtype), loc.shape)
    return loc, scale


# --------------------------- pure-JAX reference (check) -----------------------

def _reference_forward(raw, obs_state, obs_map):
    """Direct (unfused) implementation of the PyTorch module.  Matmuls use the
    same numerics as the kernel (bf16 operands, f32 accumulation)."""
    f32, bf16 = jnp.float32, jnp.bfloat16

    def rdot(a, b):
        return jnp.dot(a.astype(bf16), b.astype(bf16), preferred_element_type=f32)

    def elu(v):
        return jnp.where(v > 0, v, jnp.exp(jnp.minimum(v, 0.0)) - 1.0)

    def ln(v, g, be):
        mu = v.mean(-1, keepdims=True)
        var = ((v - mu) ** 2).mean(-1, keepdims=True)
        return (v - mu) * jax.lax.rsqrt(var + 1e-5) * g + be

    def conv(x_nhwc, w, b, stride, pad):
        bn, hh, ww, cin = x_nhwc.shape
        cout, _, kh, kw = w.shape
        xp = jnp.pad(x_nhwc, ((0, 0), (pad, pad), (pad, pad), (0, 0)))
        ho, wo = _conv_out(hh, kh, stride, pad), _conv_out(ww, kw, stride, pad)
        cols = []
        for i in range(kh):
            for j in range(kw):
                cols.append(xp[:, i:i + stride * ho:stride, j:j + stride * wo:stride, :])
        cols = jnp.stack(cols, 3).reshape(bn * ho * wo, kh * kw * cin)
        w2 = jnp.transpose(w, (2, 3, 1, 0)).reshape(kh * kw * cin, cout)
        return elu(rdot(cols, w2) + b).reshape(bn, ho, wo, cout)

    h = ln(elu(rdot(obs_state, raw["mlp_w0"]) + raw["mlp_b0"]), raw["mlp_g0"], raw["mlp_be0"])
    h = ln(elu(rdot(h, raw["mlp_w1"]) + raw["mlp_b1"]), raw["mlp_g1"], raw["mlp_be1"])

    x = jnp.transpose(obs_map, (0, 2, 3, 1))
    for li, (_, _, k, s, p) in enumerate(_CONV_SPECS, start=1):
        x = conv(x, raw[f"c{li}_w"], raw[f"c{li}_b"], s, p)
    flat = jnp.transpose(x, (0, 3, 1, 2)).reshape(x.shape[0], -1)  # torch Flatten (NCHW)
    fm = rdot(flat, raw["cfc_w"]) + raw["cfc_b"]

    feat = jnp.concatenate([h, fm], axis=-1)
    z = elu(rdot(feat, raw["am_w0"]) + raw["am_b0"])
    loc = rdot(z, raw["am_w1"]) + raw["am_b1"]
    scale = jnp.exp(raw["actor_std"])
    return loc, jnp.ones_like(loc) * scale


# ----------------------------------- main --------------------------------------

if __name__ == "__main__":
    B = 2
    STATE_DIM = 32
    H = W = 16
    ACTION_DIM = 8

    key = jax.random.PRNGKey(0)
    kp, ks, km = jax.random.split(key, 3)

    params, raw = init_actor_params(kp, STATE_DIM, (H, W), ACTION_DIM)
    obs_state = jax.random.normal(ks, (B, STATE_DIM), jnp.float32)
    obs_map = jax.random.normal(km, (B, 2, H, W), jnp.float32)

    fwd = jax.jit(actor_forward)
    loc, scale = fwd(params, obs_state, obs_map)
    jax.block_until_ready((loc, scale))

    # Cross-check the fused kernel against the pure-JAX reference.
    ref_loc, ref_scale = _reference_forward(raw, obs_state, obs_map)
    assert loc.shape == (B, ACTION_DIM) and scale.shape == (B, ACTION_DIM)
    assert bool(jnp.all(jnp.isfinite(loc)))
    max_err = float(jnp.max(jnp.abs(loc - ref_loc)))
    assert bool(jnp.allclose(loc, ref_loc, atol=5e-3, rtol=5e-3)), max_err
    assert bool(jnp.allclose(scale, ref_scale, atol=1e-6))
    print("KERNEL_OK")
</pallas_src>

<mosaic_0001>
module attributes {stable_mosaic.version = 11 : i64} {
  func.func @kernel(%arg0: memref<2x32xf32, #tpu.memory_space<vmem>>, %arg1: memref<64x16xf32, #tpu.memory_space<vmem>>, %arg2: memref<48x256xf32, #tpu.memory_space<vmem>>, %arg3: memref<2336x128xbf16, #tpu.memory_space<vmem>>, %arg4: memref<432x64xbf16, #tpu.memory_space<vmem>>, %arg5: memref<2x8xf32, #tpu.memory_space<vmem>>) attributes {dimension_semantics = [], scalar_prefetch = 0 : i64, scratch_operands = 0 : i64, tpu.core_type = #tpu.core_type<tc>} {
    %c0 = arith.constant 0 : index
    %c0_0 = arith.constant 0 : index
    %0 = vector.load %arg0[%c0, %c0_0] : memref<2x32xf32, #tpu.memory_space<vmem>>, vector<2x32xf32>
    %c0_1 = arith.constant 0 : index
    %c0_2 = arith.constant 0 : index
    %1 = vector.load %arg2[%c0_1, %c0_2] : memref<48x256xf32, #tpu.memory_space<vmem>>, vector<32x256xf32>
    %2 = arith.truncf %0 : vector<2x32xf32> to vector<2x32xbf16>
    %3 = arith.truncf %1 : vector<32x256xf32> to vector<32x256xbf16>
    %cst = arith.constant dense<0.000000e+00> : vector<2x256xf32>
    %4 = tpu.matmul %2, %3, %cst {dimension_numbers = #tpu.dot_dimension_numbers<[1], [0], [0], [1], [0, 0, 1, 1], [], []>} : vector<2x32xbf16>, vector<32x256xbf16>, vector<2x256xf32> -> vector<2x256xf32>
    %c32 = arith.constant 32 : index
    %c0_3 = arith.constant 0 : index
    %5 = vector.load %arg2[%c32, %c0_3] : memref<48x256xf32, #tpu.memory_space<vmem>>, vector<1x256xf32>
    %6 = vector.broadcast %5 : vector<1x256xf32> to vector<2x256xf32>
    %7 = arith.addf %4, %6 : vector<2x256xf32>
    %cst_4 = arith.constant 0.000000e+00 : f32
    %8 = vector.broadcast %cst_4 : f32 to vector<2x256xf32>
    %9 = arith.cmpf ogt, %7, %8 : vector<2x256xf32>
    %cst_5 = arith.constant 0.000000e+00 : f32
    %10 = vector.broadcast %cst_5 : f32 to vector<2x256xf32>
    %11 = arith.minimumf %7, %10 : vector<2x256xf32>
    %12 = math.exp %11 : vector<2x256xf32>
    %cst_6 = arith.constant 1.000000e+00 : f32
    %13 = vector.broadcast %cst_6 : f32 to vector<2x256xf32>
    %14 = arith.subf %12, %13 : vector<2x256xf32>
    %15 = arith.select %9, %7, %14 : vector<2x256xi1>, vector<2x256xf32>
    %c33 = arith.constant 33 : index
    %c0_7 = arith.constant 0 : index
    %16 = vector.load %arg2[%c33, %c0_7] : memref<48x256xf32, #tpu.memory_space<vmem>>, vector<1x256xf32>
    %c34 = arith.constant 34 : index
    %c0_8 = arith.constant 0 : index
    %17 = vector.load %arg2[%c34, %c0_8] : memref<48x256xf32, #tpu.memory_space<vmem>>, vector<1x256xf32>
    %cst_9 = arith.constant dense<0.000000e+00> : vector<2xf32>
    %18 = vector.multi_reduction <add>, %15, %cst_9 [1] : vector<2x256xf32> to vector<2xf32>
    %19 = vector.shape_cast %18 : vector<2xf32> to vector<2x1xf32>
    %cst_10 = arith.constant 2.560000e+02 : f32
    %20 = vector.broadcast %cst_10 : f32 to vector<2x1xf32>
    %21 = arith.divf %19, %20 : vector<2x1xf32>
    %22 = vector.broadcast %21 : vector<2x1xf32> to vector<2x256xf32>
    %23 = arith.subf %15, %22 : vector<2x256xf32>
    %24 = arith.mulf %23, %23 : vector<2x256xf32>
    %cst_11 = arith.constant dense<0.000000e+00> : vector<2xf32>
    %25 = vector.multi_reduction <add>, %24, %cst_11 [1] : vector<2x256xf32> to vector<2xf32>
    %26 = vector.shape_cast %25 : vector<2xf32> to vector<2x1xf32>
    %cst_12 = arith.constant 2.560000e+02 : f32
    %27 = vector.broadcast %cst_12 : f32 to vector<2x1xf32>
    %28 = arith.divf %26, %27 : vector<2x1xf32>
    %29 = vector.broadcast %21 : vector<2x1xf32> to vector<2x256xf32>
    %30 = arith.subf %15, %29 : vector<2x256xf32>
    %cst_13 = arith.constant 9.99999974E-6 : f32
    %31 = vector.broadcast %cst_13 : f32 to vector<2x1xf32>
    %32 = arith.addf %28, %31 : vector<2x1xf32>
    %33 = math.rsqrt %32 : vector<2x1xf32>
    %34 = vector.broadcast %33 : vector<2x1xf32> to vector<2x256xf32>
    %35 = arith.mulf %30, %34 : vector<2x256xf32>
    %36 = vector.broadcast %16 : vector<1x256xf32> to vector<2x256xf32>
    %37 = arith.mulf %35, %36 : vector<2x256xf32>
    %38 = vector.broadcast %17 : vector<1x256xf32> to vector<2x256xf32>
    %39 = arith.addf %37, %38 : vector<2x256xf32>
    %c0_14 = arith.constant 0 : index
    %c0_15 = arith.constant 0 : index
    %40 = vector.load %arg3[%c0_14, %c0_15] : memref<2336x128xbf16, #tpu.memory_space<vmem>>, vector<256x128xbf16>
    %41 = arith.truncf %39 : vector<2x256xf32> to vector<2x256xbf16>
    %cst_16 = arith.constant dense<0.000000e+00> : vector<2x128xf32>
    %42 = tpu.matmul %41, %40, %cst_16 {dimension_numbers = #tpu.dot_dimension_numbers<[1], [0], [0], [1], [0, 0, 1, 1], [], []>} : vector<2x256xbf16>, vector<256x128xbf16>, vector<2x128xf32> -> vector<2x128xf32>
    %c35 = arith.constant 35 : index
    %c0_17 = arith.constant 0 : index
    %43 = vector.load %arg2[%c35, %c0_17] : memref<48x256xf32, #tpu.memory_space<vmem>>, vector<1x128xf32>
    %44 = vector.broadcast %43 : vector<1x128xf32> to vector<2x128xf32>
    %45 = arith.addf %42, %44 : vector<2x128xf32>
    %cst_18 = arith.constant 0.000000e+00 : f32
    %46 = vector.broadcast %cst_18 : f32 to vector<2x128xf32>
    %47 = arith.cmpf ogt, %45, %46 : vector<2x128xf32>
    %cst_19 = arith.constant 0.000000e+00 : f32
    %48 = vector.broadcast %cst_19 : f32 to vector<2x128xf32>
    %49 = arith.minimumf %45, %48 : vector<2x128xf32>
    %50 = math.exp %49 : vector<2x128xf32>
    %cst_20 = arith.constant 1.000000e+00 : f32
    %51 = vector.broadcast %cst_20 : f32 to vector<2x128xf32>
    %52 = arith.subf %50, %51 : vector<2x128xf32>
    %53 = arith.select %47, %45, %52 : vector<2x128xi1>, vector<2x128xf32>
    %c36 = arith.constant 36 : index
    %c0_21 = arith.constant 0 : index
    %54 = vector.load %arg2[%c36, %c0_21] : memref<48x256xf32, #tpu.memory_space<vmem>>, vector<1x128xf32>
    %c37 = arith.constant 37 : index
    %c0_22 = arith.constant 0 : index
    %55 = vector.load %arg2[%c37, %c0_22] : memref<48x256xf32, #tpu.memory_space<vmem>>, vector<1x128xf32>
    %cst_23 = arith.constant dense<0.000000e+00> : vector<2xf32>
    %56 = vector.multi_reduction <add>, %53, %cst_23 [1] : vector<2x128xf32> to vector<2xf32>
    %57 = vector.shape_cast %56 : vector<2xf32> to vector<2x1xf32>
    %cst_24 = arith.constant 1.280000e+02 : f32
    %58 = vector.broadcast %cst_24 : f32 to vector<2x1xf32>
    %59 = arith.divf %57, %58 : vector<2x1xf32>
    %60 = vector.broadcast %59 : vector<2x1xf32> to vector<2x128xf32>
    %61 = arith.subf %53, %60 : vector<2x128xf32>
    %62 = arith.mulf %61, %61 : vector<2x128xf32>
    %cst_25 = arith.constant dense<0.000000e+00> : vector<2xf32>
    %63 = vector.multi_reduction <add>, %62, %cst_25 [1] : vector<2x128xf32> to vector<2xf32>
    %64 = vector.shape_cast %63 : vector<2xf32> to vector<2x1xf32>
    %cst_26 = arith.constant 1.280000e+02 : f32
    %65 = vector.broadcast %cst_26 : f32 to vector<2x1xf32>
    %66 = arith.divf %64, %65 : vector<2x1xf32>
    %67 = vector.broadcast %59 : vector<2x1xf32> to vector<2x128xf32>
    %68 = arith.subf %53, %67 : vector<2x128xf32>
    %cst_27 = arith.constant 9.99999974E-6 : f32
    %69 = vector.broadcast %cst_27 : f32 to vector<2x1xf32>
    %70 = arith.addf %66, %69 : vector<2x1xf32>
    %71 = math.rsqrt %70 : vector<2x1xf32>
    %72 = vector.broadcast %71 : vector<2x1xf32> to vector<2x128xf32>
    %73 = arith.mulf %68, %72 : vector<2x128xf32>
    %74 = vector.broadcast %54 : vector<1x128xf32> to vector<2x128xf32>
    %75 = arith.mulf %73, %74 : vector<2x128xf32>
    %76 = vector.broadcast %55 : vector<1x128xf32> to vector<2x128xf32>
    %77 = arith.addf %75, %76 : vector<2x128xf32>
    %c0_28 = arith.constant 0 : index
    %c0_29 = arith.constant 0 : index
    %78 = vector.load %arg1[%c0_28, %c0_29] : memref<64x16xf32, #tpu.memory_space<vmem>>, vector<64x16xf32>
    %c0_30 = arith.constant 0 : index
    %c0_31 = arith.constant 0 : index
    %79 = vector.load %arg4[%c0_30, %c0_31] : memref<432x64xbf16, #tpu.memory_space<vmem>>, vector<320x64xbf16>
    %80 = arith.truncf %78 : vector<64x16xf32> to vector<64x16xbf16>
    %cst_32 = arith.constant dense<0.000000e+00> : vector<320x16xf32>
    %81 = tpu.matmul %79, %80, %cst_32 {dimension_numbers = #tpu.dot_dimension_numbers<[1], [0], [0], [1], [0, 0, 1, 1], [], []>} : vector<320x64xbf16>, vector<64x16xbf16>, vector<320x16xf32> -> vector<320x16xf32>
    %c38 = arith.constant 38 : index
    %c0_33 = arith.constant 0 : index
    %82 = vector.load %arg2[%c38, %c0_33] : memref<48x256xf32, #tpu.memory_space<vmem>>, vector<1x128xf32>
    %83 = vector.extract_strided_slice %81 {offsets = [0, 0], sizes = [32, 16], strides = [1, 1]} : vector<320x16xf32> to vector<32x16xf32>
    %c640 = arith.constant 640 : index
    %c0_34 = arith.constant 0 : index
    %84 = vector.load %arg3[%c640, %c0_34] : memref<2336x128xbf16, #tpu.memory_space<vmem>>, vector<16x128xbf16>
    %85 = arith.truncf %83 : vector<32x16xf32> to vector<32x16xbf16>
    %cst_35 = arith.constant dense<0.000000e+00> : vector<32x128xf32>
    %86 = tpu.matmul %85, %84, %cst_35 {dimension_numbers = #tpu.dot_dimension_numbers<[1], [0], [0], [1], [0, 0, 1, 1], [], []>} : vector<32x16xbf16>, vector<16x128xbf16>, vector<32x128xf32> -> vector<32x128xf32>
    %87 = vector.broadcast %82 : vector<1x128xf32> to vector<32x128xf32>
    %88 = arith.addf %87, %86 : vector<32x128xf32>
    %89 = vector.extract_strided_slice %81 {offsets = [32, 0], sizes = [32, 16], strides = [1, 1]} : vector<320x16xf32> to vector<32x16xf32>
    %c656 = arith.constant 656 : index
    %c0_36 = arith.constant 0 : index
    %90 = vector.load %arg3[%c656, %c0_36] : memref<2336x128xbf16, #tpu.memory_space<vmem>>, vector<16x128xbf16>
    %91 = arith.truncf %89 : vector<32x16xf32> to vector<32x16xbf16>
    %cst_37 = arith.constant dense<0.000000e+00> : vector<32x128xf32>
    %92 = tpu.matmul %91, %90, %cst_37 {dimension_numbers = #tpu.dot_dimension_numbers<[1], [0], [0], [1], [0, 0, 1, 1], [], []>} : vector<32x16xbf16>, vector<16x128xbf16>, vector<32x128xf32> -> vector<32x128xf32>
    %93 = arith.addf %88, %92 : vector<32x128xf32>
    %94 = vector.extract_strided_slice %81 {offsets = [64, 0], sizes = [32, 16], strides = [1, 1]} : vector<320x16xf32> to vector<32x16xf32>
    %c672 = arith.constant 672 : index
    %c0_38 = arith.constant 0 : index
    %95 = vector.load %arg3[%c672, %c0_38] : memref<2336x128xbf16, #tpu.memory_space<vmem>>, vector<16x128xbf16>
    %96 = arith.truncf %94 : vector<32x16xf32> to vector<32x16xbf16>
    %cst_39 = arith.constant dense<0.000000e+00> : vector<32x128xf32>
    %97 = tpu.matmul %96, %95, %cst_39 {dimension_numbers = #tpu.dot_dimension_numbers<[1], [0], [0], [1], [0, 0, 1, 1], [], []>} : vector<32x16xbf16>, vector<16x128xbf16>, vector<32x128xf32> -> vector<32x128xf32>
    %98 = arith.addf %93, %97 : vector<32x128xf32>
    %99 = vector.extract_strided_slice %81 {offsets = [96, 0], sizes = [32, 16], strides = [1, 1]} : vector<320x16xf32> to vector<32x16xf32>
    %c688 = arith.constant 688 : index
    %c0_40 = arith.constant 0 : index
    %100 = vector.load %arg3[%c688, %c0_40] : memref<2336x128xbf16, #tpu.memory_space<vmem>>, vector<16x128xbf16>
    %101 = arith.truncf %99 : vector<32x16xf32> to vector<32x16xbf16>
    %cst_41 = arith.constant dense<0.000000e+00> : vector<32x128xf32>
    %102 = tpu.matmul %101, %100, %cst_41 {dimension_numbers = #tpu.dot_dimension_numbers<[1], [0], [0], [1], [0, 0, 1, 1], [], []>} : vector<32x16xbf16>, vector<16x128xbf16>, vector<32x128xf32> -> vector<32x128xf32>
    %103 = arith.addf %98, %102 : vector<32x128xf32>
    %104 = vector.extract_strided_slice %81 {offsets = [128, 0], sizes = [32, 16], strides = [1, 1]} : vector<320x16xf32> to vector<32x16xf32>
    %c704 = arith.constant 704 : index
    %c0_42 = arith.constant 0 : index
    %105 = vector.load %arg3[%c704, %c0_42] : memref<2336x128xbf16, #tpu.memory_space<vmem>>, vector<16x128xbf16>
    %106 = arith.truncf %104 : vector<32x16xf32> to vector<32x16xbf16>
    %cst_43 = arith.constant dense<0.000000e+00> : vector<32x128xf32>
    %107 = tpu.matmul %106, %105, %cst_43 {dimension_numbers = #tpu.dot_dimension_numbers<[1], [0], [0], [1], [0, 0, 1, 1], [], []>} : vector<32x16xbf16>, vector<16x128xbf16>, vector<32x128xf32> -> vector<32x128xf32>
    %108 = arith.addf %103, %107 : vector<32x128xf32>
    %109 = vector.extract_strided_slice %81 {offsets = [160, 0], sizes = [32, 16], strides = [1, 1]} : vector<320x16xf32> to vector<32x16xf32>
    %c720 = arith.constant 720 : index
    %c0_44 = arith.constant 0 : index
    %110 = vector.load %arg3[%c720, %c0_44] : memref<2336x128xbf16, #tpu.memory_space<vmem>>, vector<16x128xbf16>
    %111 = arith.truncf %109 : vector<32x16xf32> to vector<32x16xbf16>
    %cst_45 = arith.constant dense<0.000000e+00> : vector<32x128xf32>
    %112 = tpu.matmul %111, %110, %cst_45 {dimension_numbers = #tpu.dot_dimension_numbers<[1], [0], [0], [1], [0, 0, 1, 1], [], []>} : vector<32x16xbf16>, vector<16x128xbf16>, vector<32x128xf32> -> vector<32x128xf32>
    %113 = arith.addf %108, %112 : vector<32x128xf32>
    %114 = vector.extract_strided_slice %81 {offsets = [192, 0], sizes = [32, 16], strides = [1, 1]} : vector<320x16xf32> to vector<32x16xf32>
    %c736 = arith.constant 736 : index
    %c0_46 = arith.constant 0 : index
    %115 = vector.load %arg3[%c736, %c0_46] : memref<2336x128xbf16, #tpu.memory_space<vmem>>, vector<16x128xbf16>
    %116 = arith.truncf %114 : vector<32x16xf32> to vector<32x16xbf16>
    %cst_47 = arith.constant dense<0.000000e+00> : vector<32x128xf32>
    %117 = tpu.matmul %116, %115, %cst_47 {dimension_numbers = #tpu.dot_dimension_numbers<[1], [0], [0], [1], [0, 0, 1, 1], [], []>} : vector<32x16xbf16>, vector<16x128xbf16>, vector<32x128xf32> -> vector<32x128xf32>
    %118 = arith.addf %113, %117 : vector<32x128xf32>
    %119 = vector.extract_strided_slice %81 {offsets = [224, 0], sizes = [32, 16], strides = [1, 1]} : vector<320x16xf32> to vector<32x16xf32>
    %c752 = arith.constant 752 : index
    %c0_48 = arith.constant 0 : index
    %120 = vector.load %arg3[%c752, %c0_48] : memref<2336x128xbf16, #tpu.memory_space<vmem>>, vector<16x128xbf16>
    %121 = arith.truncf %119 : vector<32x16xf32> to vector<32x16xbf16>
    %cst_49 = arith.constant dense<0.000000e+00> : vector<32x128xf32>
    %122 = tpu.matmul %121, %120, %cst_49 {dimension_numbers = #tpu.dot_dimension_numbers<[1], [0], [0], [1], [0, 0, 1, 1], [], []>} : vector<32x16xbf16>, vector<16x128xbf16>, vector<32x128xf32> -> vector<32x128xf32>
    %123 = arith.addf %118, %122 : vector<32x128xf32>
    %124 = vector.extract_strided_slice %81 {offsets = [256, 0], sizes = [32, 16], strides = [1, 1]} : vector<320x16xf32> to vector<32x16xf32>
    %c768 = arith.constant 768 : index
    %c0_50 = arith.constant 0 : index
    %125 = vector.load %arg3[%c768, %c0_50] : memref<2336x128xbf16, #tpu.memory_space<vmem>>, vector<16x128xbf16>
    %126 = arith.truncf %124 : vector<32x16xf32> to vector<32x16xbf16>
    %cst_51 = arith.constant dense<0.000000e+00> : vector<32x128xf32>
    %127 = tpu.matmul %126, %125, %cst_51 {dimension_numbers = #tpu.dot_dimension_numbers<[1], [0], [0], [1], [0, 0, 1, 1], [], []>} : vector<32x16xbf16>, vector<16x128xbf16>, vector<32x128xf32> -> vector<32x128xf32>
    %128 = arith.addf %123, %127 : vector<32x128xf32>
    %129 = vector.extract_strided_slice %81 {offsets = [288, 0], sizes = [32, 16], strides = [1, 1]} : vector<320x16xf32> to vector<32x16xf32>
    %c784 = arith.constant 784 : index
    %c0_52 = arith.constant 0 : index
    %130 = vector.load %arg3[%c784, %c0_52] : memref<2336x128xbf16, #tpu.memory_space<vmem>>, vector<16x128xbf16>
    %131 = arith.truncf %129 : vector<32x16xf32> to vector<32x16xbf16>
    %cst_53 = arith.constant dense<0.000000e+00> : vector<32x128xf32>
    %132 = tpu.matmul %131, %130, %cst_53 {dimension_numbers = #tpu.dot_dimension_numbers<[1], [0], [0], [1], [0, 0, 1, 1], [], []>} : vector<32x16xbf16>, vector<16x128xbf16>, vector<32x128xf32> -> vector<32x128xf32>
    %133 = arith.addf %128, %132 : vector<32x128xf32>
    %cst_54 = arith.constant 0.000000e+00 : f32
    %134 = vector.broadcast %cst_54 : f32 to vector<32x128xf32>
    %135 = arith.cmpf ogt, %133, %134 : vector<32x128xf32>
    %cst_55 = arith.constant 0.000000e+00 : f32
    %136 = vector.broadcast %cst_55 : f32 to vector<32x128xf32>
    %137 = arith.minimumf %133, %136 : vector<32x128xf32>
    %138 = math.exp %137 : vector<32x128xf32>
    %cst_56 = arith.constant 1.000000e+00 : f32
    %139 = vector.broadcast %cst_56 : f32 to vector<32x128xf32>
    %140 = arith.subf %138, %139 : vector<32x128xf32>
    %141 = arith.select %135, %133, %140 : vector<32x128xi1>, vector<32x128xf32>
    %c320 = arith.constant 320 : index
    %c0_57 = arith.constant 0 : index
    %142 = vector.load %arg4[%c320, %c0_57] : memref<432x64xbf16, #tpu.memory_space<vmem>>, vector<80x32xbf16>
    %143 = arith.truncf %141 : vector<32x128xf32> to vector<32x128xbf16>
    %cst_58 = arith.constant dense<0.000000e+00> : vector<80x128xf32>
    %144 = tpu.matmul %142, %143, %cst_58 {dimension_numbers = #tpu.dot_dimension_numbers<[1], [0], [0], [1], [0, 0, 1, 1], [], []>} : vector<80x32xbf16>, vector<32x128xbf16>, vector<80x128xf32> -> vector<80x128xf32>
    %c39 = arith.constant 39 : index
    %c0_59 = arith.constant 0 : index
    %145 = vector.load %arg2[%c39, %c0_59] : memref<48x256xf32, #tpu.memory_space<vmem>>, vector<1x128xf32>
    %146 = vector.extract_strided_slice %144 {offsets = [0, 0], sizes = [16, 128], strides = [1, 1]} : vector<80x128xf32> to vector<16x128xf32>
    %c800 = arith.constant 800 : index
    %c0_60 = arith.constant 0 : index
    %147 = vector.load %arg3[%c800, %c0_60] : memref<2336x128xbf16, #tpu.memory_space<vmem>>, vector<128x128xbf16>
    %148 = arith.truncf %146 : vector<16x128xf32> to vector<16x128xbf16>
    %cst_61 = arith.constant dense<0.000000e+00> : vector<16x128xf32>
    %149 = tpu.matmul %148, %147, %cst_61 {dimension_numbers = #tpu.dot_dimension_numbers<[1], [0], [0], [1], [0, 0, 1, 1], [], []>} : vector<16x128xbf16>, vector<128x128xbf16>, vector<16x128xf32> -> vector<16x128xf32>
    %150 = vector.broadcast %145 : vector<1x128xf32> to vector<16x128xf32>
    %151 = arith.addf %150, %149 : vector<16x128xf32>
    %152 = vector.extract_strided_slice %144 {offsets = [16, 0], sizes = [16, 128], strides = [1, 1]} : vector<80x128xf32> to vector<16x128xf32>
    %c928 = arith.constant 928 : index
    %c0_62 = arith.constant 0 : index
    %153 = vector.load %arg3[%c928, %c0_62] : memref<2336x128xbf16, #tpu.memory_space<vmem>>, vector<128x128xbf16>
    %154 = arith.truncf %152 : vector<16x128xf32> to vector<16x128xbf16>
    %cst_63 = arith.constant dense<0.000000e+00> : vector<16x128xf32>
    %155 = tpu.matmul %154, %153, %cst_63 {dimension_numbers = #tpu.dot_dimension_numbers<[1], [0], [0], [1], [0, 0, 1, 1], [], []>} : vector<16x128xbf16>, vector<128x128xbf16>, vector<16x128xf32> -> vector<16x128xf32>
    %156 = arith.addf %151, %155 : vector<16x128xf32>
    %157 = vector.extract_strided_slice %144 {offsets = [32, 0], sizes = [16, 128], strides = [1, 1]} : vector<80x128xf32> to vector<16x128xf32>
    %c1056 = arith.constant 1056 : index
    %c0_64 = arith.constant 0 : index
    %158 = vector.load %arg3[%c1056, %c0_64] : memref<2336x128xbf16, #tpu.memory_space<vmem>>, vector<128x128xbf16>
    %159 = arith.truncf %157 : vector<16x128xf32> to vector<16x128xbf16>
    %cst_65 = arith.constant dense<0.000000e+00> : vector<16x128xf32>
    %160 = tpu.matmul %159, %158, %cst_65 {dimension_numbers = #tpu.dot_dimension_numbers<[1], [0], [0], [1], [0, 0, 1, 1], [], []>} : vector<16x128xbf16>, vector<128x128xbf16>, vector<16x128xf32> -> vector<16x128xf32>
    %161 = arith.addf %156, %160 : vector<16x128xf32>
    %162 = vector.extract_strided_slice %144 {offsets = [48, 0], sizes = [16, 128], strides = [1, 1]} : vector<80x128xf32> to vector<16x128xf32>
    %c1184 = arith.constant 1184 : index
    %c0_66 = arith.constant 0 : index
    %163 = vector.load %arg3[%c1184, %c0_66] : memref<2336x128xbf16, #tpu.memory_space<vmem>>, vector<128x128xbf16>
    %164 = arith.truncf %162 : vector<16x128xf32> to vector<16x128xbf16>
    %cst_67 = arith.constant dense<0.000000e+00> : vector<16x128xf32>
    %165 = tpu.matmul %164, %163, %cst_67 {dimension_numbers = #tpu.dot_dimension_numbers<[1], [0], [0], [1], [0, 0, 1, 1], [], []>} : vector<16x128xbf16>, vector<128x128xbf16>, vector<16x128xf32> -> vector<16x128xf32>
    %166 = arith.addf %161, %165 : vector<16x128xf32>
    %167 = vector.extract_strided_slice %144 {offsets = [64, 0], sizes = [16, 128], strides = [1, 1]} : vector<80x128xf32> to vector<16x128xf32>
    %c1312 = arith.constant 1312 : index
    %c0_68 = arith.constant 0 : index
    %168 = vector.load %arg3[%c1312, %c0_68] : memref<2336x128xbf16, #tpu.memory_space<vmem>>, vector<128x128xbf16>
    %169 = arith.truncf %167 : vector<16x128xf32> to vector<16x128xbf16>
    %cst_69 = arith.constant dense<0.000000e+00> : vector<16x128xf32>
    %170 = tpu.matmul %169, %168, %cst_69 {dimension_numbers = #tpu.dot_dimension_numbers<[1], [0], [0], [1], [0, 0, 1, 1], [], []>} : vector<16x128xbf16>, vector<128x128xbf16>, vector<16x128xf32> -> vector<16x128xf32>
    %171 = arith.addf %166, %170 : vector<16x128xf32>
    %cst_70 = arith.constant 0.000000e+00 : f32
    %172 = vector.broadcast %cst_70 : f32 to vector<16x128xf32>
    %173 = arith.cmpf ogt, %171, %172 : vector<16x128xf32>
    %cst_71 = arith.constant 0.000000e+00 : f32
    %174 = vector.broadcast %cst_71 : f32 to vector<16x128xf32>
    %175 = arith.minimumf %171, %174 : vector<16x128xf32>
    %176 = math.exp %175 : vector<16x128xf32>
    %cst_72 = arith.constant 1.000000e+00 : f32
    %177 = vector.broadcast %cst_72 : f32 to vector<16x128xf32>
    %178 = arith.subf %176, %177 : vector<16x128xf32>
    %179 = arith.select %173, %171, %178 : vector<16x128xi1>, vector<16x128xf32>
    %c400 = arith.constant 400 : index
    %c0_73 = arith.constant 0 : index
    %180 = vector.load %arg4[%c400, %c0_73] : memref<432x64xbf16, #tpu.memory_space<vmem>>, vector<24x16xbf16>
    %181 = arith.truncf %179 : vector<16x128xf32> to vector<16x128xbf16>
    %cst_74 = arith.constant dense<0.000000e+00> : vector<24x128xf32>
    %182 = tpu.matmul %180, %181, %cst_74 {dimension_numbers = #tpu.dot_dimension_numbers<[1], [0], [0], [1], [0, 0, 1, 1], [], []>} : vector<24x16xbf16>, vector<16x128xbf16>, vector<24x128xf32> -> vector<24x128xf32>
    %c40 = arith.constant 40 : index
    %c0_75 = arith.constant 0 : index
    %183 = vector.load %arg2[%c40, %c0_75] : memref<48x256xf32, #tpu.memory_space<vmem>>, vector<1x128xf32>
    %184 = vector.extract_strided_slice %182 {offsets = [0, 0], sizes = [8, 128], strides = [1, 1]} : vector<24x128xf32> to vector<8x128xf32>
    %c1440 = arith.constant 1440 : index
    %c0_76 = arith.constant 0 : index
    %185 = vector.load %arg3[%c1440, %c0_76] : memref<2336x128xbf16, #tpu.memory_space<vmem>>, vector<128x128xbf16>
    %186 = arith.truncf %184 : vector<8x128xf32> to vector<8x128xbf16>
    %cst_77 = arith.constant dense<0.000000e+00> : vector<8x128xf32>
    %187 = tpu.matmul %186, %185, %cst_77 {dimension_numbers = #tpu.dot_dimension_numbers<[1], [0], [0], [1], [0, 0, 1, 1], [], []>} : vector<8x128xbf16>, vector<128x128xbf16>, vector<8x128xf32> -> vector<8x128xf32>
    %188 = vector.broadcast %183 : vector<1x128xf32> to vector<8x128xf32>
    %189 = arith.addf %188, %187 : vector<8x128xf32>
    %190 = vector.extract_strided_slice %182 {offsets = [8, 0], sizes = [8, 128], strides = [1, 1]} : vector<24x128xf32> to vector<8x128xf32>
    %c1568 = arith.constant 1568 : index
    %c0_78 = arith.constant 0 : index
    %191 = vector.load %arg3[%c1568, %c0_78] : memref<2336x128xbf16, #tpu.memory_space<vmem>>, vector<128x128xbf16>
    %192 = arith.truncf %190 : vector<8x128xf32> to vector<8x128xbf16>
    %cst_79 = arith.constant dense<0.000000e+00> : vector<8x128xf32>
    %193 = tpu.matmul %192, %191, %cst_79 {dimension_numbers = #tpu.dot_dimension_numbers<[1], [0], [0], [1], [0, 0, 1, 1], [], []>} : vector<8x128xbf16>, vector<128x128xbf16>, vector<8x128xf32> -> vector<8x128xf32>
    %194 = arith.addf %189, %193 : vector<8x128xf32>
    %195 = vector.extract_strided_slice %182 {offsets = [16, 0], sizes = [8, 128], strides = [1, 1]} : vector<24x128xf32> to vector<8x128xf32>
    %c1696 = arith.constant 1696 : index
    %c0_80 = arith.constant 0 : index
    %196 = vector.load %arg3[%c1696, %c0_80] : memref<2336x128xbf16, #tpu.memory_space<vmem>>, vector<128x128xbf16>
    %197 = arith.truncf %195 : vector<8x128xf32> to vector<8x128xbf16>
    %cst_81 = arith.constant dense<0.000000e+00> : vector<8x128xf32>
    %198 = tpu.matmul %197, %196, %cst_81 {dimension_numbers = #tpu.dot_dimension_numbers<[1], [0], [0], [1], [0, 0, 1, 1], [], []>} : vector<8x128xbf16>, vector<128x128xbf16>, vector<8x128xf32> -> vector<8x128xf32>
    %199 = arith.addf %194, %198 : vector<8x128xf32>
    %cst_82 = arith.constant 0.000000e+00 : f32
    %200 = vector.broadcast %cst_82 : f32 to vector<8x128xf32>
    %201 = arith.cmpf ogt, %199, %200 : vector<8x128xf32>
    %cst_83 = arith.constant 0.000000e+00 : f32
    %202 = vector.broadcast %cst_83 : f32 to vector<8x128xf32>
    %203 = arith.minimumf %199, %202 : vector<8x128xf32>
    %204 = math.exp %203 : vector<8x128xf32>
    %cst_84 = arith.constant 1.000000e+00 : f32
    %205 = vector.broadcast %cst_84 : f32 to vector<8x128xf32>
    %206 = arith.subf %204, %205 : vector<8x128xf32>
    %207 = arith.select %201, %199, %206 : vector<8x128xi1>, vector<8x128xf32>
    %c41 = arith.constant 41 : index
    %c0_85 = arith.constant 0 : index
    %208 = vector.load %arg2[%c41, %c0_85] : memref<48x256xf32, #tpu.memory_space<vmem>>, vector<1x128xf32>
    %209 = vector.extract_strided_slice %207 {offsets = [0, 0], sizes = [2, 128], strides = [1, 1]} : vector<8x128xf32> to vector<2x128xf32>
    %c1824 = arith.constant 1824 : index
    %c0_86 = arith.constant 0 : index
    %210 = vector.load %arg3[%c1824, %c0_86] : memref<2336x128xbf16, #tpu.memory_space<vmem>>, vector<128x128xbf16>
    %211 = arith.truncf %209 : vector<2x128xf32> to vector<2x128xbf16>
    %cst_87 = arith.constant dense<0.000000e+00> : vector<2x128xf32>
    %212 = tpu.matmul %211, %210, %cst_87 {dimension_numbers = #tpu.dot_dimension_numbers<[1], [0], [0], [1], [0, 0, 1, 1], [], []>} : vector<2x128xbf16>, vector<128x128xbf16>, vector<2x128xf32> -> vector<2x128xf32>
    %213 = vector.broadcast %208 : vector<1x128xf32> to vector<2x128xf32>
    %214 = arith.addf %213, %212 : vector<2x128xf32>
    %215 = vector.extract_strided_slice %207 {offsets = [2, 0], sizes = [2, 128], strides = [1, 1]} : vector<8x128xf32> to vector<2x128xf32>
    %c1952 = arith.constant 1952 : index
    %c0_88 = arith.constant 0 : index
    %216 = vector.load %arg3[%c1952, %c0_88] : memref<2336x128xbf16, #tpu.memory_space<vmem>>, vector<128x128xbf16>
    %217 = arith.truncf %215 : vector<2x128xf32> to vector<2x128xbf16>
    %cst_89 = arith.constant dense<0.000000e+00> : vector<2x128xf32>
    %218 = tpu.matmul %217, %216, %cst_89 {dimension_numbers = #tpu.dot_dimension_numbers<[1], [0], [0], [1], [0, 0, 1, 1], [], []>} : vector<2x128xbf16>, vector<128x128xbf16>, vector<2x128xf32> -> vector<2x128xf32>
    %219 = arith.addf %214, %218 : vector<2x128xf32>
    %220 = vector.extract_strided_slice %207 {offsets = [4, 0], sizes = [2, 128], strides = [1, 1]} : vector<8x128xf32> to vector<2x128xf32>
    %c2080 = arith.constant 2080 : index
    %c0_90 = arith.constant 0 : index
    %221 = vector.load %arg3[%c2080, %c0_90] : memref<2336x128xbf16, #tpu.memory_space<vmem>>, vector<128x128xbf16>
    %222 = arith.truncf %220 : vector<2x128xf32> to vector<2x128xbf16>
    %cst_91 = arith.constant dense<0.000000e+00> : vector<2x128xf32>
    %223 = tpu.matmul %222, %221, %cst_91 {dimension_numbers = #tpu.dot_dimension_numbers<[1], [0], [0], [1], [0, 0, 1, 1], [], []>} : vector<2x128xbf16>, vector<128x128xbf16>, vector<2x128xf32> -> vector<2x128xf32>
    %224 = arith.addf %219, %223 : vector<2x128xf32>
    %225 = vector.extract_strided_slice %207 {offsets = [6, 0], sizes = [2, 128], strides = [1, 1]} : vector<8x128xf32> to vector<2x128xf32>
    %c2208 = arith.constant 2208 : index
    %c0_92 = arith.constant 0 : index
    %226 = vector.load %arg3[%c2208, %c0_92] : memref<2336x128xbf16, #tpu.memory_space<vmem>>, vector<128x128xbf16>
    %227 = arith.truncf %225 : vector<2x128xf32> to vector<2x128xbf16>
    %cst_93 = arith.constant dense<0.000000e+00> : vector<2x128xf32>
    %228 = tpu.matmul %227, %226, %cst_93 {dimension_numbers = #tpu.dot_dimension_numbers<[1], [0], [0], [1], [0, 0, 1, 1], [], []>} : vector<2x128xbf16>, vector<128x128xbf16>, vector<2x128xf32> -> vector<2x128xf32>
    %229 = arith.addf %224, %228 : vector<2x128xf32>
    %c256 = arith.constant 256 : index
    %c0_94 = arith.constant 0 : index
    %230 = vector.load %arg3[%c256, %c0_94] : memref<2336x128xbf16, #tpu.memory_space<vmem>>, vector<128x128xbf16>
    %231 = arith.truncf %77 : vector<2x128xf32> to vector<2x128xbf16>
    %cst_95 = arith.constant dense<0.000000e+00> : vector<2x128xf32>
    %232 = tpu.matmul %231, %230, %cst_95 {dimension_numbers = #tpu.dot_dimension_numbers<[1], [0], [0], [1], [0, 0, 1, 1], [], []>} : vector<2x128xbf16>, vector<128x128xbf16>, vector<2x128xf32> -> vector<2x128xf32>
    %c384 = arith.constant 384 : index
    %c0_96 = arith.constant 0 : index
    %233 = vector.load %arg3[%c384, %c0_96] : memref<2336x128xbf16, #tpu.memory_space<vmem>>, vector<128x128xbf16>
    %234 = arith.truncf %229 : vector<2x128xf32> to vector<2x128xbf16>
    %cst_97 = arith.constant dense<0.000000e+00> : vector<2x128xf32>
    %235 = tpu.matmul %234, %233, %cst_97 {dimension_numbers = #tpu.dot_dimension_numbers<[1], [0], [0], [1], [0, 0, 1, 1], [], []>} : vector<2x128xbf16>, vector<128x128xbf16>, vector<2x128xf32> -> vector<2x128xf32>
    %236 = arith.addf %232, %235 : vector<2x128xf32>
    %c42 = arith.constant 42 : index
    %c0_98 = arith.constant 0 : index
    %237 = vector.load %arg2[%c42, %c0_98] : memref<48x256xf32, #tpu.memory_space<vmem>>, vector<1x128xf32>
    %238 = vector.broadcast %237 : vector<1x128xf32> to vector<2x128xf32>
    %239 = arith.addf %236, %238 : vector<2x128xf32>
    %cst_99 = arith.constant 0.000000e+00 : f32
    %240 = vector.broadcast %cst_99 : f32 to vector<2x128xf32>
    %241 = arith.cmpf ogt, %239, %240 : vector<2x128xf32>
    %cst_100 = arith.constant 0.000000e+00 : f32
    %242 = vector.broadcast %cst_100 : f32 to vector<2x128xf32>
    %243 = arith.minimumf %239, %242 : vector<2x128xf32>
    %244 = math.exp %243 : vector<2x128xf32>
    %cst_101 = arith.constant 1.000000e+00 : f32
    %245 = vector.broadcast %cst_101 : f32 to vector<2x128xf32>
    %246 = arith.subf %244, %245 : vector<2x128xf32>
    %247 = arith.select %241, %239, %246 : vector<2x128xi1>, vector<2x128xf32>
    %c512 = arith.constant 512 : index
    %c0_102 = arith.constant 0 : index
    %248 = vector.load %arg3[%c512, %c0_102] : memref<2336x128xbf16, #tpu.memory_space<vmem>>, vector<128x8xbf16>
    %249 = arith.truncf %247 : vector<2x128xf32> to vector<2x128xbf16>
    %cst_103 = arith.constant dense<0.000000e+00> : vector<2x8xf32>
    %250 = tpu.matmul %249, %248, %cst_103 {dimension_numbers = #tpu.dot_dimension_numbers<[1], [0], [0], [1], [0, 0, 1, 1], [], []>} : vector<2x128xbf16>, vector<128x8xbf16>, vector<2x8xf32> -> vector<2x8xf32>
    %c43 = arith.constant 43 : index
    %c0_104 = arith.constant 0 : index
    %251 = vector.load %arg2[%c43, %c0_104] : memref<48x256xf32, #tpu.memory_space<vmem>>, vector<1x8xf32>
    %252 = vector.broadcast %251 : vector<1x8xf32> to vector<2x8xf32>
    %253 = arith.addf %250, %252 : vector<2x8xf32>
    %c0_105 = arith.constant 0 : index
    %c0_106 = arith.constant 0 : index
    %254 = vector.load %arg5[%c0_105, %c0_106] : memref<2x8xf32, #tpu.memory_space<vmem>>, vector<2x8xf32>
    tpu.vector_store %arg5[%c0_105, %c0_106], %253 {strides = array<i32>} : memref<2x8xf32, #tpu.memory_space<vmem>>, vector<2x8xf32>,
    return
  }
}

</mosaic_0001>

<llo_original>
// kernel: actor_forward.1
$region0: #{actor_forward.1}
  #allocation0 [shape = 'u32[]', space=smem, size = 0x4, offset = 0x4, fixed_abs, tag = 'smem constant byte address 0x4 - core index']
  #allocation1 [shape = 'u32[144,128]{1,0:T(1,128)}', space=vmem, size = 0x12000, scoped, tag = 'internal scratch']
  %s0 = inlined_call_operand.vmem [shape: f32[2,32], index: 0, kind: input, shape index: {}]
  %s1 = inlined_call_operand.hbm [shape: f32[64,16], index: 1, kind: input, shape index: {}]
  %s2 = inlined_call_operand.hbm [shape: f32[48,256], index: 2, kind: input, shape index: {}]
  %s3 = inlined_call_operand.hbm [shape: bf16[2336,128], index: 3, kind: input, shape index: {}]
  %s4 = inlined_call_operand.hbm [shape: bf16[432,64], index: 4, kind: input, shape index: {}]
  %s5 = inlined_call_operand.hbm [shape: f32[2,8], index: 5, kind: output, shape index: {}]
  %s6 = sld [smem:[#allocation0]]
  $region46: #{actor_forward.1} parent=0
    _
  %s8 = ssub.s32 1, %s6
  %s9 = scalar_select 0, %s8, %s6
  $region1: #{actor_forward.1} parent=0
    #allocation2 [shape = 'u8[32768]{0}', space=vmem, size = 0x8000, scoped, tag = 'input window, operand 1, single buffered']
    #allocation3 [shape = 's32[1]{0}', space=sflag, size = 0x4, scoped, tag = 'scoped memory for actor_forward.1']
    #allocation4 [shape = 's32[1]{0}', space=sflag, size = 0x4, scoped, tag = 'scoped memory for actor_forward.1']
    #allocation5 [shape = 'u8[49152]{0}', space=vmem, size = 0xc000, scoped, tag = 'input window, operand 2, single buffered']
    #allocation6 [shape = 's32[1]{0}', space=sflag, size = 0x4, scoped, tag = 'scoped memory for actor_forward.1']
    #allocation7 [shape = 'u8[598016]{0}', space=vmem, size = 0x92000, scoped, tag = 'input window, operand 3, single buffered']
    #allocation8 [shape = 'u8[110592]{0}', space=vmem, size = 0x1b000, scoped, tag = 'input window, operand 4, single buffered']
    #allocation9 [shape = 's32[1]{0}', space=sflag, size = 0x4, scoped, tag = 'scoped memory for actor_forward.1']
    #allocation10 [shape = 'u8[1024]{0}', space=vmem, size = 0x400, scoped, tag = 'output window, operand 0, single buffered']
    %10 = vsyncpa [#allocation3], 0
    %11 = vsyncpa [#allocation6], 0
    %12 = vsyncpa [#allocation9], 0
    %13 = vsyncpa [#allocation4], 0
    // Predicated region
    $region2: #{actor_forward.1} parent=1 // pred_check
      _
    $region3: #{actor_forward.1} parent=1 // pred_check_branch
      %15 = sbr.rel (0) target = $region5
    $region4: #{actor_forward.1} parent=1 // pred_region
      _
    $region5: #{actor_forward.1} parent=1 // pred_fallthru
      _
    // Predicated region
    $region6: #{actor_forward.1} parent=1 // pred_check
      _
    $region7: #{actor_forward.1} parent=1 // pred_check_branch
      %17 = sbr.rel (0) target = $region9
    $region8: #{actor_forward.1} parent=1 // pred_region
      %s19 = ssub.s32 1024, 1024
      %20 = vsyncadd [#allocation3], %s19
      %s21 = sshll.u32 [#allocation2], 4
      %s22 = int_to_ptr.vmem [resolvable:$true] %s21
      %27 = dma.hbm_to_vmem [thread:$0]  %s1, 1024, %s22, [#allocation3], 128, 128, 8
    $region9: #{actor_forward.1} parent=1 // pred_fallthru
      _
    // Predicated region
    $region10: #{actor_forward.1} parent=1 // pred_check
      _
    $region11: #{actor_forward.1} parent=1 // pred_check_branch
      %29 = sbr.rel (0) target = $region13
    $region12: #{actor_forward.1} parent=1 // pred_region
      %s31 = ssub.s32 1536, 1536
      %32 = vsyncadd [#allocation6], %s31
      %s33 = sshll.u32 [#allocation5], 4
      %s34 = int_to_ptr.vmem [resolvable:$true] %s33
      %39 = dma.hbm_to_vmem [thread:$0]  %s2, 1536, %s34, [#allocation6], 256, 256, 16
    $region13: #{actor_forward.1} parent=1 // pred_fallthru
      _
    // Predicated region
    $region14: #{actor_forward.1} parent=1 // pred_check
      _
    $region15: #{actor_forward.1} parent=1 // pred_check_branch
      %41 = sbr.rel (0) target = $region17
    $region16: #{actor_forward.1} parent=1 // pred_region
      %s43 = ssub.s32 18688, 18688
      %44 = vsyncadd [#allocation6], %s43
      %s45 = sshll.u32 [#allocation7], 4
      %s46 = int_to_ptr.vmem [resolvable:$true] %s45
      %51 = dma.hbm_to_vmem [thread:$0]  %s3, 18688, %s46, [#allocation6], 64, 64, 4
    $region17: #{actor_forward.1} parent=1 // pred_fallthru
      _
    // Predicated region
    $region18: #{actor_forward.1} parent=1 // pred_check
      _
    $region19: #{actor_forward.1} parent=1 // pred_check_branch
      %53 = sbr.rel (0) target = $region21
    $region20: #{actor_forward.1} parent=1 // pred_region
      %s55 = ssub.s32 3456, 3456
      %56 = vsyncadd [#allocation9], %s55
      %s57 = sshll.u32 [#allocation8], 4
      %s58 = int_to_ptr.vmem [resolvable:$true] %s57
      %63 = dma.hbm_to_vmem [thread:$0]  %s4, 3456, %s58, [#allocation9], 64, 64, 4
    $region21: #{actor_forward.1} parent=1 // pred_fallthru
      _
    // Predicated region
    $region22: #{actor_forward.1} parent=1 // pred_check
      _
    $region23: #{actor_forward.1} parent=1 // pred_check_branch
      %65 = sbr.rel (0) target = $region25
    $region24: #{actor_forward.1} parent=1 // pred_region
      %66 = dma.done [#allocation3], 1024
    $region25: #{actor_forward.1} parent=1 // pred_fallthru
      _
    // Predicated region
    $region26: #{actor_forward.1} parent=1 // pred_check
      _
    $region27: #{actor_forward.1} parent=1 // pred_check_branch
      %68 = sbr.rel (0) target = $region29
    $region28: #{actor_forward.1} parent=1 // pred_region
      %69 = dma.done [#allocation6], 1536
    $region29: #{actor_forward.1} parent=1 // pred_fallthru
      _
    // Predicated region
    $region30: #{actor_forward.1} parent=1 // pred_check
      _
    $region31: #{actor_forward.1} parent=1 // pred_check_branch
      %71 = sbr.rel (0) target = $region33
    $region32: #{actor_forward.1} parent=1 // pred_region
      %72 = dma.done [#allocation6], 18688
    $region33: #{actor_forward.1} parent=1 // pred_fallthru
      _
    // Predicated region
    $region34: #{actor_forward.1} parent=1 // pred_check
      _
    $region35: #{actor_forward.1} parent=1 // pred_check_branch
      %74 = sbr.rel (0) target = $region37
    $region36: #{actor_forward.1} parent=1 // pred_region
      %75 = dma.done [#allocation9], 3456
    $region37: #{actor_forward.1} parent=1 // pred_fallthru
      _
    %v77 = vld [vmem:[%s0] sm:$0x3]
    %v78 = vld [vmem:[#allocation5] sm:$0xff]
    %v79 = vld [vmem:[#allocation5 + $0x8] sm:$0xff]
    %v80 = vld [vmem:[#allocation5 + $0x10] sm:$0xff]
    %v81 = vld [vmem:[#allocation5 + $0x18] sm:$0xff]
    %v82 = vld [vmem:[#allocation5 + $0x20] sm:$0xff]
    %v83 = vld [vmem:[#allocation5 + $0x28] sm:$0xff]
    %v84 = vld [vmem:[#allocation5 + $0x30] sm:$0xff]
    %v85 = vld [vmem:[#allocation5 + $0x38] sm:$0xff]
    %v86 = vpack.c.bf16 %v77, %v77
    %v87 = vpack.c.bf16 %v80, %v78
    %v88 = vpack.c.bf16 %v81, %v79
    %v89 = vpack.c.bf16 %v84, %v82
    %v90 = vpack.c.bf16 %v85, %v83
    %s91 = scalar_lea.vmem [#allocation5], 64
    %v92 = vld [vmem:[%s91] ss:$8 sm:$0x3]
    %v94 = vlaneseq
    %v95 = vshrl.u32 %v94, 7
    %v96 = vsub.s32 0, %v95
    %v97 = vrot.slane %v92, %v96
    %v98 = vlaneseq
    %v99 = vshrl.u32 %v98, 7
    %v100 = vsub.s32 1, %v99
    %v101 = vrot.slane %v92, %v100
    %vm104 = vcmask 261120
    %v106 = vsel %vm104, %v86, 0
    %108 = vmatprep.subr.bf16.mxu0 0
    %109 = vmatpush1.bf16.msra.mxu0 0
    %110 = vmatprep.subr.bf16.mxu0 0
    %111 = vmatpush1.bf16.msra.mxu0 0
    %112 = vmatprep.subr.bf16.mxu0 0
    %113 = vmatpush1.bf16.msra.mxu0 0
    %114 = vmatprep.subr.bf16.mxu0 0
    %115 = vmatpush1.bf16.msra.mxu0 0
    %116 = vmatprep.subr.bf16.mxu0 0
    %117 = vmatpush1.bf16.msra.mxu0 0
    %118 = vmatprep.subr.bf16.mxu0 0
    %119 = vmatpush1.bf16.msra.mxu0 0
    %120 = vmatprep.subr.bf16.mxu0 %v90
    %121 = vmatpush1.bf16.msra.mxu0 %v89
    %122 = vmatprep.subr.bf16.mxu0 %v88
    %123 = vmatpush1.bf16.msra.mxu0 %v87
    %124 = vmatprep.subr.bf16.mxu0 0
    %125 = vmatpush2.bf16.msra.mxu0 0
    %126 = vmatprep.subr.bf16.mxu0 0
    %127 = vmatpush2.bf16.msra.mxu0 0
    %128 = vmatprep.subr.bf16.mxu0 0
    %129 = vmatpush2.bf16.msra.mxu0 0
    %130 = vmatprep.subr.bf16.mxu0 0
    %131 = vmatpush2.bf16.msra.mxu0 0
    %132 = vmatprep.subr.bf16.mxu0 0
    %133 = vmatpush2.bf16.msra.mxu0 0
    %134 = vmatprep.subr.bf16.mxu0 0
    %135 = vmatpush2.bf16.msra.mxu0 0
    %136 = vmatprep.subr.bf16.mxu0 0
    %137 = vmatpush2.bf16.msra.mxu0 0
    %138 = vmatprep.subr.bf16.mxu0 0
    %139 = vmatpush2.bf16.msra.mxu0 0
    %140 = vmatprep.mubr.bf16.mxu0 0
    %141 = vmatmul.mubr.bf16.gmra.mxu0 %v106
    %v142 = vpop.f32.mrf.mxu0
    %v143 = vadd.f32 %v97, %v142
    %v144 = vpop.f32.mrf.mxu0
    %v145 = vadd.f32 %v101, %v144
    %v146 = vpop.f32.mrf.mxu0
    %v147 = vpop.f32.mrf.mxu0
    %148 = vdwg.mxu0
    %vm149 = vcmp.gt.f32.partialorder %v143, 0.0
    %vm150 = vcmp.gt.f32.partialorder %v145, 0.0
    %v151 = vmin.f32 %v143, 0.0
    %v152 = vmin.f32 %v145, 0.0
    %v153 = vmul.f32 %v151, 1.442695
    %v154 = vpow.pop %v153
    %v155 = vmul.f32 %v152, 1.442695
    %v156 = vpow.pop %v155
    %v157 = vsub.f32 %v154, 1.0
    %v158 = vsub.f32 %v156, 1.0
    %v159 = vsel %vm149, %v143, %v157
    %v160 = vsel %vm150, %v145, %v158
    %s161 = scalar_lea.vmem [#allocation5], 65
    %v162 = vld [vmem:[%s161] ss:$8 sm:$0x3]
    %s163 = scalar_lea.vmem [#allocation5], 66
    %v164 = vld [vmem:[%s163] ss:$8 sm:$0x3]
    %vm165 = vcmask 1041408
    %v166 = vsel %vm165, %v159, 0.0
    %v167 = vsel %vm165, %v160, 0.0
    %v168 = vadd.f32 %v166, %v167
    %169 = vadd.xlane.f32.xlu0 %v168
    %v170 = vpop.xlane.xlu0 %169
    %v171 = vrcp.pop 256.0
    %v172 = vmul.f32 %v170, %v171
    %v173 = vsub.f32 %v159, %v172
    %v174 = vsub.f32 %v160, %v172
    %v175 = vmul.f32 %v173, %v173
    %v176 = vmul.f32 %v174, %v174
    %v177 = vsel %vm165, %v175, 0.0
    %v178 = vsel %vm165, %v176, 0.0
    %v179 = vadd.f32 %v177, %v178
    %180 = vadd.xlane.f32.xlu0 %v179
    %v181 = vpop.xlane.xlu0 %180
    %v182 = vmul.f32 %v181, %v171
    %v183 = vadd.f32 %v182, 1e-05
    %v184 = vrsqrt.pop %v183
    %v185 = vmul.f32 %v173, %v184
    %v186 = vmul.f32 %v174, %v184
    %v188 = vlaneseq
    %v189 = vshrl.u32 %v188, 7
    %v190 = vsub.s32 0, %v189
    %v191 = vrot.slane %v162, %v190
    %v192 = vlaneseq
    %v193 = vshrl.u32 %v192, 7
    %v194 = vsub.s32 1, %v193
    %v195 = vrot.slane %v162, %v194
    %v198 = vmul.f32 %v185, %v191
    %v199 = vmul.f32 %v186, %v195
    %v201 = vlaneseq
    %v202 = vshrl.u32 %v201, 7
    %v203 = vsub.s32 0, %v202
    %v204 = vrot.slane %v164, %v203
    %v205 = vlaneseq
    %v206 = vshrl.u32 %v205, 7
    %v207 = vsub.s32 1, %v206
    %v208 = vrot.slane %v164, %v207
    %v211 = vadd.f32 %v198, %v204
    %v212 = vadd.f32 %v199, %v208
    %v213 = vld [vmem:[#allocation7] sm:$0xf]
    %v214 = vld [vmem:[#allocation7 + $0x4] sm:$0xf]
    %v215 = vld [vmem:[#allocation7 + $0x8] sm:$0xf]
    %v216 = vld [vmem:[#allocation7 + $0xc] sm:$0xf]
    %v217 = vld [vmem:[#allocation7 + $0x10] sm:$0xf]
    %v218 = vld [vmem:[#allocation7 + $0x14] sm:$0xf]
    %v219 = vld [vmem:[#allocation7 + $0x18] sm:$0xf]
    %v220 = vld [vmem:[#allocation7 + $0x1c] sm:$0xf]
    %v221 = vld [vmem:[#allocation7 + $0x20] sm:$0xf]
    %v222 = vld [vmem:[#allocation7 + $0x24] sm:$0xf]
    %v223 = vld [vmem:[#allocation7 + $0x28] sm:$0xf]
    %v224 = vld [vmem:[#allocation7 + $0x2c] sm:$0xf]
    %v225 = vld [vmem:[#allocation7 + $0x30] sm:$0xf]
    %v226 = vld [vmem:[#allocation7 + $0x34] sm:$0xf]
    %v227 = vld [vmem:[#allocation7 + $0x38] sm:$0xf]
    %v228 = vld [vmem:[#allocation7 + $0x3c] sm:$0xf]
    %v229 = vld [vmem:[#allocation7 + $0x40] sm:$0xf]
    %v230 = vld [vmem:[#allocation7 + $0x44] sm:$0xf]
    %v231 = vld [vmem:[#allocation7 + $0x48] sm:$0xf]
    %v232 = vld [vmem:[#allocation7 + $0x4c] sm:$0xf]
    %v233 = vld [vmem:[#allocation7 + $0x50] sm:$0xf]
    %v234 = vld [vmem:[#allocation7 + $0x54] sm:$0xf]
    %v235 = vld [vmem:[#allocation7 + $0x58] sm:$0xf]
    %v236 = vld [vmem:[#allocation7 + $0x5c] sm:$0xf]
    %v237 = vld [vmem:[#allocation7 + $0x60] sm:$0xf]
    %v238 = vld [vmem:[#allocation7 + $0x64] sm:$0xf]
    %v239 = vld [vmem:[#allocation7 + $0x68] sm:$0xf]
    %v240 = vld [vmem:[#allocation7 + $0x6c] sm:$0xf]
    %v241 = vld [vmem:[#allocation7 + $0x70] sm:$0xf]
    %v242 = vld [vmem:[#allocation7 + $0x74] sm:$0xf]
    %v243 = vld [vmem:[#allocation7 + $0x78] sm:$0xf]
    %v244 = vld [vmem:[#allocation7 + $0x7c] sm:$0xf]
    %v245 = vpack.c.bf16 %v211, %v211
    %v246 = vpack.c.bf16 %v212, %v212
    %v247 = vld [vmem:[#allocation5 + $0x43] ss:$0 sm:$0xff]
    %v280 = vunpack.c.l.b16 %v213
    %v281 = vunpack.c.l.b16 %v214
    %v282 = vunpack.c.l.b16 %v215
    %v283 = vunpack.c.l.b16 %v216
    %v284 = vunpack.c.l.b16 %v217
    %v285 = vunpack.c.l.b16 %v218
    %v286 = vunpack.c.l.b16 %v219
    %v287 = vunpack.c.l.b16 %v220
    %v288 = vunpack.c.l.b16 %v221
    %v289 = vunpack.c.l.b16 %v222
    %v290 = vunpack.c.l.b16 %v223
    %v291 = vunpack.c.l.b16 %v224
    %v292 = vunpack.c.l.b16 %v225
    %v293 = vunpack.c.l.b16 %v226
    %v294 = vunpack.c.l.b16 %v227
    %v295 = vunpack.c.l.b16 %v228
    %v296 = vunpack.c.l.b16 %v229
    %v297 = vunpack.c.l.b16 %v230
    %v298 = vunpack.c.l.b16 %v231
    %v299 = vunpack.c.l.b16 %v232
    %v300 = vunpack.c.l.b16 %v233
    %v301 = vunpack.c.l.b16 %v234
    %v302 = vunpack.c.l.b16 %v235
    %v303 = vunpack.c.l.b16 %v236
    %v304 = vunpack.c.l.b16 %v237
    %v305 = vunpack.c.l.b16 %v238
    %v306 = vunpack.c.l.b16 %v239
    %v307 = vunpack.c.l.b16 %v240
    %v308 = vunpack.c.l.b16 %v241
    %v309 = vunpack.c.l.b16 %v242
    %v310 = vunpack.c.l.b16 %v243
    %v311 = vunpack.c.l.b16 %v244
    %v312 = vpack.c.b16 %v281, %v280
    %v313 = vpack.c.b16 %v283, %v282
    %v314 = vpack.c.b16 %v285, %v284
    %v315 = vpack.c.b16 %v287, %v286
    %v316 = vpack.c.b16 %v289, %v288
    %v317 = vpack.c.b16 %v291, %v290
    %v318 = vpack.c.b16 %v293, %v292
    %v319 = vpack.c.b16 %v295, %v294
    %v320 = vpack.c.b16 %v297, %v296
    %v321 = vpack.c.b16 %v299, %v298
    %v322 = vpack.c.b16 %v301, %v300
    %v323 = vpack.c.b16 %v303, %v302
    %v324 = vpack.c.b16 %v305, %v304
    %v325 = vpack.c.b16 %v307, %v306
    %v326 = vpack.c.b16 %v309, %v308
    %v327 = vpack.c.b16 %v311, %v310
    %344 = vmatprep.subr.bf16.mxu0 0
    %345 = vmatpush1.bf16.msra.mxu0 %v319
    %346 = vmatprep.subr.bf16.mxu0 0
    %347 = vmatpush1.bf16.msra.mxu0 %v318
    %348 = vmatprep.subr.bf16.mxu0 0
    %349 = vmatpush1.bf16.msra.mxu0 %v317
    %350 = vmatprep.subr.bf16.mxu0 0
    %351 = vmatpush1.bf16.msra.mxu0 %v316
    %352 = vmatprep.subr.bf16.mxu0 0
    %353 = vmatpush1.bf16.msra.mxu0 %v315
    %354 = vmatprep.subr.bf16.mxu0 0
    %355 = vmatpush1.bf16.msra.mxu0 %v314
    %356 = vmatprep.subr.bf16.mxu0 0
    %357 = vmatpush1.bf16.msra.mxu0 %v313
    %358 = vmatprep.subr.bf16.mxu0 0
    %359 = vmatpush1.bf16.msra.mxu0 %v312
    %360 = vmatprep.subr.bf16.mxu0 0
    %361 = vmatpush2.bf16.msra.mxu0 %v327
    %362 = vmatprep.subr.bf16.mxu0 0
    %363 = vmatpush2.bf16.msra.mxu0 %v326
    %364 = vmatprep.subr.bf16.mxu0 0
    %365 = vmatpush2.bf16.msra.mxu0 %v325
    %366 = vmatprep.subr.bf16.mxu0 0
    %367 = vmatpush2.bf16.msra.mxu0 %v324
    %368 = vmatprep.subr.bf16.mxu0 0
    %369 = vmatpush2.bf16.msra.mxu0 %v323
    %370 = vmatprep.subr.bf16.mxu0 0
    %371 = vmatpush2.bf16.msra.mxu0 %v322
    %372 = vmatprep.subr.bf16.mxu0 0
    %373 = vmatpush2.bf16.msra.mxu0 %v321
    %374 = vmatprep.subr.bf16.mxu0 0
    %375 = vmatpush2.bf16.msra.mxu0 %v320
    %376 = vmatprep.mubr.bf16.mxu0 %v246
    %377 = vmatmul.mubr.bf16.gmra.mxu0 %v245
    %v378 = vpop.f32.mrf.mxu0
    %v379 = vadd.f32 %v247, %v378
    %v380 = vpop.f32.mrf.mxu0
    %v381 = vpop.f32.mrf.mxu0
    %v382 = vpop.f32.mrf.mxu0
    %383 = vdwg.mxu0
    %vm384 = vcmp.gt.f32.partialorder %v379, 0.0
    %v385 = vmin.f32 %v379, 0.0
    %v386 = vmul.f32 %v385, 1.442695
    %v387 = vpow.pop %v386
    %v388 = vsub.f32 %v387, 1.0
    %v389 = vsel %vm384, %v379, %v388
    %v390 = vld [vmem:[#allocation5 + $0x44] ss:$0 sm:$0xff]
    %v391 = vld [vmem:[#allocation5 + $0x45] ss:$0 sm:$0xff]
    %v392 = vsel %vm165, %v389, 0.0
    %393 = vadd.xlane.f32.xlu0 %v392
    %v394 = vpop.xlane.xlu0 %393
    %v395 = vrcp.pop 128.0
    %v396 = vmul.f32 %v394, %v395
    %v397 = vsub.f32 %v389, %v396
    %v398 = vmul.f32 %v397, %v397
    %v399 = vsel %vm165, %v398, 0.0
    %400 = vadd.xlane.f32.xlu0 %v399
    %v401 = vpop.xlane.xlu0 %400
    %v402 = vmul.f32 %v401, %v395
    %v403 = vadd.f32 %v402, 1e-05
    %v404 = vrsqrt.pop %v403
    %v405 = vmul.f32 %v397, %v404
    %v406 = vmul.f32 %v405, %v390
    %v407 = vadd.f32 %v406, %v391
    %v408 = vld [vmem:[#allocation2] sm:$0xff]
    %v409 = vld [vmem:[#allocation2 + $0x8] sm:$0xff]
    %v410 = vld [vmem:[#allocation2 + $0x10] sm:$0xff]
    %v411 = vld [vmem:[#allocation2 + $0x18] sm:$0xff]
    %v412 = vld [vmem:[#allocation2 + $0x20] sm:$0xff]
    %v413 = vld [vmem:[#allocation2 + $0x28] sm:$0xff]
    %v414 = vld [vmem:[#allocation2 + $0x30] sm:$0xff]
    %v415 = vld [vmem:[#allocation2 + $0x38] sm:$0xff]
    %v416 = vld [vmem:[#allocation8] sm:$0xf]
    %v417 = vld [vmem:[#allocation8 + $0x4] sm:$0xf]
    %v418 = vld [vmem:[#allocation8 + $0x8] sm:$0xf]
    %v419 = vld [vmem:[#allocation8 + $0xc] sm:$0xf]
    %v420 = vld [vmem:[#allocation8 + $0x10] sm:$0xf]
    %v421 = vld [vmem:[#allocation8 + $0x14] sm:$0xf]
    %v422 = vld [vmem:[#allocation8 + $0x18] sm:$0xf]
    %v423 = vld [vmem:[#allocation8 + $0x1c] sm:$0xf]
    %v424 = vld [vmem:[#allocation8 + $0x20] sm:$0xf]
    %v425 = vld [vmem:[#allocation8 + $0x24] sm:$0xf]
    %v426 = vld [vmem:[#allocation8 + $0x28] sm:$0xf]
    %v427 = vld [vmem:[#allocation8 + $0x2c] sm:$0xf]
    %v428 = vld [vmem:[#allocation8 + $0x30] sm:$0xf]
    %v429 = vld [vmem:[#allocation8 + $0x34] sm:$0xf]
    %v430 = vld [vmem:[#allocation8 + $0x38] sm:$0xf]
    %v431 = vld [vmem:[#allocation8 + $0x3c] sm:$0xf]
    %v432 = vld [vmem:[#allocation8 + $0x40] sm:$0xf]
    %v433 = vld [vmem:[#allocation8 + $0x44] sm:$0xf]
    %v434 = vld [vmem:[#allocation8 + $0x48] sm:$0xf]
    %v435 = vld [vmem:[#allocation8 + $0x4c] sm:$0xf]
    %v436 = vld [vmem:[#allocation8 + $0x50] sm:$0xf]
    %v437 = vld [vmem:[#allocation8 + $0x54] sm:$0xf]
    %v438 = vld [vmem:[#allocation8 + $0x58] sm:$0xf]
    %v439 = vld [vmem:[#allocation8 + $0x5c] sm:$0xf]
    %v440 = vld [vmem:[#allocation8 + $0x60] sm:$0xf]
    %v441 = vld [vmem:[#allocation8 + $0x64] sm:$0xf]
    %v442 = vld [vmem:[#allocation8 + $0x68] sm:$0xf]
    %v443 = vld [vmem:[#allocation8 + $0x6c] sm:$0xf]
    %v444 = vld [vmem:[#allocation8 + $0x70] sm:$0xf]
    %v445 = vld [vmem:[#allocation8 + $0x74] sm:$0xf]
    %v446 = vld [vmem:[#allocation8 + $0x78] sm:$0xf]
    %v447 = vld [vmem:[#allocation8 + $0x7c] sm:$0xf]
    %v448 = vld [vmem:[#allocation8 + $0x80] sm:$0xf]
    %v449 = vld [vmem:[#allocation8 + $0x84] sm:$0xf]
    %v450 = vld [vmem:[#allocation8 + $0x88] sm:$0xf]
    %v451 = vld [vmem:[#allocation8 + $0x8c] sm:$0xf]
    %v452 = vld [vmem:[#allocation8 + $0x90] sm:$0xf]
    %v453 = vld [vmem:[#allocation8 + $0x94] sm:$0xf]
    %v454 = vld [vmem:[#allocation8 + $0x98] sm:$0xf]
    %v455 = vld [vmem:[#allocation8 + $0x9c] sm:$0xf]
    %v456 = vpack.c.bf16 %v409, %v408
    %v457 = vpack.c.bf16 %v411, %v410
    %v458 = vpack.c.bf16 %v413, %v412
    %v459 = vpack.c.bf16 %v415, %v414
    %v500 = vunpack.c.l.b16 %v416
    %v501 = vunpack.c.l.b16 %v417
    %v502 = vunpack.c.l.b16 %v418
    %v503 = vunpack.c.l.b16 %v419
    %v504 = vunpack.c.l.b16 %v420
    %v505 = vunpack.c.l.b16 %v421
    %v506 = vunpack.c.l.b16 %v422
    %v507 = vunpack.c.l.b16 %v423
    %v508 = vunpack.c.l.b16 %v424
    %v509 = vunpack.c.l.b16 %v425
    %v510 = vunpack.c.l.b16 %v426
    %v511 = vunpack.c.l.b16 %v427
    %v512 = vunpack.c.l.b16 %v428
    %v513 = vunpack.c.l.b16 %v429
    %v514 = vunpack.c.l.b16 %v430
    %v515 = vunpack.c.l.b16 %v431
    %v516 = vunpack.c.l.b16 %v432
    %v517 = vunpack.c.l.b16 %v433
    %v518 = vunpack.c.l.b16 %v434
    %v519 = vunpack.c.l.b16 %v435
    %v520 = vunpack.c.l.b16 %v436
    %v521 = vunpack.c.l.b16 %v437
    %v522 = vunpack.c.l.b16 %v438
    %v523 = vunpack.c.l.b16 %v439
    %v524 = vunpack.c.l.b16 %v440
    %v525 = vunpack.c.l.b16 %v441
    %v526 = vunpack.c.l.b16 %v442
    %v527 = vunpack.c.l.b16 %v443
    %v528 = vunpack.c.l.b16 %v444
    %v529 = vunpack.c.l.b16 %v445
    %v530 = vunpack.c.l.b16 %v446
    %v531 = vunpack.c.l.b16 %v447
    %v532 = vunpack.c.l.b16 %v448
    %v533 = vunpack.c.l.b16 %v449
    %v534 = vunpack.c.l.b16 %v450
    %v535 = vunpack.c.l.b16 %v451
    %v536 = vunpack.c.l.b16 %v452
    %v537 = vunpack.c.l.b16 %v453
    %v538 = vunpack.c.l.b16 %v454
    %v539 = vunpack.c.l.b16 %v455
    %v540 = vpack.c.b16 %v501, %v500
    %v541 = vpack.c.b16 %v503, %v502
    %v542 = vpack.c.b16 %v505, %v504
    %v543 = vpack.c.b16 %v507, %v506
    %v544 = vpack.c.b16 %v509, %v508
    %v545 = vpack.c.b16 %v511, %v510
    %v546 = vpack.c.b16 %v513, %v512
    %v547 = vpack.c.b16 %v515, %v514
    %v548 = vpack.c.b16 %v517, %v516
    %v549 = vpack.c.b16 %v519, %v518
    %v550 = vpack.c.b16 %v521, %v520
    %v551 = vpack.c.b16 %v523, %v522
    %v552 = vpack.c.b16 %v525, %v524
    %v553 = vpack.c.b16 %v527, %v526
    %v554 = vpack.c.b16 %v529, %v528
    %v555 = vpack.c.b16 %v531, %v530
    %v556 = vpack.c.b16 %v533, %v532
    %v557 = vpack.c.b16 %v535, %v534
    %v558 = vpack.c.b16 %v537, %v536
    %v559 = vpack.c.b16 %v539, %v538
    %vm560 = vcmask 523264
    %v562 = vsel %vm560, %v540, 0
    %v565 = vsel %vm560, %v541, 0
    %v568 = vsel %vm560, %v542, 0
    %v571 = vsel %vm560, %v543, 0
    %v574 = vsel %vm560, %v544, 0
    %v577 = vsel %vm560, %v545, 0
    %v580 = vsel %vm560, %v546, 0
    %v583 = vsel %vm560, %v547, 0
    %v586 = vsel %vm560, %v548, 0
    %v589 = vsel %vm560, %v549, 0
    %v592 = vsel %vm560, %v550, 0
    %v595 = vsel %vm560, %v551, 0
    %v598 = vsel %vm560, %v552, 0
    %v601 = vsel %vm560, %v553, 0
    %v604 = vsel %vm560, %v554, 0
    %v607 = vsel %vm560, %v555, 0
    %v610 = vsel %vm560, %v556, 0
    %v613 = vsel %vm560, %v557, 0
    %v616 = vsel %vm560, %v558, 0
    %v619 = vsel %vm560, %v559, 0
    %621 = vmatprep.subr.bf16.mxu0 0
    %622 = vmatpush1.bf16.msra.mxu0 0
    %623 = vmatprep.subr.bf16.mxu0 0
    %624 = vmatpush1.bf16.msra.mxu0 0
    %625 = vmatprep.subr.bf16.mxu0 0
    %626 = vmatpush1.bf16.msra.mxu0 0
    %627 = vmatprep.subr.bf16.mxu0 0
    %628 = vmatpush1.bf16.msra.mxu0 0
    %629 = vmatprep.subr.bf16.mxu0 0
    %630 = vmatpush1.bf16.msra.mxu0 %v459
    %631 = vmatprep.subr.bf16.mxu0 0
    %632 = vmatpush1.bf16.msra.mxu0 %v458
    %633 = vmatprep.subr.bf16.mxu0 0
    %634 = vmatpush1.bf16.msra.mxu0 %v457
    %635 = vmatprep.subr.bf16.mxu0 0
    %636 = vmatpush1.bf16.msra.mxu0 %v456
    %637 = vmatprep.subr.bf16.mxu0 0
    %638 = vmatpush2.bf16.msra.mxu0 0
    %639 = vmatprep.subr.bf16.mxu0 0
    %640 = vmatpush2.bf16.msra.mxu0 0
    %641 = vmatprep.subr.bf16.mxu0 0
    %642 = vmatpush2.bf16.msra.mxu0 0
    %643 = vmatprep.subr.bf16.mxu0 0
    %644 = vmatpush2.bf16.msra.mxu0 0
    %645 = vmatprep.subr.bf16.mxu0 0
    %646 = vmatpush2.bf16.msra.mxu0 0
    %647 = vmatprep.subr.bf16.mxu0 0
    %648 = vmatpush2.bf16.msra.mxu0 0
    %649 = vmatprep.subr.bf16.mxu0 0
    %650 = vmatpush2.bf16.msra.mxu0 0
    %651 = vmatprep.subr.bf16.mxu0 0
    %652 = vmatpush2.bf16.msra.mxu0 0
    %653 = vmatprep.mubr.bf16.mxu0 0
    %654 = vmatmul.mubr.bf16.gmra.mxu0 %v562
    %v655 = vpop.f32.mrf.mxu0
    %v656 = vadd.f32 0.0, %v655
    %v657 = vpop.f32.mrf.mxu0
    %v658 = vpop.f32.mrf.mxu0
    %v659 = vadd.f32 0.0, %v658
    %v660 = vpop.f32.mrf.mxu0
    %661 = vmatprep.mubr.bf16.mxu0 0
    %662 = vmatmul.mubr.bf16.gmra.mxu0 %v565
    %v663 = vpop.f32.mrf.mxu0
    %v664 = vadd.f32 0.0, %v663
    %v665 = vpop.f32.mrf.mxu0
    %v666 = vpop.f32.mrf.mxu0
    %v667 = vadd.f32 0.0, %v666
    %v668 = vpop.f32.mrf.mxu0
    %669 = vmatprep.mubr.bf16.mxu0 0
    %670 = vmatmul.mubr.bf16.gmra.mxu0 %v568
    %v671 = vpop.f32.mrf.mxu0
    %v672 = vadd.f32 0.0, %v671
    %v673 = vpop.f32.mrf.mxu0
    %v674 = vpop.f32.mrf.mxu0
    %v675 = vadd.f32 0.0, %v674
    %v676 = vpop.f32.mrf.mxu0
    %677 = vmatprep.mubr.bf16.mxu0 0
    %678 = vmatmul.mubr.bf16.gmra.mxu0 %v571
    %v679 = vpop.f32.mrf.mxu0
    %v680 = vadd.f32 0.0, %v679
    %v681 = vpop.f32.mrf.mxu0
    %v682 = vpop.f32.mrf.mxu0
    %v683 = vadd.f32 0.0, %v682
    %v684 = vpop.f32.mrf.mxu0
    %685 = vmatprep.mubr.bf16.mxu0 0
    %686 = vmatmul.mubr.bf16.gmra.mxu0 %v574
    %v687 = vpop.f32.mrf.mxu0
    %v688 = vadd.f32 0.0, %v687
    %v689 = vpop.f32.mrf.mxu0
    %v690 = vpop.f32.mrf.mxu0
    %v691 = vadd.f32 0.0, %v690
    %v692 = vpop.f32.mrf.mxu0
    %693 = vmatprep.mubr.bf16.mxu0 0
    %694 = vmatmul.mubr.bf16.gmra.mxu0 %v577
    %v695 = vpop.f32.mrf.mxu0
    %v696 = vadd.f32 0.0, %v695
    %v697 = vpop.f32.mrf.mxu0
    %v698 = vpop.f32.mrf.mxu0
    %v699 = vadd.f32 0.0, %v698
    %v700 = vpop.f32.mrf.mxu0
    %701 = vmatprep.mubr.bf16.mxu0 0
    %702 = vmatmul.mubr.bf16.gmra.mxu0 %v580
    %v703 = vpop.f32.mrf.mxu0
    %v704 = vadd.f32 0.0, %v703
    %v705 = vpop.f32.mrf.mxu0
    %v706 = vpop.f32.mrf.mxu0
    %v707 = vadd.f32 0.0, %v706
    %v708 = vpop.f32.mrf.mxu0
    %709 = vmatprep.mubr.bf16.mxu0 0
    %710 = vmatmul.mubr.bf16.gmra.mxu0 %v583
    %v711 = vpop.f32.mrf.mxu0
    %v712 = vadd.f32 0.0, %v711
    %v713 = vpop.f32.mrf.mxu0
    %v714 = vpop.f32.mrf.mxu0
    %v715 = vadd.f32 0.0, %v714
    %v716 = vpop.f32.mrf.mxu0
    %717 = vmatprep.mubr.bf16.mxu0 0
    %718 = vmatmul.mubr.bf16.gmra.mxu0 %v586
    %v719 = vpop.f32.mrf.mxu0
    %v720 = vadd.f32 0.0, %v719
    %v721 = vpop.f32.mrf.mxu0
    %v722 = vpop.f32.mrf.mxu0
    %v723 = vadd.f32 0.0, %v722
    %v724 = vpop.f32.mrf.mxu0
    %725 = vmatprep.mubr.bf16.mxu0 0
    %726 = vmatmul.mubr.bf16.gmra.mxu0 %v589
    %v727 = vpop.f32.mrf.mxu0
    %v728 = vadd.f32 0.0, %v727
    %v729 = vpop.f32.mrf.mxu0
    %v730 = vpop.f32.mrf.mxu0
    %v731 = vadd.f32 0.0, %v730
    %v732 = vpop.f32.mrf.mxu0
    %733 = vmatprep.mubr.bf16.mxu0 0
    %734 = vmatmul.mubr.bf16.gmra.mxu0 %v592
    %v735 = vpop.f32.mrf.mxu0
    %v736 = vadd.f32 0.0, %v735
    %v737 = vpop.f32.mrf.mxu0
    %v738 = vpop.f32.mrf.mxu0
    %v739 = vadd.f32 0.0, %v738
    %v740 = vpop.f32.mrf.mxu0
    %741 = vmatprep.mubr.bf16.mxu0 0
    %742 = vmatmul.mubr.bf16.gmra.mxu0 %v595
    %v743 = vpop.f32.mrf.mxu0
    %v744 = vadd.f32 0.0, %v743
    %v745 = vpop.f32.mrf.mxu0
    %v746 = vpop.f32.mrf.mxu0
    %v747 = vadd.f32 0.0, %v746
    %v748 = vpop.f32.mrf.mxu0
    %749 = vmatprep.mubr.bf16.mxu0 0
    %750 = vmatmul.mubr.bf16.gmra.mxu0 %v598
    %v751 = vpop.f32.mrf.mxu0
    %v752 = vadd.f32 0.0, %v751
    %v753 = vpop.f32.mrf.mxu0
    %v754 = vpop.f32.mrf.mxu0
    %v755 = vadd.f32 0.0, %v754
    %v756 = vpop.f32.mrf.mxu0
    %757 = vmatprep.mubr.bf16.mxu0 0
    %758 = vmatmul.mubr.bf16.gmra.mxu0 %v601
    %v759 = vpop.f32.mrf.mxu0
    %v760 = vadd.f32 0.0, %v759
    %v761 = vpop.f32.mrf.mxu0
    %v762 = vpop.f32.mrf.mxu0
    %v763 = vadd.f32 0.0, %v762
    %v764 = vpop.f32.mrf.mxu0
    %765 = vmatprep.mubr.bf16.mxu0 0
    %766 = vmatmul.mubr.bf16.gmra.mxu0 %v604
    %v767 = vpop.f32.mrf.mxu0
    %v768 = vadd.f32 0.0, %v767
    %v769 = vpop.f32.mrf.mxu0
    %v770 = vpop.f32.mrf.mxu0
    %v771 = vadd.f32 0.0, %v770
    %v772 = vpop.f32.mrf.mxu0
    %773 = vmatprep.mubr.bf16.mxu0 0
    %774 = vmatmul.mubr.bf16.gmra.mxu0 %v607
    %v775 = vpop.f32.mrf.mxu0
    %v776 = vadd.f32 0.0, %v775
    %v777 = vpop.f32.mrf.mxu0
    %v778 = vpop.f32.mrf.mxu0
    %v779 = vadd.f32 0.0, %v778
    %v780 = vpop.f32.mrf.mxu0
    %781 = vmatprep.mubr.bf16.mxu0 0
    %782 = vmatmul.mubr.bf16.gmra.mxu0 %v610
    %v783 = vpop.f32.mrf.mxu0
    %v784 = vadd.f32 0.0, %v783
    %v785 = vpop.f32.mrf.mxu0
    %v786 = vpop.f32.mrf.mxu0
    %v787 = vadd.f32 0.0, %v786
    %v788 = vpop.f32.mrf.mxu0
    %789 = vmatprep.mubr.bf16.mxu0 0
    %790 = vmatmul.mubr.bf16.gmra.mxu0 %v613
    %v791 = vpop.f32.mrf.mxu0
    %v792 = vadd.f32 0.0, %v791
    %v793 = vpop.f32.mrf.mxu0
    %v794 = vpop.f32.mrf.mxu0
    %v795 = vadd.f32 0.0, %v794
    %v796 = vpop.f32.mrf.mxu0
    %797 = vmatprep.mubr.bf16.mxu0 0
    %798 = vmatmul.mubr.bf16.gmra.mxu0 %v616
    %v799 = vpop.f32.mrf.mxu0
    %v800 = vadd.f32 0.0, %v799
    %v801 = vpop.f32.mrf.mxu0
    %v802 = vpop.f32.mrf.mxu0
    %v803 = vadd.f32 0.0, %v802
    %v804 = vpop.f32.mrf.mxu0
    %805 = vmatprep.mubr.bf16.mxu0 0
    %806 = vmatmul.mubr.bf16.gmra.mxu0 %v619
    %v807 = vpop.f32.mrf.mxu0
    %v808 = vadd.f32 0.0, %v807
    %v809 = vpop.f32.mrf.mxu0
    %v810 = vpop.f32.mrf.mxu0
    %v811 = vadd.f32 0.0, %v810
    %v812 = vpop.f32.mrf.mxu0
    %813 = vdwg.mxu0
    %v814 = vld [vmem:[#allocation5 + $0x46] ss:$0 sm:$0xff]
    %v815 = vld [vmem:[#allocation7 + $0x140] sm:$0xf]
    %v816 = vld [vmem:[#allocation7 + $0x144] sm:$0xf]
    %v817 = vpack.c.bf16 %v659, %v656
    %v818 = vpack.c.bf16 %v667, %v664
    %v821 = vunpack.c.l.b16 %v815
    %v822 = vunpack.c.l.b16 %v816
    %v823 = vpack.c.b16 %v822, %v821
    %vm825 = vcmask 130048
    %v827 = vsel %vm825, %v817, 0
    %v830 = vsel %vm825, %v818, 0
    %832 = vmatprep.subr.bf16.mxu0 0
    %833 = vmatpush1.bf16.msra.mxu0 0
    %834 = vmatprep.subr.bf16.mxu0 0
    %835 = vmatpush1.bf16.msra.mxu0 0
    %836 = vmatprep.subr.bf16.mxu0 0
    %837 = vmatpush1.bf16.msra.mxu0 0
    %838 = vmatprep.subr.bf16.mxu0 0
    %839 = vmatpush1.bf16.msra.mxu0 0
    %840 = vmatprep.subr.bf16.mxu0 0
    %841 = vmatpush1.bf16.msra.mxu0 0
    %842 = vmatprep.subr.bf16.mxu0 0
    %843 = vmatpush1.bf16.msra.mxu0 0
    %844 = vmatprep.subr.bf16.mxu0 0
    %845 = vmatpush1.bf16.msra.mxu0 0
    %846 = vmatprep.subr.bf16.mxu0 0
    %847 = vmatpush1.bf16.msra.mxu0 %v823
    %848 = vmatprep.subr.bf16.mxu0 0
    %849 = vmatpush2.bf16.msra.mxu0 0
    %850 = vmatprep.subr.bf16.mxu0 0
    %851 = vmatpush2.bf16.msra.mxu0 0
    %852 = vmatprep.subr.bf16.mxu0 0
    %853 = vmatpush2.bf16.msra.mxu0 0
    %854 = vmatprep.subr.bf16.mxu0 0
    %855 = vmatpush2.bf16.msra.mxu0 0
    %856 = vmatprep.subr.bf16.mxu0 0
    %857 = vmatpush2.bf16.msra.mxu0 0
    %858 = vmatprep.subr.bf16.mxu0 0
    %859 = vmatpush2.bf16.msra.mxu0 0
    %860 = vmatprep.subr.bf16.mxu0 0
    %861 = vmatpush2.bf16.msra.mxu0 0
    %862 = vmatprep.subr.bf16.mxu0 0
    %863 = vmatpush2.bf16.msra.mxu0 0
    %864 = vmatprep.mubr.bf16.mxu0 0
    %865 = vmatmul.mubr.bf16.gmra.mxu0 %v827
    %v866 = vpop.f32.mrf.mxu0
    %v867 = vadd.f32 0.0, %v866
    %v868 = vpop.f32.mrf.mxu0
    %v869 = vpop.f32.mrf.mxu0
    %v870 = vadd.f32 0.0, %v869
    %v871 = vpop.f32.mrf.mxu0
    %872 = vmatprep.mubr.bf16.mxu0 0
    %873 = vmatmul.mubr.bf16.gmra.mxu0 %v830
    %v874 = vpop.f32.mrf.mxu0
    %v875 = vadd.f32 0.0, %v874
    %v876 = vpop.f32.mrf.mxu0
    %v877 = vpop.f32.mrf.mxu0
    %v878 = vadd.f32 0.0, %v877
    %v879 = vpop.f32.mrf.mxu0
    %880 = vdwg.mxu0
    %v881 = vadd.f32 %v814, %v867
    %v882 = vadd.f32 %v814, %v870
    %v883 = vadd.f32 %v814, %v875
    %v884 = vadd.f32 %v814, %v878
    %v885 = vld [vmem:[#allocation7 + $0x148] sm:$0xf]
    %v886 = vld [vmem:[#allocation7 + $0x14c] sm:$0xf]
    %v887 = vpack.c.bf16 %v675, %v672
    %v888 = vpack.c.bf16 %v683, %v680
    %v891 = vunpack.c.l.b16 %v885
    %v892 = vunpack.c.l.b16 %v886
    %v893 = vpack.c.b16 %v892, %v891
    %v896 = vsel %vm825, %v887, 0
    %v899 = vsel %vm825, %v888, 0
    %901 = vmatprep.subr.bf16.mxu0 0
    %902 = vmatpush1.bf16.msra.mxu0 0
    %903 = vmatprep.subr.bf16.mxu0 0
    %904 = vmatpush1.bf16.msra.mxu0 0
    %905 = vmatprep.subr.bf16.mxu0 0
    %906 = vmatpush1.bf16.msra.mxu0 0
    %907 = vmatprep.subr.bf16.mxu0 0
    %908 = vmatpush1.bf16.msra.mxu0 0
    %909 = vmatprep.subr.bf16.mxu0 0
    %910 = vmatpush1.bf16.msra.mxu0 0
    %911 = vmatprep.subr.bf16.mxu0 0
    %912 = vmatpush1.bf16.msra.mxu0 0
    %913 = vmatprep.subr.bf16.mxu0 0
    %914 = vmatpush1.bf16.msra.mxu0 0
    %915 = vmatprep.subr.bf16.mxu0 0
    %916 = vmatpush1.bf16.msra.mxu0 %v893
    %917 = vmatprep.subr.bf16.mxu0 0
    %918 = vmatpush2.bf16.msra.mxu0 0
    %919 = vmatprep.subr.bf16.mxu0 0
    %920 = vmatpush2.bf16.msra.mxu0 0
    %921 = vmatprep.subr.bf16.mxu0 0
    %922 = vmatpush2.bf16.msra.mxu0 0
    %923 = vmatprep.subr.bf16.mxu0 0
    %924 = vmatpush2.bf16.msra.mxu0 0
    %925 = vmatprep.subr.bf16.mxu0 0
    %926 = vmatpush2.bf16.msra.mxu0 0
    %927 = vmatprep.subr.bf16.mxu0 0
    %928 = vmatpush2.bf16.msra.mxu0 0
    %929 = vmatprep.subr.bf16.mxu0 0
    %930 = vmatpush2.bf16.msra.mxu0 0
    %931 = vmatprep.subr.bf16.mxu0 0
    %932 = vmatpush2.bf16.msra.mxu0 0
    %933 = vmatprep.mubr.bf16.mxu0 0
    %934 = vmatmul.mubr.bf16.gmra.mxu0 %v896
    %v935 = vpop.f32.mrf.mxu0
    %v936 = vadd.f32 0.0, %v935
    %v937 = vpop.f32.mrf.mxu0
    %v938 = vpop.f32.mrf.mxu0
    %v939 = vadd.f32 0.0, %v938
    %v940 = vpop.f32.mrf.mxu0
    %941 = vmatprep.mubr.bf16.mxu0 0
    %942 = vmatmul.mubr.bf16.gmra.mxu0 %v899
    %v943 = vpop.f32.mrf.mxu0
    %v944 = vadd.f32 0.0, %v943
    %v945 = vpop.f32.mrf.mxu0
    %v946 = vpop.f32.mrf.mxu0
    %v947 = vadd.f32 0.0, %v946
    %v948 = vpop.f32.mrf.mxu0
    %949 = vdwg.mxu0
    %v950 = vadd.f32 %v881, %v936
    %v951 = vadd.f32 %v882, %v939
    %v952 = vadd.f32 %v883, %v944
    %v953 = vadd.f32 %v884, %v947
    %v954 = vld [vmem:[#allocation7 + $0x150] sm:$0xf]
    %v955 = vld [vmem:[#allocation7 + $0x154] sm:$0xf]
    %v956 = vpack.c.bf16 %v691, %v688
    %v957 = vpack.c.bf16 %v699, %v696
    %v960 = vunpack.c.l.b16 %v954
    %v961 = vunpack.c.l.b16 %v955
    %v962 = vpack.c.b16 %v961, %v960
    %v965 = vsel %vm825, %v956, 0
    %v968 = vsel %vm825, %v957, 0
    %970 = vmatprep.subr.bf16.mxu0 0
    %971 = vmatpush1.bf16.msra.mxu0 0
    %972 = vmatprep.subr.bf16.mxu0 0
    %973 = vmatpush1.bf16.msra.mxu0 0
    %974 = vmatprep.subr.bf16.mxu0 0
    %975 = vmatpush1.bf16.msra.mxu0 0
    %976 = vmatprep.subr.bf16.mxu0 0
    %977 = vmatpush1.bf16.msra.mxu0 0
    %978 = vmatprep.subr.bf16.mxu0 0
    %979 = vmatpush1.bf16.msra.mxu0 0
    %980 = vmatprep.subr.bf16.mxu0 0
    %981 = vmatpush1.bf16.msra.mxu0 0
    %982 = vmatprep.subr.bf16.mxu0 0
    %983 = vmatpush1.bf16.msra.mxu0 0
    %984 = vmatprep.subr.bf16.mxu0 0
    %985 = vmatpush1.bf16.msra.mxu0 %v962
    %986 = vmatprep.subr.bf16.mxu0 0
    %987 = vmatpush2.bf16.msra.mxu0 0
    %988 = vmatprep.subr.bf16.mxu0 0
    %989 = vmatpush2.bf16.msra.mxu0 0
    %990 = vmatprep.subr.bf16.mxu0 0
    %991 = vmatpush2.bf16.msra.mxu0 0
    %992 = vmatprep.subr.bf16.mxu0 0
    %993 = vmatpush2.bf16.msra.mxu0 0
    %994 = vmatprep.subr.bf16.mxu0 0
    %995 = vmatpush2.bf16.msra.mxu0 0
    %996 = vmatprep.subr.bf16.mxu0 0
    %997 = vmatpush2.bf16.msra.mxu0 0
    %998 = vmatprep.subr.bf16.mxu0 0
    %999 = vmatpush2.bf16.msra.mxu0 0
    %1000 = vmatprep.subr.bf16.mxu0 0
    %1001 = vmatpush2.bf16.msra.mxu0 0
    %1002 = vmatprep.mubr.bf16.mxu0 0
    %1003 = vmatmul.mubr.bf16.gmra.mxu0 %v965
    %v1004 = vpop.f32.mrf.mxu0
    %v1005 = vadd.f32 0.0, %v1004
    %v1006 = vpop.f32.mrf.mxu0
    %v1007 = vpop.f32.mrf.mxu0
    %v1008 = vadd.f32 0.0, %v1007
    %v1009 = vpop.f32.mrf.mxu0
    %1010 = vmatprep.mubr.bf16.mxu0 0
    %1011 = vmatmul.mubr.bf16.gmra.mxu0 %v968
    %v1012 = vpop.f32.mrf.mxu0
    %v1013 = vadd.f32 0.0, %v1012
    %v1014 = vpop.f32.mrf.mxu0
    %v1015 = vpop.f32.mrf.mxu0
    %v1016 = vadd.f32 0.0, %v1015
    %v1017 = vpop.f32.mrf.mxu0
    %1018 = vdwg.mxu0
    %v1019 = vadd.f32 %v950, %v1005
    %v1020 = vadd.f32 %v951, %v1008
    %v1021 = vadd.f32 %v952, %v1013
    %v1022 = vadd.f32 %v953, %v1016
    %v1023 = vld [vmem:[#allocation7 + $0x158] sm:$0xf]
    %v1024 = vld [vmem:[#allocation7 + $0x15c] sm:$0xf]
    %v1025 = vpack.c.bf16 %v707, %v704
    %v1026 = vpack.c.bf16 %v715, %v712
    %v1029 = vunpack.c.l.b16 %v1023
    %v1030 = vunpack.c.l.b16 %v1024
    %v1031 = vpack.c.b16 %v1030, %v1029
    %v1034 = vsel %vm825, %v1025, 0
    %v1037 = vsel %vm825, %v1026, 0
    %1039 = vmatprep.subr.bf16.mxu0 0
    %1040 = vmatpush1.bf16.msra.mxu0 0
    %1041 = vmatprep.subr.bf16.mxu0 0
    %1042 = vmatpush1.bf16.msra.mxu0 0
    %1043 = vmatprep.subr.bf16.mxu0 0
    %1044 = vmatpush1.bf16.msra.mxu0 0
    %1045 = vmatprep.subr.bf16.mxu0 0
    %1046 = vmatpush1.bf16.msra.mxu0 0
    %1047 = vmatprep.subr.bf16.mxu0 0
    %1048 = vmatpush1.bf16.msra.mxu0 0
    %1049 = vmatprep.subr.bf16.mxu0 0
    %1050 = vmatpush1.bf16.msra.mxu0 0
    %1051 = vmatprep.subr.bf16.mxu0 0
    %1052 = vmatpush1.bf16.msra.mxu0 0
    %1053 = vmatprep.subr.bf16.mxu0 0
    %1054 = vmatpush1.bf16.msra.mxu0 %v1031
    %1055 = vmatprep.subr.bf16.mxu0 0
    %1056 = vmatpush2.bf16.msra.mxu0 0
    %1057 = vmatprep.subr.bf16.mxu0 0
    %1058 = vmatpush2.bf16.msra.mxu0 0
    %1059 = vmatprep.subr.bf16.mxu0 0
    %1060 = vmatpush2.bf16.msra.mxu0 0
    %1061 = vmatprep.subr.bf16.mxu0 0
    %1062 = vmatpush2.bf16.msra.mxu0 0
    %1063 = vmatprep.subr.bf16.mxu0 0
    %1064 = vmatpush2.bf16.msra.mxu0 0
    %1065 = vmatprep.subr.bf16.mxu0 0
    %1066 = vmatpush2.bf16.msra.mxu0 0
    %1067 = vmatprep.subr.bf16.mxu0 0
    %1068 = vmatpush2.bf16.msra.mxu0 0
    %1069 = vmatprep.subr.bf16.mxu0 0
    %1070 = vmatpush2.bf16.msra.mxu0 0
    %1071 = vmatprep.mubr.bf16.mxu0 0
    %1072 = vmatmul.mubr.bf16.gmra.mxu0 %v1034
    %v1073 = vpop.f32.mrf.mxu0
    %v1074 = vadd.f32 0.0, %v1073
    %v1075 = vpop.f32.mrf.mxu0
    %v1076 = vpop.f32.mrf.mxu0
    %v1077 = vadd.f32 0.0, %v1076
    %v1078 = vpop.f32.mrf.mxu0
    %1079 = vmatprep.mubr.bf16.mxu0 0
    %1080 = vmatmul.mubr.bf16.gmra.mxu0 %v1037
    %v1081 = vpop.f32.mrf.mxu0
    %v1082 = vadd.f32 0.0, %v1081
    %v1083 = vpop.f32.mrf.mxu0
    %v1084 = vpop.f32.mrf.mxu0
    %v1085 = vadd.f32 0.0, %v1084
    %v1086 = vpop.f32.mrf.mxu0
    %1087 = vdwg.mxu0
    %v1088 = vadd.f32 %v1019, %v1074
    %v1089 = vadd.f32 %v1020, %v1077
    %v1090 = vadd.f32 %v1021, %v1082
    %v1091 = vadd.f32 %v1022, %v1085
    %v1092 = vld [vmem:[#allocation7 + $0x160] sm:$0xf]
    %v1093 = vld [vmem:[#allocation7 + $0x164] sm:$0xf]
    %v1094 = vpack.c.bf16 %v723, %v720
    %v1095 = vpack.c.bf16 %v731, %v728
    %v1098 = vunpack.c.l.b16 %v1092
    %v1099 = vunpack.c.l.b16 %v1093
    %v1100 = vpack.c.b16 %v1099, %v1098
    %v1103 = vsel %vm825, %v1094, 0
    %v1106 = vsel %vm825, %v1095, 0
    %1108 = vmatprep.subr.bf16.mxu0 0
    %1109 = vmatpush1.bf16.msra.mxu0 0
    %1110 = vmatprep.subr.bf16.mxu0 0
    %1111 = vmatpush1.bf16.msra.mxu0 0
    %1112 = vmatprep.subr.bf16.mxu0 0
    %1113 = vmatpush1.bf16.msra.mxu0 0
    %1114 = vmatprep.subr.bf16.mxu0 0
    %1115 = vmatpush1.bf16.msra.mxu0 0
    %1116 = vmatprep.subr.bf16.mxu0 0
    %1117 = vmatpush1.bf16.msra.mxu0 0
    %1118 = vmatprep.subr.bf16.mxu0 0
    %1119 = vmatpush1.bf16.msra.mxu0 0
    %1120 = vmatprep.subr.bf16.mxu0 0
    %1121 = vmatpush1.bf16.msra.mxu0 0
    %1122 = vmatprep.subr.bf16.mxu0 0
    %1123 = vmatpush1.bf16.msra.mxu0 %v1100
    %1124 = vmatprep.subr.bf16.mxu0 0
    %1125 = vmatpush2.bf16.msra.mxu0 0
    %1126 = vmatprep.subr.bf16.mxu0 0
    %1127 = vmatpush2.bf16.msra.mxu0 0
    %1128 = vmatprep.subr.bf16.mxu0 0
    %1129 = vmatpush2.bf16.msra.mxu0 0
    %1130 = vmatprep.subr.bf16.mxu0 0
    %1131 = vmatpush2.bf16.msra.mxu0 0
    %1132 = vmatprep.subr.bf16.mxu0 0
    %1133 = vmatpush2.bf16.msra.mxu0 0
    %1134 = vmatprep.subr.bf16.mxu0 0
    %1135 = vmatpush2.bf16.msra.mxu0 0
    %1136 = vmatprep.subr.bf16.mxu0 0
    %1137 = vmatpush2.bf16.msra.mxu0 0
    %1138 = vmatprep.subr.bf16.mxu0 0
    %1139 = vmatpush2.bf16.msra.mxu0 0
    %1140 = vmatprep.mubr.bf16.mxu0 0
    %1141 = vmatmul.mubr.bf16.gmra.mxu0 %v1103
    %v1142 = vpop.f32.mrf.mxu0
    %v1143 = vadd.f32 0.0, %v1142
    %v1144 = vpop.f32.mrf.mxu0
    %v1145 = vpop.f32.mrf.mxu0
    %v1146 = vadd.f32 0.0, %v1145
    %v1147 = vpop.f32.mrf.mxu0
    %1148 = vmatprep.mubr.bf16.mxu0 0
    %1149 = vmatmul.mubr.bf16.gmra.mxu0 %v1106
    %v1150 = vpop.f32.mrf.mxu0
    %v1151 = vadd.f32 0.0, %v1150
    %v1152 = vpop.f32.mrf.mxu0
    %v1153 = vpop.f32.mrf.mxu0
    %v1154 = vadd.f32 0.0, %v1153
    %v1155 = vpop.f32.mrf.mxu0
    %1156 = vdwg.mxu0
    %v1157 = vadd.f32 %v1088, %v1143
    %v1158 = vadd.f32 %v1089, %v1146
    %v1159 = vadd.f32 %v1090, %v1151
    %v1160 = vadd.f32 %v1091, %v1154
    %v1161 = vld [vmem:[#allocation7 + $0x168] sm:$0xf]
    %v1162 = vld [vmem:[#allocation7 + $0x16c] sm:$0xf]
    %v1163 = vpack.c.bf16 %v739, %v736
    %v1164 = vpack.c.bf16 %v747, %v744
    %v1167 = vunpack.c.l.b16 %v1161
    %v1168 = vunpack.c.l.b16 %v1162
    %v1169 = vpack.c.b16 %v1168, %v1167
    %v1172 = vsel %vm825, %v1163, 0
    %v1175 = vsel %vm825, %v1164, 0
    %1177 = vmatprep.subr.bf16.mxu0 0
    %1178 = vmatpush1.bf16.msra.mxu0 0
    %1179 = vmatprep.subr.bf16.mxu0 0
    %1180 = vmatpush1.bf16.msra.mxu0 0
    %1181 = vmatprep.subr.bf16.mxu0 0
    %1182 = vmatpush1.bf16.msra.mxu0 0
    %1183 = vmatprep.subr.bf16.mxu0 0
    %1184 = vmatpush1.bf16.msra.mxu0 0
    %1185 = vmatprep.subr.bf16.mxu0 0
    %1186 = vmatpush1.bf16.msra.mxu0 0
    %1187 = vmatprep.subr.bf16.mxu0 0
    %1188 = vmatpush1.bf16.msra.mxu0 0
    %1189 = vmatprep.subr.bf16.mxu0 0
    %1190 = vmatpush1.bf16.msra.mxu0 0
    %1191 = vmatprep.subr.bf16.mxu0 0
    %1192 = vmatpush1.bf16.msra.mxu0 %v1169
    %1193 = vmatprep.subr.bf16.mxu0 0
    %1194 = vmatpush2.bf16.msra.mxu0 0
    %1195 = vmatprep.subr.bf16.mxu0 0
    %1196 = vmatpush2.bf16.msra.mxu0 0
    %1197 = vmatprep.subr.bf16.mxu0 0
    %1198 = vmatpush2.bf16.msra.mxu0 0
    %1199 = vmatprep.subr.bf16.mxu0 0
    %1200 = vmatpush2.bf16.msra.mxu0 0
    %1201 = vmatprep.subr.bf16.mxu0 0
    %1202 = vmatpush2.bf16.msra.mxu0 0
    %1203 = vmatprep.subr.bf16.mxu0 0
    %1204 = vmatpush2.bf16.msra.mxu0 0
    %1205 = vmatprep.subr.bf16.mxu0 0
    %1206 = vmatpush2.bf16.msra.mxu0 0
    %1207 = vmatprep.subr.bf16.mxu0 0
    %1208 = vmatpush2.bf16.msra.mxu0 0
    %1209 = vmatprep.mubr.bf16.mxu0 0
    %1210 = vmatmul.mubr.bf16.gmra.mxu0 %v1172
    %v1211 = vpop.f32.mrf.mxu0
    %v1212 = vadd.f32 0.0, %v1211
    %v1213 = vpop.f32.mrf.mxu0
    %v1214 = vpop.f32.mrf.mxu0
    %v1215 = vadd.f32 0.0, %v1214
    %v1216 = vpop.f32.mrf.mxu0
    %1217 = vmatprep.mubr.bf16.mxu0 0
    %1218 = vmatmul.mubr.bf16.gmra.mxu0 %v1175
    %v1219 = vpop.f32.mrf.mxu0
    %v1220 = vadd.f32 0.0, %v1219
    %v1221 = vpop.f32.mrf.mxu0
    %v1222 = vpop.f32.mrf.mxu0
    %v1223 = vadd.f32 0.0, %v1222
    %v1224 = vpop.f32.mrf.mxu0
    %1225 = vdwg.mxu0
    %v1226 = vadd.f32 %v1157, %v1212
    %v1227 = vadd.f32 %v1158, %v1215
    %v1228 = vadd.f32 %v1159, %v1220
    %v1229 = vadd.f32 %v1160, %v1223
    %v1230 = vld [vmem:[#allocation7 + $0x170] sm:$0xf]
    %v1231 = vld [vmem:[#allocation7 + $0x174] sm:$0xf]
    %v1232 = vpack.c.bf16 %v755, %v752
    %v1233 = vpack.c.bf16 %v763, %v760
    %v1236 = vunpack.c.l.b16 %v1230
    %v1237 = vunpack.c.l.b16 %v1231
    %v1238 = vpack.c.b16 %v1237, %v1236
    %v1241 = vsel %vm825, %v1232, 0
    %v1244 = vsel %vm825, %v1233, 0
    %1246 = vmatprep.subr.bf16.mxu0 0
    %1247 = vmatpush1.bf16.msra.mxu0 0
    %1248 = vmatprep.subr.bf16.mxu0 0
    %1249 = vmatpush1.bf16.msra.mxu0 0
    %1250 = vmatprep.subr.bf16.mxu0 0
    %1251 = vmatpush1.bf16.msra.mxu0 0
    %1252 = vmatprep.subr.bf16.mxu0 0
    %1253 = vmatpush1.bf16.msra.mxu0 0
    %1254 = vmatprep.subr.bf16.mxu0 0
    %1255 = vmatpush1.bf16.msra.mxu0 0
    %1256 = vmatprep.subr.bf16.mxu0 0
    %1257 = vmatpush1.bf16.msra.mxu0 0
    %1258 = vmatprep.subr.bf16.mxu0 0
    %1259 = vmatpush1.bf16.msra.mxu0 0
    %1260 = vmatprep.subr.bf16.mxu0 0
    %1261 = vmatpush1.bf16.msra.mxu0 %v1238
    %1262 = vmatprep.subr.bf16.mxu0 0
    %1263 = vmatpush2.bf16.msra.mxu0 0
    %1264 = vmatprep.subr.bf16.mxu0 0
    %1265 = vmatpush2.bf16.msra.mxu0 0
    %1266 = vmatprep.subr.bf16.mxu0 0
    %1267 = vmatpush2.bf16.msra.mxu0 0
    %1268 = vmatprep.subr.bf16.mxu0 0
    %1269 = vmatpush2.bf16.msra.mxu0 0
    %1270 = vmatprep.subr.bf16.mxu0 0
    %1271 = vmatpush2.bf16.msra.mxu0 0
    %1272 = vmatprep.subr.bf16.mxu0 0
    %1273 = vmatpush2.bf16.msra.mxu0 0
    %1274 = vmatprep.subr.bf16.mxu0 0
    %1275 = vmatpush2.bf16.msra.mxu0 0
    %1276 = vmatprep.subr.bf16.mxu0 0
    %1277 = vmatpush2.bf16.msra.mxu0 0
    %1278 = vmatprep.mubr.bf16.mxu0 0
    %1279 = vmatmul.mubr.bf16.gmra.mxu0 %v1241
    %v1280 = vpop.f32.mrf.mxu0
    %v1281 = vadd.f32 0.0, %v1280
    %v1282 = vpop.f32.mrf.mxu0
    %v1283 = vpop.f32.mrf.mxu0
    %v1284 = vadd.f32 0.0, %v1283
    %v1285 = vpop.f32.mrf.mxu0
    %1286 = vmatprep.mubr.bf16.mxu0 0
    %1287 = vmatmul.mubr.bf16.gmra.mxu0 %v1244
    %v1288 = vpop.f32.mrf.mxu0
    %v1289 = vadd.f32 0.0, %v1288
    %v1290 = vpop.f32.mrf.mxu0
    %v1291 = vpop.f32.mrf.mxu0
    %v1292 = vadd.f32 0.0, %v1291
    %v1293 = vpop.f32.mrf.mxu0
    %1294 = vdwg.mxu0
    %v1295 = vadd.f32 %v1226, %v1281
    %v1296 = vadd.f32 %v1227, %v1284
    %v1297 = vadd.f32 %v1228, %v1289
    %v1298 = vadd.f32 %v1229, %v1292
    %v1299 = vld [vmem:[#allocation7 + $0x178] sm:$0xf]
    %v1300 = vld [vmem:[#allocation7 + $0x17c] sm:$0xf]
    %v1301 = vpack.c.bf16 %v771, %v768
    %v1302 = vpack.c.bf16 %v779, %v776
    %v1305 = vunpack.c.l.b16 %v1299
    %v1306 = vunpack.c.l.b16 %v1300
    %v1307 = vpack.c.b16 %v1306, %v1305
    %v1310 = vsel %vm825, %v1301, 0
    %v1313 = vsel %vm825, %v1302, 0
    %1315 = vmatprep.subr.bf16.mxu0 0
    %1316 = vmatpush1.bf16.msra.mxu0 0
    %1317 = vmatprep.subr.bf16.mxu0 0
    %1318 = vmatpush1.bf16.msra.mxu0 0
    %1319 = vmatprep.subr.bf16.mxu0 0
    %1320 = vmatpush1.bf16.msra.mxu0 0
    %1321 = vmatprep.subr.bf16.mxu0 0
    %1322 = vmatpush1.bf16.msra.mxu0 0
    %1323 = vmatprep.subr.bf16.mxu0 0
    %1324 = vmatpush1.bf16.msra.mxu0 0
    %1325 = vmatprep.subr.bf16.mxu0 0
    %1326 = vmatpush1.bf16.msra.mxu0 0
    %1327 = vmatprep.subr.bf16.mxu0 0
    %1328 = vmatpush1.bf16.msra.mxu0 0
    %1329 = vmatprep.subr.bf16.mxu0 0
    %1330 = vmatpush1.bf16.msra.mxu0 %v1307
    %1331 = vmatprep.subr.bf16.mxu0 0
    %1332 = vmatpush2.bf16.msra.mxu0 0
    %1333 = vmatprep.subr.bf16.mxu0 0
    %1334 = vmatpush2.bf16.msra.mxu0 0
    %1335 = vmatprep.subr.bf16.mxu0 0
    %1336 = vmatpush2.bf16.msra.mxu0 0
    %1337 = vmatprep.subr.bf16.mxu0 0
    %1338 = vmatpush2.bf16.msra.mxu0 0
    %1339 = vmatprep.subr.bf16.mxu0 0
    %1340 = vmatpush2.bf16.msra.mxu0 0
    %1341 = vmatprep.subr.bf16.mxu0 0
    %1342 = vmatpush2.bf16.msra.mxu0 0
    %1343 = vmatprep.subr.bf16.mxu0 0
    %1344 = vmatpush2.bf16.msra.mxu0 0
    %1345 = vmatprep.subr.bf16.mxu0 0
    %1346 = vmatpush2.bf16.msra.mxu0 0
    %1347 = vmatprep.mubr.bf16.mxu0 0
    %1348 = vmatmul.mubr.bf16.gmra.mxu0 %v1310
    %v1349 = vpop.f32.mrf.mxu0
    %v1350 = vadd.f32 0.0, %v1349
    %v1351 = vpop.f32.mrf.mxu0
    %v1352 = vpop.f32.mrf.mxu0
    %v1353 = vadd.f32 0.0, %v1352
    %v1354 = vpop.f32.mrf.mxu0
    %1355 = vmatprep.mubr.bf16.mxu0 0
    %1356 = vmatmul.mubr.bf16.gmra.mxu0 %v1313
    %v1357 = vpop.f32.mrf.mxu0
    %v1358 = vadd.f32 0.0, %v1357
    %v1359 = vpop.f32.mrf.mxu0
    %v1360 = vpop.f32.mrf.mxu0
    %v1361 = vadd.f32 0.0, %v1360
    %v1362 = vpop.f32.mrf.mxu0
    %1363 = vdwg.mxu0
    %v1364 = vadd.f32 %v1295, %v1350
    %v1365 = vadd.f32 %v1296, %v1353
    %v1366 = vadd.f32 %v1297, %v1358
    %v1367 = vadd.f32 %v1298, %v1361
    %v1368 = vld [vmem:[#allocation7 + $0x180] sm:$0xf]
    %v1369 = vld [vmem:[#allocation7 + $0x184] sm:$0xf]
    %v1370 = vpack.c.bf16 %v787, %v784
    %v1371 = vpack.c.bf16 %v795, %v792
    %v1374 = vunpack.c.l.b16 %v1368
    %v1375 = vunpack.c.l.b16 %v1369
    %v1376 = vpack.c.b16 %v1375, %v1374
    %v1379 = vsel %vm825, %v1370, 0
    %v1382 = vsel %vm825, %v1371, 0
    %1384 = vmatprep.subr.bf16.mxu0 0
    %1385 = vmatpush1.bf16.msra.mxu0 0
    %1386 = vmatprep.subr.bf16.mxu0 0
    %1387 = vmatpush1.bf16.msra.mxu0 0
    %1388 = vmatprep.subr.bf16.mxu0 0
    %1389 = vmatpush1.bf16.msra.mxu0 0
    %1390 = vmatprep.subr.bf16.mxu0 0
    %1391 = vmatpush1.bf16.msra.mxu0 0
    %1392 = vmatprep.subr.bf16.mxu0 0
    %1393 = vmatpush1.bf16.msra.mxu0 0
    %1394 = vmatprep.subr.bf16.mxu0 0
    %1395 = vmatpush1.bf16.msra.mxu0 0
    %1396 = vmatprep.subr.bf16.mxu0 0
    %1397 = vmatpush1.bf16.msra.mxu0 0
    %1398 = vmatprep.subr.bf16.mxu0 0
    %1399 = vmatpush1.bf16.msra.mxu0 %v1376
    %1400 = vmatprep.subr.bf16.mxu0 0
    %1401 = vmatpush2.bf16.msra.mxu0 0
    %1402 = vmatprep.subr.bf16.mxu0 0
    %1403 = vmatpush2.bf16.msra.mxu0 0
    %1404 = vmatprep.subr.bf16.mxu0 0
    %1405 = vmatpush2.bf16.msra.mxu0 0
    %1406 = vmatprep.subr.bf16.mxu0 0
    %1407 = vmatpush2.bf16.msra.mxu0 0
    %1408 = vmatprep.subr.bf16.mxu0 0
    %1409 = vmatpush2.bf16.msra.mxu0 0
    %1410 = vmatprep.subr.bf16.mxu0 0
    %1411 = vmatpush2.bf16.msra.mxu0 0
    %1412 = vmatprep.subr.bf16.mxu0 0
    %1413 = vmatpush2.bf16.msra.mxu0 0
    %1414 = vmatprep.subr.bf16.mxu0 0
    %1415 = vmatpush2.bf16.msra.mxu0 0
    %1416 = vmatprep.mubr.bf16.mxu0 0
    %1417 = vmatmul.mubr.bf16.gmra.mxu0 %v1379
    %v1418 = vpop.f32.mrf.mxu0
    %v1419 = vadd.f32 0.0, %v1418
    %v1420 = vpop.f32.mrf.mxu0
    %v1421 = vpop.f32.mrf.mxu0
    %v1422 = vadd.f32 0.0, %v1421
    %v1423 = vpop.f32.mrf.mxu0
    %1424 = vmatprep.mubr.bf16.mxu0 0
    %1425 = vmatmul.mubr.bf16.gmra.mxu0 %v1382
    %v1426 = vpop.f32.mrf.mxu0
    %v1427 = vadd.f32 0.0, %v1426
    %v1428 = vpop.f32.mrf.mxu0
    %v1429 = vpop.f32.mrf.mxu0
    %v1430 = vadd.f32 0.0, %v1429
    %v1431 = vpop.f32.mrf.mxu0
    %1432 = vdwg.mxu0
    %v1433 = vadd.f32 %v1364, %v1419
    %v1434 = vadd.f32 %v1365, %v1422
    %v1435 = vadd.f32 %v1366, %v1427
    %v1436 = vadd.f32 %v1367, %v1430
    %v1437 = vld [vmem:[#allocation7 + $0x188] sm:$0xf]
    %v1438 = vld [vmem:[#allocation7 + $0x18c] sm:$0xf]
    %v1439 = vpack.c.bf16 %v803, %v800
    %v1440 = vpack.c.bf16 %v811, %v808
    %v1443 = vunpack.c.l.b16 %v1437
    %v1444 = vunpack.c.l.b16 %v1438
    %v1445 = vpack.c.b16 %v1444, %v1443
    %v1448 = vsel %vm825, %v1439, 0
    %v1451 = vsel %vm825, %v1440, 0
    %1453 = vmatprep.subr.bf16.mxu0 0
    %1454 = vmatpush1.bf16.msra.mxu0 0
    %1455 = vmatprep.subr.bf16.mxu0 0
    %1456 = vmatpush1.bf16.msra.mxu0 0
    %1457 = vmatprep.subr.bf16.mxu0 0
    %1458 = vmatpush1.bf16.msra.mxu0 0
    %1459 = vmatprep.subr.bf16.mxu0 0
    %1460 = vmatpush1.bf16.msra.mxu0 0
    %1461 = vmatprep.subr.bf16.mxu0 0
    %1462 = vmatpush1.bf16.msra.mxu0 0
    %1463 = vmatprep.subr.bf16.mxu0 0
    %1464 = vmatpush1.bf16.msra.mxu0 0
    %1465 = vmatprep.subr.bf16.mxu0 0
    %1466 = vmatpush1.bf16.msra.mxu0 0
    %1467 = vmatprep.subr.bf16.mxu0 0
    %1468 = vmatpush1.bf16.msra.mxu0 %v1445
    %1469 = vmatprep.subr.bf16.mxu0 0
    %1470 = vmatpush2.bf16.msra.mxu0 0
    %1471 = vmatprep.subr.bf16.mxu0 0
    %1472 = vmatpush2.bf16.msra.mxu0 0
    %1473 = vmatprep.subr.bf16.mxu0 0
    %1474 = vmatpush2.bf16.msra.mxu0 0
    %1475 = vmatprep.subr.bf16.mxu0 0
    %1476 = vmatpush2.bf16.msra.mxu0 0
    %1477 = vmatprep.subr.bf16.mxu0 0
    %1478 = vmatpush2.bf16.msra.mxu0 0
    %1479 = vmatprep.subr.bf16.mxu0 0
    %1480 = vmatpush2.bf16.msra.mxu0 0
    %1481 = vmatprep.subr.bf16.mxu0 0
    %1482 = vmatpush2.bf16.msra.mxu0 0
    %1483 = vmatprep.subr.bf16.mxu0 0
    %1484 = vmatpush2.bf16.msra.mxu0 0
    %1485 = vmatprep.mubr.bf16.mxu0 0
    %1486 = vmatmul.mubr.bf16.gmra.mxu0 %v1448
    %v1487 = vpop.f32.mrf.mxu0
    %v1488 = vadd.f32 0.0, %v1487
    %v1489 = vpop.f32.mrf.mxu0
    %v1490 = vpop.f32.mrf.mxu0
    %v1491 = vadd.f32 0.0, %v1490
    %v1492 = vpop.f32.mrf.mxu0
    %1493 = vmatprep.mubr.bf16.mxu0 0
    %1494 = vmatmul.mubr.bf16.gmra.mxu0 %v1451
    %v1495 = vpop.f32.mrf.mxu0
    %v1496 = vadd.f32 0.0, %v1495
    %v1497 = vpop.f32.mrf.mxu0
    %v1498 = vpop.f32.mrf.mxu0
    %v1499 = vadd.f32 0.0, %v1498
    %v1500 = vpop.f32.mrf.mxu0
    %1501 = vdwg.mxu0
    %v1502 = vadd.f32 %v1433, %v1488
    %v1503 = vadd.f32 %v1434, %v1491
    %v1504 = vadd.f32 %v1435, %v1496
    %v1505 = vadd.f32 %v1436, %v1499
    %vm1506 = vcmp.gt.f32.partialorder %v1502, 0.0
    %vm1507 = vcmp.gt.f32.partialorder %v1503, 0.0
    %vm1508 = vcmp.gt.f32.partialorder %v1504, 0.0
    %vm1509 = vcmp.gt.f32.partialorder %v1505, 0.0
    %v1510 = vmin.f32 %v1502, 0.0
    %v1511 = vmin.f32 %v1503, 0.0
    %v1512 = vmin.f32 %v1504, 0.0
    %v1513 = vmin.f32 %v1505, 0.0
    %v1514 = vmul.f32 %v1510, 1.442695
    %v1515 = vpow.pop %v1514
    %v1516 = vmul.f32 %v1511, 1.442695
    %v1517 = vpow.pop %v1516
    %v1518 = vmul.f32 %v1512, 1.442695
    %v1519 = vpow.pop %v1518
    %v1520 = vmul.f32 %v1513, 1.442695
    %v1521 = vpow.pop %v1520
    %v1522 = vsub.f32 %v1515, 1.0
    %v1523 = vsub.f32 %v1517, 1.0
    %v1524 = vsub.f32 %v1519, 1.0
    %v1525 = vsub.f32 %v1521, 1.0
    %v1526 = vsel %vm1506, %v1502, %v1522
    %v1527 = vsel %vm1507, %v1503, %v1523
    %v1528 = vsel %vm1508, %v1504, %v1524
    %v1529 = vsel %vm1509, %v1505, %v1525
    %v1530 = vld [vmem:[#allocation8 + $0xa0] sm:$0xf]
    %v1531 = vld [vmem:[#allocation8 + $0xa4] sm:$0xf]
    %v1532 = vld [vmem:[#allocation8 + $0xa8] sm:$0xf]
    %v1533 = vld [vmem:[#allocation8 + $0xac] sm:$0xf]
    %v1534 = vld [vmem:[#allocation8 + $0xb0] sm:$0xf]
    %v1535 = vld [vmem:[#allocation8 + $0xb4] sm:$0xf]
    %v1536 = vld [vmem:[#allocation8 + $0xb8] sm:$0xf]
    %v1537 = vld [vmem:[#allocation8 + $0xbc] sm:$0xf]
    %v1538 = vld [vmem:[#allocation8 + $0xc0] sm:$0xf]
    %v1539 = vld [vmem:[#allocation8 + $0xc4] sm:$0xf]
    %v1540 = vpack.c.bf16 %v1527, %v1526
    %v1541 = vpack.c.bf16 %v1529, %v1528
    %v1552 = vunpack.c.l.b16 %v1530
    %v1553 = vunpack.c.l.b16 %v1531
    %v1554 = vunpack.c.l.b16 %v1532
    %v1555 = vunpack.c.l.b16 %v1533
    %v1556 = vunpack.c.l.b16 %v1534
    %v1557 = vunpack.c.l.b16 %v1535
    %v1558 = vunpack.c.l.b16 %v1536
    %v1559 = vunpack.c.l.b16 %v1537
    %v1560 = vunpack.c.l.b16 %v1538
    %v1561 = vunpack.c.l.b16 %v1539
    %v1562 = vpack.c.b16 %v1553, %v1552
    %v1563 = vpack.c.b16 %v1555, %v1554
    %v1564 = vpack.c.b16 %v1557, %v1556
    %v1565 = vpack.c.b16 %v1559, %v1558
    %v1566 = vpack.c.b16 %v1561, %v1560
    %v1568 = vsel %vm104, %v1562, 0
    %v1571 = vsel %vm104, %v1563, 0
    %v1574 = vsel %vm104, %v1564, 0
    %v1577 = vsel %vm104, %v1565, 0
    %v1580 = vsel %vm104, %v1566, 0
    %1582 = vmatprep.subr.bf16.mxu0 0
    %1583 = vmatpush1.bf16.msra.mxu0 0
    %1584 = vmatprep.subr.bf16.mxu0 0
    %1585 = vmatpush1.bf16.msra.mxu0 0
    %1586 = vmatprep.subr.bf16.mxu0 0
    %1587 = vmatpush1.bf16.msra.mxu0 0
    %1588 = vmatprep.subr.bf16.mxu0 0
    %1589 = vmatpush1.bf16.msra.mxu0 0
    %1590 = vmatprep.subr.bf16.mxu0 0
    %1591 = vmatpush1.bf16.msra.mxu0 0
    %1592 = vmatprep.subr.bf16.mxu0 0
    %1593 = vmatpush1.bf16.msra.mxu0 0
    %1594 = vmatprep.subr.bf16.mxu0 0
    %1595 = vmatpush1.bf16.msra.mxu0 %v1541
    %1596 = vmatprep.subr.bf16.mxu0 0
    %1597 = vmatpush1.bf16.msra.mxu0 %v1540
    %1598 = vmatprep.subr.bf16.mxu0 0
    %1599 = vmatpush2.bf16.msra.mxu0 0
    %1600 = vmatprep.subr.bf16.mxu0 0
    %1601 = vmatpush2.bf16.msra.mxu0 0
    %1602 = vmatprep.subr.bf16.mxu0 0
    %1603 = vmatpush2.bf16.msra.mxu0 0
    %1604 = vmatprep.subr.bf16.mxu0 0
    %1605 = vmatpush2.bf16.msra.mxu0 0
    %1606 = vmatprep.subr.bf16.mxu0 0
    %1607 = vmatpush2.bf16.msra.mxu0 0
    %1608 = vmatprep.subr.bf16.mxu0 0
    %1609 = vmatpush2.bf16.msra.mxu0 0
    %1610 = vmatprep.subr.bf16.mxu0 0
    %1611 = vmatpush2.bf16.msra.mxu0 0
    %1612 = vmatprep.subr.bf16.mxu0 0
    %1613 = vmatpush2.bf16.msra.mxu0 0
    %1614 = vmatprep.mubr.bf16.mxu0 0
    %1615 = vmatmul.mubr.bf16.gmra.mxu0 %v1568
    %v1616 = vpop.f32.mrf.mxu0
    %v1617 = vadd.f32 0.0, %v1616
    %v1618 = vpop.f32.mrf.mxu0
    %v1619 = vpop.f32.mrf.mxu0
    %v1620 = vadd.f32 0.0, %v1619
    %v1621 = vpop.f32.mrf.mxu0
    %1622 = vmatprep.mubr.bf16.mxu0 0
    %1623 = vmatmul.mubr.bf16.gmra.mxu0 %v1571
    %v1624 = vpop.f32.mrf.mxu0
    %v1625 = vadd.f32 0.0, %v1624
    %v1626 = vpop.f32.mrf.mxu0
    %v1627 = vpop.f32.mrf.mxu0
    %v1628 = vadd.f32 0.0, %v1627
    %v1629 = vpop.f32.mrf.mxu0
    %1630 = vmatprep.mubr.bf16.mxu0 0
    %1631 = vmatmul.mubr.bf16.gmra.mxu0 %v1574
    %v1632 = vpop.f32.mrf.mxu0
    %v1633 = vadd.f32 0.0, %v1632
    %v1634 = vpop.f32.mrf.mxu0
    %v1635 = vpop.f32.mrf.mxu0
    %v1636 = vadd.f32 0.0, %v1635
    %v1637 = vpop.f32.mrf.mxu0
    %1638 = vmatprep.mubr.bf16.mxu0 0
    %1639 = vmatmul.mubr.bf16.gmra.mxu0 %v1577
    %v1640 = vpop.f32.mrf.mxu0
    %v1641 = vadd.f32 0.0, %v1640
    %v1642 = vpop.f32.mrf.mxu0
    %v1643 = vpop.f32.mrf.mxu0
    %v1644 = vadd.f32 0.0, %v1643
    %v1645 = vpop.f32.mrf.mxu0
    %1646 = vmatprep.mubr.bf16.mxu0 0
    %1647 = vmatmul.mubr.bf16.gmra.mxu0 %v1580
    %v1648 = vpop.f32.mrf.mxu0
    %v1649 = vadd.f32 0.0, %v1648
    %v1650 = vpop.f32.mrf.mxu0
    %v1651 = vpop.f32.mrf.mxu0
    %v1652 = vadd.f32 0.0, %v1651
    %v1653 = vpop.f32.mrf.mxu0
    %1654 = vdwg.mxu0
    %v1655 = vld [vmem:[#allocation5 + $0x47] ss:$0 sm:$0xff]
    %v1656 = vld [vmem:[#allocation7 + $0x190] sm:$0xf]
    %v1657 = vld [vmem:[#allocation7 + $0x194] sm:$0xf]
    %v1658 = vld [vmem:[#allocation7 + $0x198] sm:$0xf]
    %v1659 = vld [vmem:[#allocation7 + $0x19c] sm:$0xf]
    %v1660 = vld [vmem:[#allocation7 + $0x1a0] sm:$0xf]
    %v1661 = vld [vmem:[#allocation7 + $0x1a4] sm:$0xf]
    %v1662 = vld [vmem:[#allocation7 + $0x1a8] sm:$0xf]
    %v1663 = vld [vmem:[#allocation7 + $0x1ac] sm:$0xf]
    %v1664 = vld [vmem:[#allocation7 + $0x1b0] sm:$0xf]
    %v1665 = vld [vmem:[#allocation7 + $0x1b4] sm:$0xf]
    %v1666 = vld [vmem:[#allocation7 + $0x1b8] sm:$0xf]
    %v1667 = vld [vmem:[#allocation7 + $0x1bc] sm:$0xf]
    %v1668 = vld [vmem:[#allocation7 + $0x1c0] sm:$0xf]
    %v1669 = vld [vmem:[#allocation7 + $0x1c4] sm:$0xf]
    %v1670 = vld [vmem:[#allocation7 + $0x1c8] sm:$0xf]
    %v1671 = vld [vmem:[#allocation7 + $0x1cc] sm:$0xf]
    %v1672 = vpack.c.bf16 %v1620, %v1617
    %v1689 = vunpack.c.l.b16 %v1656
    %v1690 = vunpack.c.l.b16 %v1657
    %v1691 = vunpack.c.l.b16 %v1658
    %v1692 = vunpack.c.l.b16 %v1659
    %v1693 = vunpack.c.l.b16 %v1660
    %v1694 = vunpack.c.l.b16 %v1661
    %v1695 = vunpack.c.l.b16 %v1662
    %v1696 = vunpack.c.l.b16 %v1663
    %v1697 = vunpack.c.l.b16 %v1664
    %v1698 = vunpack.c.l.b16 %v1665
    %v1699 = vunpack.c.l.b16 %v1666
    %v1700 = vunpack.c.l.b16 %v1667
    %v1701 = vunpack.c.l.b16 %v1668
    %v1702 = vunpack.c.l.b16 %v1669
    %v1703 = vunpack.c.l.b16 %v1670
    %v1704 = vunpack.c.l.b16 %v1671
    %v1705 = vpack.c.b16 %v1690, %v1689
    %v1706 = vpack.c.b16 %v1692, %v1691
    %v1707 = vpack.c.b16 %v1694, %v1693
    %v1708 = vpack.c.b16 %v1696, %v1695
    %v1709 = vpack.c.b16 %v1698, %v1697
    %v1710 = vpack.c.b16 %v1700, %v1699
    %v1711 = vpack.c.b16 %v1702, %v1701
    %v1712 = vpack.c.b16 %v1704, %v1703
    %1721 = vmatprep.subr.bf16.mxu0 0
    %1722 = vmatpush1.bf16.msra.mxu0 %v1712
    %1723 = vmatprep.subr.bf16.mxu0 0
    %1724 = vmatpush1.bf16.msra.mxu0 %v1711
    %1725 = vmatprep.subr.bf16.mxu0 0
    %1726 = vmatpush1.bf16.msra.mxu0 %v1710
    %1727 = vmatprep.subr.bf16.mxu0 0
    %1728 = vmatpush1.bf16.msra.mxu0 %v1709
    %1729 = vmatprep.subr.bf16.mxu0 0
    %1730 = vmatpush1.bf16.msra.mxu0 %v1708
    %1731 = vmatprep.subr.bf16.mxu0 0
    %1732 = vmatpush1.bf16.msra.mxu0 %v1707
    %1733 = vmatprep.subr.bf16.mxu0 0
    %1734 = vmatpush1.bf16.msra.mxu0 %v1706
    %1735 = vmatprep.subr.bf16.mxu0 0
    %1736 = vmatpush1.bf16.msra.mxu0 %v1705
    %1737 = vmatprep.subr.bf16.mxu0 0
    %1738 = vmatpush2.bf16.msra.mxu0 0
    %1739 = vmatprep.subr.bf16.mxu0 0
    %1740 = vmatpush2.bf16.msra.mxu0 0
    %1741 = vmatprep.subr.bf16.mxu0 0
    %1742 = vmatpush2.bf16.msra.mxu0 0
    %1743 = vmatprep.subr.bf16.mxu0 0
    %1744 = vmatpush2.bf16.msra.mxu0 0
    %1745 = vmatprep.subr.bf16.mxu0 0
    %1746 = vmatpush2.bf16.msra.mxu0 0
    %1747 = vmatprep.subr.bf16.mxu0 0
    %1748 = vmatpush2.bf16.msra.mxu0 0
    %1749 = vmatprep.subr.bf16.mxu0 0
    %1750 = vmatpush2.bf16.msra.mxu0 0
    %1751 = vmatprep.subr.bf16.mxu0 0
    %1752 = vmatpush2.bf16.msra.mxu0 0
    %1753 = vmatprep.mubr.bf16.mxu0 0
    %1754 = vmatmul.mubr.bf16.gmra.mxu0 %v1672
    %v1755 = vpop.f32.mrf.mxu0
    %v1756 = vadd.f32 0.0, %v1755
    %v1757 = vpop.f32.mrf.mxu0
    %v1758 = vpop.f32.mrf.mxu0
    %v1759 = vadd.f32 0.0, %v1758
    %v1760 = vpop.f32.mrf.mxu0
    %1761 = vdwg.mxu0
    %v1762 = vadd.f32 %v1655, %v1756
    %v1763 = vadd.f32 %v1655, %v1759
    %v1764 = vld [vmem:[#allocation7 + $0x1d0] sm:$0xf]
    %v1765 = vld [vmem:[#allocation7 + $0x1d4] sm:$0xf]
    %v1766 = vld [vmem:[#allocation7 + $0x1d8] sm:$0xf]
    %v1767 = vld [vmem:[#allocation7 + $0x1dc] sm:$0xf]
    %v1768 = vld [vmem:[#allocation7 + $0x1e0] sm:$0xf]
    %v1769 = vld [vmem:[#allocation7 + $0x1e4] sm:$0xf]
    %v1770 = vld [vmem:[#allocation7 + $0x1e8] sm:$0xf]
    %v1771 = vld [vmem:[#allocation7 + $0x1ec] sm:$0xf]
    %v1772 = vld [vmem:[#allocation7 + $0x1f0] sm:$0xf]
    %v1773 = vld [vmem:[#allocation7 + $0x1f4] sm:$0xf]
    %v1774 = vld [vmem:[#allocation7 + $0x1f8] sm:$0xf]
    %v1775 = vld [vmem:[#allocation7 + $0x1fc] sm:$0xf]
    %v1776 = vld [vmem:[#allocation7 + $0x200] sm:$0xf]
    %v1777 = vld [vmem:[#allocation7 + $0x204] sm:$0xf]
    %v1778 = vld [vmem:[#allocation7 + $0x208] sm:$0xf]
    %v1779 = vld [vmem:[#allocation7 + $0x20c] sm:$0xf]
    %v1780 = vpack.c.bf16 %v1628, %v1625
    %v1797 = vunpack.c.l.b16 %v1764
    %v1798 = vunpack.c.l.b16 %v1765
    %v1799 = vunpack.c.l.b16 %v1766
    %v1800 = vunpack.c.l.b16 %v1767
    %v1801 = vunpack.c.l.b16 %v1768
    %v1802 = vunpack.c.l.b16 %v1769
    %v1803 = vunpack.c.l.b16 %v1770
    %v1804 = vunpack.c.l.b16 %v1771
    %v1805 = vunpack.c.l.b16 %v1772
    %v1806 = vunpack.c.l.b16 %v1773
    %v1807 = vunpack.c.l.b16 %v1774
    %v1808 = vunpack.c.l.b16 %v1775
    %v1809 = vunpack.c.l.b16 %v1776
    %v1810 = vunpack.c.l.b16 %v1777
    %v1811 = vunpack.c.l.b16 %v1778
    %v1812 = vunpack.c.l.b16 %v1779
    %v1813 = vpack.c.b16 %v1798, %v1797
    %v1814 = vpack.c.b16 %v1800, %v1799
    %v1815 = vpack.c.b16 %v1802, %v1801
    %v1816 = vpack.c.b16 %v1804, %v1803
    %v1817 = vpack.c.b16 %v1806, %v1805
    %v1818 = vpack.c.b16 %v1808, %v1807
    %v1819 = vpack.c.b16 %v1810, %v1809
    %v1820 = vpack.c.b16 %v1812, %v1811
    %1829 = vmatprep.subr.bf16.mxu0 0
    %1830 = vmatpush1.bf16.msra.mxu0 %v1820
    %1831 = vmatprep.subr.bf16.mxu0 0
    %1832 = vmatpush1.bf16.msra.mxu0 %v1819
    %1833 = vmatprep.subr.bf16.mxu0 0
    %1834 = vmatpush1.bf16.msra.mxu0 %v1818
    %1835 = vmatprep.subr.bf16.mxu0 0
    %1836 = vmatpush1.bf16.msra.mxu0 %v1817
    %1837 = vmatprep.subr.bf16.mxu0 0
    %1838 = vmatpush1.bf16.msra.mxu0 %v1816
    %1839 = vmatprep.subr.bf16.mxu0 0
    %1840 = vmatpush1.bf16.msra.mxu0 %v1815
    %1841 = vmatprep.subr.bf16.mxu0 0
    %1842 = vmatpush1.bf16.msra.mxu0 %v1814
    %1843 = vmatprep.subr.bf16.mxu0 0
    %1844 = vmatpush1.bf16.msra.mxu0 %v1813
    %1845 = vmatprep.subr.bf16.mxu0 0
    %1846 = vmatpush2.bf16.msra.mxu0 0
    %1847 = vmatprep.subr.bf16.mxu0 0
    %1848 = vmatpush2.bf16.msra.mxu0 0
    %1849 = vmatprep.subr.bf16.mxu0 0
    %1850 = vmatpush2.bf16.msra.mxu0 0
    %1851 = vmatprep.subr.bf16.mxu0 0
    %1852 = vmatpush2.bf16.msra.mxu0 0
    %1853 = vmatprep.subr.bf16.mxu0 0
    %1854 = vmatpush2.bf16.msra.mxu0 0
    %1855 = vmatprep.subr.bf16.mxu0 0
    %1856 = vmatpush2.bf16.msra.mxu0 0
    %1857 = vmatprep.subr.bf16.mxu0 0
    %1858 = vmatpush2.bf16.msra.mxu0 0
    %1859 = vmatprep.subr.bf16.mxu0 0
    %1860 = vmatpush2.bf16.msra.mxu0 0
    %1861 = vmatprep.mubr.bf16.mxu0 0
    %1862 = vmatmul.mubr.bf16.gmra.mxu0 %v1780
    %v1863 = vpop.f32.mrf.mxu0
    %v1864 = vadd.f32 0.0, %v1863
    %v1865 = vpop.f32.mrf.mxu0
    %v1866 = vpop.f32.mrf.mxu0
    %v1867 = vadd.f32 0.0, %v1866
    %v1868 = vpop.f32.mrf.mxu0
    %1869 = vdwg.mxu0
    %v1870 = vadd.f32 %v1762, %v1864
    %v1871 = vadd.f32 %v1763, %v1867
    %v1872 = vld [vmem:[#allocation7 + $0x210] sm:$0xf]
    %v1873 = vld [vmem:[#allocation7 + $0x214] sm:$0xf]
    %v1874 = vld [vmem:[#allocation7 + $0x218] sm:$0xf]
    %v1875 = vld [vmem:[#allocation7 + $0x21c] sm:$0xf]
    %v1876 = vld [vmem:[#allocation7 + $0x220] sm:$0xf]
    %v1877 = vld [vmem:[#allocation7 + $0x224] sm:$0xf]
    %v1878 = vld [vmem:[#allocation7 + $0x228] sm:$0xf]
    %v1879 = vld [vmem:[#allocation7 + $0x22c] sm:$0xf]
    %v1880 = vld [vmem:[#allocation7 + $0x230] sm:$0xf]
    %v1881 = vld [vmem:[#allocation7 + $0x234] sm:$0xf]
    %v1882 = vld [vmem:[#allocation7 + $0x238] sm:$0xf]
    %v1883 = vld [vmem:[#allocation7 + $0x23c] sm:$0xf]
    %v1884 = vld [vmem:[#allocation7 + $0x240] sm:$0xf]
    %v1885 = vld [vmem:[#allocation7 + $0x244] sm:$0xf]
    %v1886 = vld [vmem:[#allocation7 + $0x248] sm:$0xf]
    %v1887 = vld [vmem:[#allocation7 + $0x24c] sm:$0xf]
    %v1888 = vpack.c.bf16 %v1636, %v1633
    %v1905 = vunpack.c.l.b16 %v1872
    %v1906 = vunpack.c.l.b16 %v1873
    %v1907 = vunpack.c.l.b16 %v1874
    %v1908 = vunpack.c.l.b16 %v1875
    %v1909 = vunpack.c.l.b16 %v1876
    %v1910 = vunpack.c.l.b16 %v1877
    %v1911 = vunpack.c.l.b16 %v1878
    %v1912 = vunpack.c.l.b16 %v1879
    %v1913 = vunpack.c.l.b16 %v1880
    %v1914 = vunpack.c.l.b16 %v1881
    %v1915 = vunpack.c.l.b16 %v1882
    %v1916 = vunpack.c.l.b16 %v1883
    %v1917 = vunpack.c.l.b16 %v1884
    %v1918 = vunpack.c.l.b16 %v1885
    %v1919 = vunpack.c.l.b16 %v1886
    %v1920 = vunpack.c.l.b16 %v1887
    %v1921 = vpack.c.b16 %v1906, %v1905
    %v1922 = vpack.c.b16 %v1908, %v1907
    %v1923 = vpack.c.b16 %v1910, %v1909
    %v1924 = vpack.c.b16 %v1912, %v1911
    %v1925 = vpack.c.b16 %v1914, %v1913
    %v1926 = vpack.c.b16 %v1916, %v1915
    %v1927 = vpack.c.b16 %v1918, %v1917
    %v1928 = vpack.c.b16 %v1920, %v1919
    %1937 = vmatprep.subr.bf16.mxu0 0
    %1938 = vmatpush1.bf16.msra.mxu0 %v1928
    %1939 = vmatprep.subr.bf16.mxu0 0
    %1940 = vmatpush1.bf16.msra.mxu0 %v1927
    %1941 = vmatprep.subr.bf16.mxu0 0
    %1942 = vmatpush1.bf16.msra.mxu0 %v1926
    %1943 = vmatprep.subr.bf16.mxu0 0
    %1944 = vmatpush1.bf16.msra.mxu0 %v1925
    %1945 = vmatprep.subr.bf16.mxu0 0
    %1946 = vmatpush1.bf16.msra.mxu0 %v1924
    %1947 = vmatprep.subr.bf16.mxu0 0
    %1948 = vmatpush1.bf16.msra.mxu0 %v1923
    %1949 = vmatprep.subr.bf16.mxu0 0
    %1950 = vmatpush1.bf16.msra.mxu0 %v1922
    %1951 = vmatprep.subr.bf16.mxu0 0
    %1952 = vmatpush1.bf16.msra.mxu0 %v1921
    %1953 = vmatprep.subr.bf16.mxu0 0
    %1954 = vmatpush2.bf16.msra.mxu0 0
    %1955 = vmatprep.subr.bf16.mxu0 0
    %1956 = vmatpush2.bf16.msra.mxu0 0
    %1957 = vmatprep.subr.bf16.mxu0 0
    %1958 = vmatpush2.bf16.msra.mxu0 0
    %1959 = vmatprep.subr.bf16.mxu0 0
    %1960 = vmatpush2.bf16.msra.mxu0 0
    %1961 = vmatprep.subr.bf16.mxu0 0
    %1962 = vmatpush2.bf16.msra.mxu0 0
    %1963 = vmatprep.subr.bf16.mxu0 0
    %1964 = vmatpush2.bf16.msra.mxu0 0
    %1965 = vmatprep.subr.bf16.mxu0 0
    %1966 = vmatpush2.bf16.msra.mxu0 0
    %1967 = vmatprep.subr.bf16.mxu0 0
    %1968 = vmatpush2.bf16.msra.mxu0 0
    %1969 = vmatprep.mubr.bf16.mxu0 0
    %1970 = vmatmul.mubr.bf16.gmra.mxu0 %v1888
    %v1971 = vpop.f32.mrf.mxu0
    %v1972 = vadd.f32 0.0, %v1971
    %v1973 = vpop.f32.mrf.mxu0
    %v1974 = vpop.f32.mrf.mxu0
    %v1975 = vadd.f32 0.0, %v1974
    %v1976 = vpop.f32.mrf.mxu0
    %1977 = vdwg.mxu0
    %v1978 = vadd.f32 %v1870, %v1972
    %v1979 = vadd.f32 %v1871, %v1975
    %v1980 = vld [vmem:[#allocation7 + $0x250] sm:$0xf]
    %v1981 = vld [vmem:[#allocation7 + $0x254] sm:$0xf]
    %v1982 = vld [vmem:[#allocation7 + $0x258] sm:$0xf]
    %v1983 = vld [vmem:[#allocation7 + $0x25c] sm:$0xf]
    %v1984 = vld [vmem:[#allocation7 + $0x260] sm:$0xf]
    %v1985 = vld [vmem:[#allocation7 + $0x264] sm:$0xf]
    %v1986 = vld [vmem:[#allocation7 + $0x268] sm:$0xf]
    %v1987 = vld [vmem:[#allocation7 + $0x26c] sm:$0xf]
    %v1988 = vld [vmem:[#allocation7 + $0x270] sm:$0xf]
    %v1989 = vld [vmem:[#allocation7 + $0x274] sm:$0xf]
    %v1990 = vld [vmem:[#allocation7 + $0x278] sm:$0xf]
    %v1991 = vld [vmem:[#allocation7 + $0x27c] sm:$0xf]
    %v1992 = vld [vmem:[#allocation7 + $0x280] sm:$0xf]
    %v1993 = vld [vmem:[#allocation7 + $0x284] sm:$0xf]
    %v1994 = vld [vmem:[#allocation7 + $0x288] sm:$0xf]
    %v1995 = vld [vmem:[#allocation7 + $0x28c] sm:$0xf]
    %v1996 = vpack.c.bf16 %v1644, %v1641
    %v2013 = vunpack.c.l.b16 %v1980
    %v2014 = vunpack.c.l.b16 %v1981
    %v2015 = vunpack.c.l.b16 %v1982
    %v2016 = vunpack.c.l.b16 %v1983
    %v2017 = vunpack.c.l.b16 %v1984
    %v2018 = vunpack.c.l.b16 %v1985
    %v2019 = vunpack.c.l.b16 %v1986
    %v2020 = vunpack.c.l.b16 %v1987
    %v2021 = vunpack.c.l.b16 %v1988
    %v2022 = vunpack.c.l.b16 %v1989
    %v2023 = vunpack.c.l.b16 %v1990
    %v2024 = vunpack.c.l.b16 %v1991
    %v2025 = vunpack.c.l.b16 %v1992
    %v2026 = vunpack.c.l.b16 %v1993
    %v2027 = vunpack.c.l.b16 %v1994
    %v2028 = vunpack.c.l.b16 %v1995
    %v2029 = vpack.c.b16 %v2014, %v2013
    %v2030 = vpack.c.b16 %v2016, %v2015
    %v2031 = vpack.c.b16 %v2018, %v2017
    %v2032 = vpack.c.b16 %v2020, %v2019
    %v2033 = vpack.c.b16 %v2022, %v2021
    %v2034 = vpack.c.b16 %v2024, %v2023
    %v2035 = vpack.c.b16 %v2026, %v2025
    %v2036 = vpack.c.b16 %v2028, %v2027
    %2045 = vmatprep.subr.bf16.mxu0 0
    %2046 = vmatpush1.bf16.msra.mxu0 %v2036
    %2047 = vmatprep.subr.bf16.mxu0 0
    %2048 = vmatpush1.bf16.msra.mxu0 %v2035
    %2049 = vmatprep.subr.bf16.mxu0 0
    %2050 = vmatpush1.bf16.msra.mxu0 %v2034
    %2051 = vmatprep.subr.bf16.mxu0 0
    %2052 = vmatpush1.bf16.msra.mxu0 %v2033
    %2053 = vmatprep.subr.bf16.mxu0 0
    %2054 = vmatpush1.bf16.msra.mxu0 %v2032
    %2055 = vmatprep.subr.bf16.mxu0 0
    %2056 = vmatpush1.bf16.msra.mxu0 %v2031
    %2057 = vmatprep.subr.bf16.mxu0 0
    %2058 = vmatpush1.bf16.msra.mxu0 %v2030
    %2059 = vmatprep.subr.bf16.mxu0 0
    %2060 = vmatpush1.bf16.msra.mxu0 %v2029
    %2061 = vmatprep.subr.bf16.mxu0 0
    %2062 = vmatpush2.bf16.msra.mxu0 0
    %2063 = vmatprep.subr.bf16.mxu0 0
    %2064 = vmatpush2.bf16.msra.mxu0 0
    %2065 = vmatprep.subr.bf16.mxu0 0
    %2066 = vmatpush2.bf16.msra.mxu0 0
    %2067 = vmatprep.subr.bf16.mxu0 0
    %2068 = vmatpush2.bf16.msra.mxu0 0
    %2069 = vmatprep.subr.bf16.mxu0 0
    %2070 = vmatpush2.bf16.msra.mxu0 0
    %2071 = vmatprep.subr.bf16.mxu0 0
    %2072 = vmatpush2.bf16.msra.mxu0 0
    %2073 = vmatprep.subr.bf16.mxu0 0
    %2074 = vmatpush2.bf16.msra.mxu0 0
    %2075 = vmatprep.subr.bf16.mxu0 0
    %2076 = vmatpush2.bf16.msra.mxu0 0
    %2077 = vmatprep.mubr.bf16.mxu0 0
    %2078 = vmatmul.mubr.bf16.gmra.mxu0 %v1996
    %v2079 = vpop.f32.mrf.mxu0
    %v2080 = vadd.f32 0.0, %v2079
    %v2081 = vpop.f32.mrf.mxu0
    %v2082 = vpop.f32.mrf.mxu0
    %v2083 = vadd.f32 0.0, %v2082
    %v2084 = vpop.f32.mrf.mxu0
    %2085 = vdwg.mxu0
    %v2086 = vadd.f32 %v1978, %v2080
    %v2087 = vadd.f32 %v1979, %v2083
    %v2088 = vld [vmem:[#allocation7 + $0x290] sm:$0xf]
    %v2089 = vld [vmem:[#allocation7 + $0x294] sm:$0xf]
    %v2090 = vld [vmem:[#allocation7 + $0x298] sm:$0xf]
    %v2091 = vld [vmem:[#allocation7 + $0x29c] sm:$0xf]
    %v2092 = vld [vmem:[#allocation7 + $0x2a0] sm:$0xf]
    %v2093 = vld [vmem:[#allocation7 + $0x2a4] sm:$0xf]
    %v2094 = vld [vmem:[#allocation7 + $0x2a8] sm:$0xf]
    %v2095 = vld [vmem:[#allocation7 + $0x2ac] sm:$0xf]
    %v2096 = vld [vmem:[#allocation7 + $0x2b0] sm:$0xf]
    %v2097 = vld [vmem:[#allocation7 + $0x2b4] sm:$0xf]
    %v2098 = vld [vmem:[#allocation7 + $0x2b8] sm:$0xf]
    %v2099 = vld [vmem:[#allocation7 + $0x2bc] sm:$0xf]
    %v2100 = vld [vmem:[#allocation7 + $0x2c0] sm:$0xf]
    %v2101 = vld [vmem:[#allocation7 + $0x2c4] sm:$0xf]
    %v2102 = vld [vmem:[#allocation7 + $0x2c8] sm:$0xf]
    %v2103 = vld [vmem:[#allocation7 + $0x2cc] sm:$0xf]
    %v2104 = vpack.c.bf16 %v1652, %v1649
    %v2121 = vunpack.c.l.b16 %v2088
    %v2122 = vunpack.c.l.b16 %v2089
    %v2123 = vunpack.c.l.b16 %v2090
    %v2124 = vunpack.c.l.b16 %v2091
    %v2125 = vunpack.c.l.b16 %v2092
    %v2126 = vunpack.c.l.b16 %v2093
    %v2127 = vunpack.c.l.b16 %v2094
    %v2128 = vunpack.c.l.b16 %v2095
    %v2129 = vunpack.c.l.b16 %v2096
    %v2130 = vunpack.c.l.b16 %v2097
    %v2131 = vunpack.c.l.b16 %v2098
    %v2132 = vunpack.c.l.b16 %v2099
    %v2133 = vunpack.c.l.b16 %v2100
    %v2134 = vunpack.c.l.b16 %v2101
    %v2135 = vunpack.c.l.b16 %v2102
    %v2136 = vunpack.c.l.b16 %v2103
    %v2137 = vpack.c.b16 %v2122, %v2121
    %v2138 = vpack.c.b16 %v2124, %v2123
    %v2139 = vpack.c.b16 %v2126, %v2125
    %v2140 = vpack.c.b16 %v2128, %v2127
    %v2141 = vpack.c.b16 %v2130, %v2129
    %v2142 = vpack.c.b16 %v2132, %v2131
    %v2143 = vpack.c.b16 %v2134, %v2133
    %v2144 = vpack.c.b16 %v2136, %v2135
    %2153 = vmatprep.subr.bf16.mxu0 0
    %2154 = vmatpush1.bf16.msra.mxu0 %v2144
    %2155 = vmatprep.subr.bf16.mxu0 0
    %2156 = vmatpush1.bf16.msra.mxu0 %v2143
    %2157 = vmatprep.subr.bf16.mxu0 0
    %2158 = vmatpush1.bf16.msra.mxu0 %v2142
    %2159 = vmatprep.subr.bf16.mxu0 0
    %2160 = vmatpush1.bf16.msra.mxu0 %v2141
    %2161 = vmatprep.subr.bf16.mxu0 0
    %2162 = vmatpush1.bf16.msra.mxu0 %v2140
    %2163 = vmatprep.subr.bf16.mxu0 0
    %2164 = vmatpush1.bf16.msra.mxu0 %v2139
    %2165 = vmatprep.subr.bf16.mxu0 0
    %2166 = vmatpush1.bf16.msra.mxu0 %v2138
    %2167 = vmatprep.subr.bf16.mxu0 0
    %2168 = vmatpush1.bf16.msra.mxu0 %v2137
    %2169 = vmatprep.subr.bf16.mxu0 0
    %2170 = vmatpush2.bf16.msra.mxu0 0
    %2171 = vmatprep.subr.bf16.mxu0 0
    %2172 = vmatpush2.bf16.msra.mxu0 0
    %2173 = vmatprep.subr.bf16.mxu0 0
    %2174 = vmatpush2.bf16.msra.mxu0 0
    %2175 = vmatprep.subr.bf16.mxu0 0
    %2176 = vmatpush2.bf16.msra.mxu0 0
    %2177 = vmatprep.subr.bf16.mxu0 0
    %2178 = vmatpush2.bf16.msra.mxu0 0
    %2179 = vmatprep.subr.bf16.mxu0 0
    %2180 = vmatpush2.bf16.msra.mxu0 0
    %2181 = vmatprep.subr.bf16.mxu0 0
    %2182 = vmatpush2.bf16.msra.mxu0 0
    %2183 = vmatprep.subr.bf16.mxu0 0
    %2184 = vmatpush2.bf16.msra.mxu0 0
    %2185 = vmatprep.mubr.bf16.mxu0 0
    %2186 = vmatmul.mubr.bf16.gmra.mxu0 %v2104
    %v2187 = vpop.f32.mrf.mxu0
    %v2188 = vadd.f32 0.0, %v2187
    %v2189 = vpop.f32.mrf.mxu0
    %v2190 = vpop.f32.mrf.mxu0
    %v2191 = vadd.f32 0.0, %v2190
    %v2192 = vpop.f32.mrf.mxu0
    %2193 = vdwg.mxu0
    %v2194 = vadd.f32 %v2086, %v2188
    %v2195 = vadd.f32 %v2087, %v2191
    %vm2196 = vcmp.gt.f32.partialorder %v2194, 0.0
    %vm2197 = vcmp.gt.f32.partialorder %v2195, 0.0
    %v2198 = vmin.f32 %v2194, 0.0
    %v2199 = vmin.f32 %v2195, 0.0
    %v2200 = vmul.f32 %v2198, 1.442695
    %v2201 = vpow.pop %v2200
    %v2202 = vmul.f32 %v2199, 1.442695
    %v2203 = vpow.pop %v2202
    %v2204 = vsub.f32 %v2201, 1.0
    %v2205 = vsub.f32 %v2203, 1.0
    %v2206 = vsel %vm2196, %v2194, %v2204
    %v2207 = vsel %vm2197, %v2195, %v2205
    %v2208 = vld [vmem:[#allocation8 + $0xc8] sm:$0xf]
    %v2209 = vld [vmem:[#allocation8 + $0xcc] sm:$0xf]
    %v2210 = vld [vmem:[#allocation8 + $0xd0] sm:$0xf]
    %v2211 = vpack.c.bf16 %v2207, %v2206
    %v2215 = vunpack.c.l.b16 %v2208
    %v2216 = vunpack.c.l.b16 %v2209
    %v2217 = vunpack.c.l.b16 %v2210
    %v2218 = vpack.c.b16 %v2216, %v2215
    %v2219 = vpack.c.b16 %v2217, %v2217
    %v2221 = vsel %vm825, %v2218, 0
    %v2224 = vsel %vm825, %v2219, 0
    %2226 = vmatprep.subr.bf16.mxu0 0
    %2227 = vmatpush1.bf16.msra.mxu0 0
    %2228 = vmatprep.subr.bf16.mxu0 0
    %2229 = vmatpush1.bf16.msra.mxu0 0
    %2230 = vmatprep.subr.bf16.mxu0 0
    %2231 = vmatpush1.bf16.msra.mxu0 0
    %2232 = vmatprep.subr.bf16.mxu0 0
    %2233 = vmatpush1.bf16.msra.mxu0 0
    %2234 = vmatprep.subr.bf16.mxu0 0
    %2235 = vmatpush1.bf16.msra.mxu0 0
    %2236 = vmatprep.subr.bf16.mxu0 0
    %2237 = vmatpush1.bf16.msra.mxu0 0
    %2238 = vmatprep.subr.bf16.mxu0 0
    %2239 = vmatpush1.bf16.msra.mxu0 0
    %2240 = vmatprep.subr.bf16.mxu0 0
    %2241 = vmatpush1.bf16.msra.mxu0 %v2211
    %2242 = vmatprep.subr.bf16.mxu0 0
    %2243 = vmatpush2.bf16.msra.mxu0 0
    %2244 = vmatprep.subr.bf16.mxu0 0
    %2245 = vmatpush2.bf16.msra.mxu0 0
    %2246 = vmatprep.subr.bf16.mxu0 0
    %2247 = vmatpush2.bf16.msra.mxu0 0
    %2248 = vmatprep.subr.bf16.mxu0 0
    %2249 = vmatpush2.bf16.msra.mxu0 0
    %2250 = vmatprep.subr.bf16.mxu0 0
    %2251 = vmatpush2.bf16.msra.mxu0 0
    %2252 = vmatprep.subr.bf16.mxu0 0
    %2253 = vmatpush2.bf16.msra.mxu0 0
    %2254 = vmatprep.subr.bf16.mxu0 0
    %2255 = vmatpush2.bf16.msra.mxu0 0
    %2256 = vmatprep.subr.bf16.mxu0 0
    %2257 = vmatpush2.bf16.msra.mxu0 0
    %2258 = vmatprep.mubr.bf16.mxu0 0
    %2259 = vmatmul.mubr.bf16.gmra.mxu0 %v2221
    %v2260 = vpop.f32.mrf.mxu0
    %v2261 = vadd.f32 0.0, %v2260
    %v2262 = vpop.f32.mrf.mxu0
    %v2263 = vpop.f32.mrf.mxu0
    %v2264 = vadd.f32 0.0, %v2263
    %v2265 = vpop.f32.mrf.mxu0
    %2266 = vmatprep.mubr.bf16.mxu0 0
    %2267 = vmatmul.mubr.bf16.gmra.mxu0 %v2224
    %v2268 = vpop.f32.mrf.mxu0
    %v2269 = vadd.f32 0.0, %v2268
    %v2270 = vpop.f32.mrf.mxu0
    %v2271 = vpop.f32.mrf.mxu0
    %v2272 = vpop.f32.mrf.mxu0
    %2273 = vdwg.mxu0
    %v2274 = vld [vmem:[#allocation5 + $0x50] ss:$0 sm:$0xff]
    %v2275 = vld [vmem:[#allocation7 + $0x2d0] sm:$0xf]
    %v2276 = vld [vmem:[#allocation7 + $0x2d4] sm:$0xf]
    %v2277 = vld [vmem:[#allocation7 + $0x2d8] sm:$0xf]
    %v2278 = vld [vmem:[#allocation7 + $0x2dc] sm:$0xf]
    %v2279 = vld [vmem:[#allocation7 + $0x2e0] sm:$0xf]
    %v2280 = vld [vmem:[#allocation7 + $0x2e4] sm:$0xf]
    %v2281 = vld [vmem:[#allocation7 + $0x2e8] sm:$0xf]
    %v2282 = vld [vmem:[#allocation7 + $0x2ec] sm:$0xf]
    %v2283 = vld [vmem:[#allocation7 + $0x2f0] sm:$0xf]
    %v2284 = vld [vmem:[#allocation7 + $0x2f4] sm:$0xf]
    %v2285 = vld [vmem:[#allocation7 + $0x2f8] sm:$0xf]
    %v2286 = vld [vmem:[#allocation7 + $0x2fc] sm:$0xf]
    %v2287 = vld [vmem:[#allocation7 + $0x300] sm:$0xf]
    %v2288 = vld [vmem:[#allocation7 + $0x304] sm:$0xf]
    %v2289 = vld [vmem:[#allocation7 + $0x308] sm:$0xf]
    %v2290 = vld [vmem:[#allocation7 + $0x30c] sm:$0xf]
    %v2291 = vpack.c.bf16 %v2261, %v2261
    %v2308 = vunpack.c.l.b16 %v2275
    %v2309 = vunpack.c.l.b16 %v2276
    %v2310 = vunpack.c.l.b16 %v2277
    %v2311 = vunpack.c.l.b16 %v2278
    %v2312 = vunpack.c.l.b16 %v2279
    %v2313 = vunpack.c.l.b16 %v2280
    %v2314 = vunpack.c.l.b16 %v2281
    %v2315 = vunpack.c.l.b16 %v2282
    %v2316 = vunpack.c.l.b16 %v2283
    %v2317 = vunpack.c.l.b16 %v2284
    %v2318 = vunpack.c.l.b16 %v2285
    %v2319 = vunpack.c.l.b16 %v2286
    %v2320 = vunpack.c.l.b16 %v2287
    %v2321 = vunpack.c.l.b16 %v2288
    %v2322 = vunpack.c.l.b16 %v2289
    %v2323 = vunpack.c.l.b16 %v2290
    %v2324 = vpack.c.b16 %v2309, %v2308
    %v2325 = vpack.c.b16 %v2311, %v2310
    %v2326 = vpack.c.b16 %v2313, %v2312
    %v2327 = vpack.c.b16 %v2315, %v2314
    %v2328 = vpack.c.b16 %v2317, %v2316
    %v2329 = vpack.c.b16 %v2319, %v2318
    %v2330 = vpack.c.b16 %v2321, %v2320
    %v2331 = vpack.c.b16 %v2323, %v2322
    %2340 = vmatprep.subr.bf16.mxu0 0
    %2341 = vmatpush1.bf16.msra.mxu0 %v2331
    %2342 = vmatprep.subr.bf16.mxu0 0
    %2343 = vmatpush1.bf16.msra.mxu0 %v2330
    %2344 = vmatprep.subr.bf16.mxu0 0
    %2345 = vmatpush1.bf16.msra.mxu0 %v2329
    %2346 = vmatprep.subr.bf16.mxu0 0
    %2347 = vmatpush1.bf16.msra.mxu0 %v2328
    %2348 = vmatprep.subr.bf16.mxu0 0
    %2349 = vmatpush1.bf16.msra.mxu0 %v2327
    %2350 = vmatprep.subr.bf16.mxu0 0
    %2351 = vmatpush1.bf16.msra.mxu0 %v2326
    %2352 = vmatprep.subr.bf16.mxu0 0
    %2353 = vmatpush1.bf16.msra.mxu0 %v2325
    %2354 = vmatprep.subr.bf16.mxu0 0
    %2355 = vmatpush1.bf16.msra.mxu0 %v2324
    %2356 = vmatprep.subr.bf16.mxu0 0
    %2357 = vmatpush2.bf16.msra.mxu0 0
    %2358 = vmatprep.subr.bf16.mxu0 0
    %2359 = vmatpush2.bf16.msra.mxu0 0
    %2360 = vmatprep.subr.bf16.mxu0 0
    %2361 = vmatpush2.bf16.msra.mxu0 0
    %2362 = vmatprep.subr.bf16.mxu0 0
    %2363 = vmatpush2.bf16.msra.mxu0 0
    %2364 = vmatprep.subr.bf16.mxu0 0
    %2365 = vmatpush2.bf16.msra.mxu0 0
    %2366 = vmatprep.subr.bf16.mxu0 0
    %2367 = vmatpush2.bf16.msra.mxu0 0
    %2368 = vmatprep.subr.bf16.mxu0 0
    %2369 = vmatpush2.bf16.msra.mxu0 0
    %2370 = vmatprep.subr.bf16.mxu0 0
    %2371 = vmatpush2.bf16.msra.mxu0 0
    %2372 = vmatprep.mubr.bf16.mxu0 0
    %2373 = vmatmul.mubr.bf16.gmra.mxu0 %v2291
    %v2374 = vpop.f32.mrf.mxu0
    %v2375 = vadd.f32 0.0, %v2374
    %v2376 = vpop.f32.mrf.mxu0
    %v2377 = vpop.f32.mrf.mxu0
    %v2378 = vpop.f32.mrf.mxu0
    %2379 = vdwg.mxu0
    %v2380 = vadd.f32 %v2274, %v2375
    %v2381 = vld [vmem:[#allocation7 + $0x310] sm:$0xf]
    %v2382 = vld [vmem:[#allocation7 + $0x314] sm:$0xf]
    %v2383 = vld [vmem:[#allocation7 + $0x318] sm:$0xf]
    %v2384 = vld [vmem:[#allocation7 + $0x31c] sm:$0xf]
    %v2385 = vld [vmem:[#allocation7 + $0x320] sm:$0xf]
    %v2386 = vld [vmem:[#allocation7 + $0x324] sm:$0xf]
    %v2387 = vld [vmem:[#allocation7 + $0x328] sm:$0xf]
    %v2388 = vld [vmem:[#allocation7 + $0x32c] sm:$0xf]
    %v2389 = vld [vmem:[#allocation7 + $0x330] sm:$0xf]
    %v2390 = vld [vmem:[#allocation7 + $0x334] sm:$0xf]
    %v2391 = vld [vmem:[#allocation7 + $0x338] sm:$0xf]
    %v2392 = vld [vmem:[#allocation7 + $0x33c] sm:$0xf]
    %v2393 = vld [vmem:[#allocation7 + $0x340] sm:$0xf]
    %v2394 = vld [vmem:[#allocation7 + $0x344] sm:$0xf]
    %v2395 = vld [vmem:[#allocation7 + $0x348] sm:$0xf]
    %v2396 = vld [vmem:[#allocation7 + $0x34c] sm:$0xf]
    %v2397 = vpack.c.bf16 %v2264, %v2264
    %v2414 = vunpack.c.l.b16 %v2381
    %v2415 = vunpack.c.l.b16 %v2382
    %v2416 = vunpack.c.l.b16 %v2383
    %v2417 = vunpack.c.l.b16 %v2384
    %v2418 = vunpack.c.l.b16 %v2385
    %v2419 = vunpack.c.l.b16 %v2386
    %v2420 = vunpack.c.l.b16 %v2387
    %v2421 = vunpack.c.l.b16 %v2388
    %v2422 = vunpack.c.l.b16 %v2389
    %v2423 = vunpack.c.l.b16 %v2390
    %v2424 = vunpack.c.l.b16 %v2391
    %v2425 = vunpack.c.l.b16 %v2392
    %v2426 = vunpack.c.l.b16 %v2393
    %v2427 = vunpack.c.l.b16 %v2394
    %v2428 = vunpack.c.l.b16 %v2395
    %v2429 = vunpack.c.l.b16 %v2396
    %v2430 = vpack.c.b16 %v2415, %v2414
    %v2431 = vpack.c.b16 %v2417, %v2416
    %v2432 = vpack.c.b16 %v2419, %v2418
    %v2433 = vpack.c.b16 %v2421, %v2420
    %v2434 = vpack.c.b16 %v2423, %v2422
    %v2435 = vpack.c.b16 %v2425, %v2424
    %v2436 = vpack.c.b16 %v2427, %v2426
    %v2437 = vpack.c.b16 %v2429, %v2428
    %2446 = vmatprep.subr.bf16.mxu0 0
    %2447 = vmatpush1.bf16.msra.mxu0 %v2437
    %2448 = vmatprep.subr.bf16.mxu0 0
    %2449 = vmatpush1.bf16.msra.mxu0 %v2436
    %2450 = vmatprep.subr.bf16.mxu0 0
    %2451 = vmatpush1.bf16.msra.mxu0 %v2435
    %2452 = vmatprep.subr.bf16.mxu0 0
    %2453 = vmatpush1.bf16.msra.mxu0 %v2434
    %2454 = vmatprep.subr.bf16.mxu0 0
    %2455 = vmatpush1.bf16.msra.mxu0 %v2433
    %2456 = vmatprep.subr.bf16.mxu0 0
    %2457 = vmatpush1.bf16.msra.mxu0 %v2432
    %2458 = vmatprep.subr.bf16.mxu0 0
    %2459 = vmatpush1.bf16.msra.mxu0 %v2431
    %2460 = vmatprep.subr.bf16.mxu0 0
    %2461 = vmatpush1.bf16.msra.mxu0 %v2430
    %2462 = vmatprep.subr.bf16.mxu0 0
    %2463 = vmatpush2.bf16.msra.mxu0 0
    %2464 = vmatprep.subr.bf16.mxu0 0
    %2465 = vmatpush2.bf16.msra.mxu0 0
    %2466 = vmatprep.subr.bf16.mxu0 0
    %2467 = vmatpush2.bf16.msra.mxu0 0
    %2468 = vmatprep.subr.bf16.mxu0 0
    %2469 = vmatpush2.bf16.msra.mxu0 0
    %2470 = vmatprep.subr.bf16.mxu0 0
    %2471 = vmatpush2.bf16.msra.mxu0 0
    %2472 = vmatprep.subr.bf16.mxu0 0
    %2473 = vmatpush2.bf16.msra.mxu0 0
    %2474 = vmatprep.subr.bf16.mxu0 0
    %2475 = vmatpush2.bf16.msra.mxu0 0
    %2476 = vmatprep.subr.bf16.mxu0 0
    %2477 = vmatpush2.bf16.msra.mxu0 0
    %2478 = vmatprep.mubr.bf16.mxu0 0
    %2479 = vmatmul.mubr.bf16.gmra.mxu0 %v2397
    %v2480 = vpop.f32.mrf.mxu0
    %v2481 = vadd.f32 0.0, %v2480
    %v2482 = vpop.f32.mrf.mxu0
    %v2483 = vpop.f32.mrf.mxu0
    %v2484 = vpop.f32.mrf.mxu0
    %2485 = vdwg.mxu0
    %v2486 = vadd.f32 %v2380, %v2481
    %v2487 = vld [vmem:[#allocation7 + $0x350] sm:$0xf]
    %v2488 = vld [vmem:[#allocation7 + $0x354] sm:$0xf]
    %v2489 = vld [vmem:[#allocation7 + $0x358] sm:$0xf]
    %v2490 = vld [vmem:[#allocation7 + $0x35c] sm:$0xf]
    %v2491 = vld [vmem:[#allocation7 + $0x360] sm:$0xf]
    %v2492 = vld [vmem:[#allocation7 + $0x364] sm:$0xf]
    %v2493 = vld [vmem:[#allocation7 + $0x368] sm:$0xf]
    %v2494 = vld [vmem:[#allocation7 + $0x36c] sm:$0xf]
    %v2495 = vld [vmem:[#allocation7 + $0x370] sm:$0xf]
    %v2496 = vld [vmem:[#allocation7 + $0x374] sm:$0xf]
    %v2497 = vld [vmem:[#allocation7 + $0x378] sm:$0xf]
    %v2498 = vld [vmem:[#allocation7 + $0x37c] sm:$0xf]
    %v2499 = vld [vmem:[#allocation7 + $0x380] sm:$0xf]
    %v2500 = vld [vmem:[#allocation7 + $0x384] sm:$0xf]
    %v2501 = vld [vmem:[#allocation7 + $0x388] sm:$0xf]
    %v2502 = vld [vmem:[#allocation7 + $0x38c] sm:$0xf]
    %v2503 = vpack.c.bf16 %v2269, %v2269
    %v2520 = vunpack.c.l.b16 %v2487
    %v2521 = vunpack.c.l.b16 %v2488
    %v2522 = vunpack.c.l.b16 %v2489
    %v2523 = vunpack.c.l.b16 %v2490
    %v2524 = vunpack.c.l.b16 %v2491
    %v2525 = vunpack.c.l.b16 %v2492
    %v2526 = vunpack.c.l.b16 %v2493
    %v2527 = vunpack.c.l.b16 %v2494
    %v2528 = vunpack.c.l.b16 %v2495
    %v2529 = vunpack.c.l.b16 %v2496
    %v2530 = vunpack.c.l.b16 %v2497
    %v2531 = vunpack.c.l.b16 %v2498
    %v2532 = vunpack.c.l.b16 %v2499
    %v2533 = vunpack.c.l.b16 %v2500
    %v2534 = vunpack.c.l.b16 %v2501
    %v2535 = vunpack.c.l.b16 %v2502
    %v2536 = vpack.c.b16 %v2521, %v2520
    %v2537 = vpack.c.b16 %v2523, %v2522
    %v2538 = vpack.c.b16 %v2525, %v2524
    %v2539 = vpack.c.b16 %v2527, %v2526
    %v2540 = vpack.c.b16 %v2529, %v2528
    %v2541 = vpack.c.b16 %v2531, %v2530
    %v2542 = vpack.c.b16 %v2533, %v2532
    %v2543 = vpack.c.b16 %v2535, %v2534
    %2552 = vmatprep.subr.bf16.mxu0 0
    %2553 = vmatpush1.bf16.msra.mxu0 %v2543
    %2554 = vmatprep.subr.bf16.mxu0 0
    %2555 = vmatpush1.bf16.msra.mxu0 %v2542
    %2556 = vmatprep.subr.bf16.mxu0 0
    %2557 = vmatpush1.bf16.msra.mxu0 %v2541
    %2558 = vmatprep.subr.bf16.mxu0 0
    %2559 = vmatpush1.bf16.msra.mxu0 %v2540
    %2560 = vmatprep.subr.bf16.mxu0 0
    %2561 = vmatpush1.bf16.msra.mxu0 %v2539
    %2562 = vmatprep.subr.bf16.mxu0 0
    %2563 = vmatpush1.bf16.msra.mxu0 %v2538
    %2564 = vmatprep.subr.bf16.mxu0 0
    %2565 = vmatpush1.bf16.msra.mxu0 %v2537
    %2566 = vmatprep.subr.bf16.mxu0 0
    %2567 = vmatpush1.bf16.msra.mxu0 %v2536
    %2568 = vmatprep.subr.bf16.mxu0 0
    %2569 = vmatpush2.bf16.msra.mxu0 0
    %2570 = vmatprep.subr.bf16.mxu0 0
    %2571 = vmatpush2.bf16.msra.mxu0 0
    %2572 = vmatprep.subr.bf16.mxu0 0
    %2573 = vmatpush2.bf16.msra.mxu0 0
    %2574 = vmatprep.subr.bf16.mxu0 0
    %2575 = vmatpush2.bf16.msra.mxu0 0
    %2576 = vmatprep.subr.bf16.mxu0 0
    %2577 = vmatpush2.bf16.msra.mxu0 0
    %2578 = vmatprep.subr.bf16.mxu0 0
    %2579 = vmatpush2.bf16.msra.mxu0 0
    %2580 = vmatprep.subr.bf16.mxu0 0
    %2581 = vmatpush2.bf16.msra.mxu0 0
    %2582 = vmatprep.subr.bf16.mxu0 0
    %2583 = vmatpush2.bf16.msra.mxu0 0
    %2584 = vmatprep.mubr.bf16.mxu0 0
    %2585 = vmatmul.mubr.bf16.gmra.mxu0 %v2503
    %v2586 = vpop.f32.mrf.mxu0
    %v2587 = vadd.f32 0.0, %v2586
    %v2588 = vpop.f32.mrf.mxu0
    %v2589 = vpop.f32.mrf.mxu0
    %v2590 = vpop.f32.mrf.mxu0
    %2591 = vdwg.mxu0
    %v2592 = vadd.f32 %v2486, %v2587
    %vm2593 = vcmp.gt.f32.partialorder %v2592, 0.0
    %v2594 = vmin.f32 %v2592, 0.0
    %v2595 = vmul.f32 %v2594, 1.442695
    %v2596 = vpow.pop %v2595
    %v2597 = vsub.f32 %v2596, 1.0
    %v2598 = vsel %vm2593, %v2592, %v2597
    %v2599 = vld [vmem:[#allocation5 + $0x51] ss:$0 sm:$0xff]
    %v2600 = vld [vmem:[#allocation7 + $0x390] sm:$0xf]
    %v2601 = vld [vmem:[#allocation7 + $0x394] sm:$0xf]
    %v2602 = vld [vmem:[#allocation7 + $0x398] sm:$0xf]
    %v2603 = vld [vmem:[#allocation7 + $0x39c] sm:$0xf]
    %v2604 = vld [vmem:[#allocation7 + $0x3a0] sm:$0xf]
    %v2605 = vld [vmem:[#allocation7 + $0x3a4] sm:$0xf]
    %v2606 = vld [vmem:[#allocation7 + $0x3a8] sm:$0xf]
    %v2607 = vld [vmem:[#allocation7 + $0x3ac] sm:$0xf]
    %v2608 = vld [vmem:[#allocation7 + $0x3b0] sm:$0xf]
    %v2609 = vld [vmem:[#allocation7 + $0x3b4] sm:$0xf]
    %v2610 = vld [vmem:[#allocation7 + $0x3b8] sm:$0xf]
    %v2611 = vld [vmem:[#allocation7 + $0x3bc] sm:$0xf]
    %v2612 = vld [vmem:[#allocation7 + $0x3c0] sm:$0xf]
    %v2613 = vld [vmem:[#allocation7 + $0x3c4] sm:$0xf]
    %v2614 = vld [vmem:[#allocation7 + $0x3c8] sm:$0xf]
    %v2615 = vld [vmem:[#allocation7 + $0x3cc] sm:$0xf]
    %v2616 = vpack.c.bf16 %v2598, %v2598
    %v2633 = vunpack.c.l.b16 %v2600
    %v2634 = vunpack.c.l.b16 %v2601
    %v2635 = vunpack.c.l.b16 %v2602
    %v2636 = vunpack.c.l.b16 %v2603
    %v2637 = vunpack.c.l.b16 %v2604
    %v2638 = vunpack.c.l.b16 %v2605
    %v2639 = vunpack.c.l.b16 %v2606
    %v2640 = vunpack.c.l.b16 %v2607
    %v2641 = vunpack.c.l.b16 %v2608
    %v2642 = vunpack.c.l.b16 %v2609
    %v2643 = vunpack.c.l.b16 %v2610
    %v2644 = vunpack.c.l.b16 %v2611
    %v2645 = vunpack.c.l.b16 %v2612
    %v2646 = vunpack.c.l.b16 %v2613
    %v2647 = vunpack.c.l.b16 %v2614
    %v2648 = vunpack.c.l.b16 %v2615
    %v2649 = vpack.c.b16 %v2634, %v2633
    %v2650 = vpack.c.b16 %v2636, %v2635
    %v2651 = vpack.c.b16 %v2638, %v2637
    %v2652 = vpack.c.b16 %v2640, %v2639
    %v2653 = vpack.c.b16 %v2642, %v2641
    %v2654 = vpack.c.b16 %v2644, %v2643
    %v2655 = vpack.c.b16 %v2646, %v2645
    %v2656 = vpack.c.b16 %v2648, %v2647
    %2665 = vmatprep.subr.bf16.mxu0 0
    %2666 = vmatpush1.bf16.msra.mxu0 %v2656
    %2667 = vmatprep.subr.bf16.mxu0 0
    %2668 = vmatpush1.bf16.msra.mxu0 %v2655
    %2669 = vmatprep.subr.bf16.mxu0 0
    %2670 = vmatpush1.bf16.msra.mxu0 %v2654
    %2671 = vmatprep.subr.bf16.mxu0 0
    %2672 = vmatpush1.bf16.msra.mxu0 %v2653
    %2673 = vmatprep.subr.bf16.mxu0 0
    %2674 = vmatpush1.bf16.msra.mxu0 %v2652
    %2675 = vmatprep.subr.bf16.mxu0 0
    %2676 = vmatpush1.bf16.msra.mxu0 %v2651
    %2677 = vmatprep.subr.bf16.mxu0 0
    %2678 = vmatpush1.bf16.msra.mxu0 %v2650
    %2679 = vmatprep.subr.bf16.mxu0 0
    %2680 = vmatpush1.bf16.msra.mxu0 %v2649
    %2681 = vmatprep.subr.bf16.mxu0 0
    %2682 = vmatpush2.bf16.msra.mxu0 0
    %2683 = vmatprep.subr.bf16.mxu0 0
    %2684 = vmatpush2.bf16.msra.mxu0 0
    %2685 = vmatprep.subr.bf16.mxu0 0
    %2686 = vmatpush2.bf16.msra.mxu0 0
    %2687 = vmatprep.subr.bf16.mxu0 0
    %2688 = vmatpush2.bf16.msra.mxu0 0
    %2689 = vmatprep.subr.bf16.mxu0 0
    %2690 = vmatpush2.bf16.msra.mxu0 0
    %2691 = vmatprep.subr.bf16.mxu0 0
    %2692 = vmatpush2.bf16.msra.mxu0 0
    %2693 = vmatprep.subr.bf16.mxu0 0
    %2694 = vmatpush2.bf16.msra.mxu0 0
    %2695 = vmatprep.subr.bf16.mxu0 0
    %2696 = vmatpush2.bf16.msra.mxu0 0
    %2697 = vmatprep.mubr.bf16.mxu0 0
    %2698 = vmatmul.mubr.bf16.gmra.mxu0 %v2616
    %v2699 = vpop.f32.mrf.mxu0
    %v2700 = vadd.f32 0.0, %v2699
    %v2701 = vpop.f32.mrf.mxu0
    %v2702 = vpop.f32.mrf.mxu0
    %v2703 = vpop.f32.mrf.mxu0
    %2704 = vdwg.mxu0
    %v2705 = vadd.f32 %v2599, %v2700
    %v2706 = vld [vmem:[#allocation7 + $0x3d0] sm:$0xf]
    %v2707 = vld [vmem:[#allocation7 + $0x3d4] sm:$0xf]
    %v2708 = vld [vmem:[#allocation7 + $0x3d8] sm:$0xf]
    %v2709 = vld [vmem:[#allocation7 + $0x3dc] sm:$0xf]
    %v2710 = vld [vmem:[#allocation7 + $0x3e0] sm:$0xf]
    %v2711 = vld [vmem:[#allocation7 + $0x3e4] sm:$0xf]
    %v2712 = vld [vmem:[#allocation7 + $0x3e8] sm:$0xf]
    %v2713 = vld [vmem:[#allocation7 + $0x3ec] sm:$0xf]
    %v2714 = vld [vmem:[#allocation7 + $0x3f0] sm:$0xf]
    %v2715 = vld [vmem:[#allocation7 + $0x3f4] sm:$0xf]
    %v2716 = vld [vmem:[#allocation7 + $0x3f8] sm:$0xf]
    %v2717 = vld [vmem:[#allocation7 + $0x3fc] sm:$0xf]
    %v2718 = vld [vmem:[#allocation7 + $0x400] sm:$0xf]
    %v2719 = vld [vmem:[#allocation7 + $0x404] sm:$0xf]
    %v2720 = vld [vmem:[#allocation7 + $0x408] sm:$0xf]
    %v2721 = vld [vmem:[#allocation7 + $0x40c] sm:$0xf]
    %v2723 = vrot.slane %v2616, 1
    %v2741 = vunpack.c.l.b16 %v2706
    %v2742 = vunpack.c.l.b16 %v2707
    %v2743 = vunpack.c.l.b16 %v2708
    %v2744 = vunpack.c.l.b16 %v2709
    %v2745 = vunpack.c.l.b16 %v2710
    %v2746 = vunpack.c.l.b16 %v2711
    %v2747 = vunpack.c.l.b16 %v2712
    %v2748 = vunpack.c.l.b16 %v2713
    %v2749 = vunpack.c.l.b16 %v2714
    %v2750 = vunpack.c.l.b16 %v2715
    %v2751 = vunpack.c.l.b16 %v2716
    %v2752 = vunpack.c.l.b16 %v2717
    %v2753 = vunpack.c.l.b16 %v2718
    %v2754 = vunpack.c.l.b16 %v2719
    %v2755 = vunpack.c.l.b16 %v2720
    %v2756 = vunpack.c.l.b16 %v2721
    %v2757 = vpack.c.b16 %v2742, %v2741
    %v2758 = vpack.c.b16 %v2744, %v2743
    %v2759 = vpack.c.b16 %v2746, %v2745
    %v2760 = vpack.c.b16 %v2748, %v2747
    %v2761 = vpack.c.b16 %v2750, %v2749
    %v2762 = vpack.c.b16 %v2752, %v2751
    %v2763 = vpack.c.b16 %v2754, %v2753
    %v2764 = vpack.c.b16 %v2756, %v2755
    %2773 = vmatprep.subr.bf16.mxu0 0
    %2774 = vmatpush1.bf16.msra.mxu0 %v2764
    %2775 = vmatprep.subr.bf16.mxu0 0
    %2776 = vmatpush1.bf16.msra.mxu0 %v2763
    %2777 = vmatprep.subr.bf16.mxu0 0
    %2778 = vmatpush1.bf16.msra.mxu0 %v2762
    %2779 = vmatprep.subr.bf16.mxu0 0
    %2780 = vmatpush1.bf16.msra.mxu0 %v2761
    %2781 = vmatprep.subr.bf16.mxu0 0
    %2782 = vmatpush1.bf16.msra.mxu0 %v2760
    %2783 = vmatprep.subr.bf16.mxu0 0
    %2784 = vmatpush1.bf16.msra.mxu0 %v2759
    %2785 = vmatprep.subr.bf16.mxu0 0
    %2786 = vmatpush1.bf16.msra.mxu0 %v2758
    %2787 = vmatprep.subr.bf16.mxu0 0
    %2788 = vmatpush1.bf16.msra.mxu0 %v2757
    %2789 = vmatprep.subr.bf16.mxu0 0
    %2790 = vmatpush2.bf16.msra.mxu0 0
    %2791 = vmatprep.subr.bf16.mxu0 0
    %2792 = vmatpush2.bf16.msra.mxu0 0
    %2793 = vmatprep.subr.bf16.mxu0 0
    %2794 = vmatpush2.bf16.msra.mxu0 0
    %2795 = vmatprep.subr.bf16.mxu0 0
    %2796 = vmatpush2.bf16.msra.mxu0 0
    %2797 = vmatprep.subr.bf16.mxu0 0
    %2798 = vmatpush2.bf16.msra.mxu0 0
    %2799 = vmatprep.subr.bf16.mxu0 0
    %2800 = vmatpush2.bf16.msra.mxu0 0
    %2801 = vmatprep.subr.bf16.mxu0 0
    %2802 = vmatpush2.bf16.msra.mxu0 0
    %2803 = vmatprep.subr.bf16.mxu0 0
    %2804 = vmatpush2.bf16.msra.mxu0 0
    %2805 = vmatprep.mubr.bf16.mxu0 0
    %2806 = vmatmul.mubr.bf16.gmra.mxu0 %v2723
    %v2807 = vpop.f32.mrf.mxu0
    %v2808 = vadd.f32 0.0, %v2807
    %v2809 = vpop.f32.mrf.mxu0
    %v2810 = vpop.f32.mrf.mxu0
    %v2811 = vpop.f32.mrf.mxu0
    %2812 = vdwg.mxu0
    %v2813 = vadd.f32 %v2705, %v2808
    %v2814 = vld [vmem:[#allocation7 + $0x410] sm:$0xf]
    %v2815 = vld [vmem:[#allocation7 + $0x414] sm:$0xf]
    %v2816 = vld [vmem:[#allocation7 + $0x418] sm:$0xf]
    %v2817 = vld [vmem:[#allocation7 + $0x41c] sm:$0xf]
    %v2818 = vld [vmem:[#allocation7 + $0x420] sm:$0xf]
    %v2819 = vld [vmem:[#allocation7 + $0x424] sm:$0xf]
    %v2820 = vld [vmem:[#allocation7 + $0x428] sm:$0xf]
    %v2821 = vld [vmem:[#allocation7 + $0x42c] sm:$0xf]
    %v2822 = vld [vmem:[#allocation7 + $0x430] sm:$0xf]
    %v2823 = vld [vmem:[#allocation7 + $0x434] sm:$0xf]
    %v2824 = vld [vmem:[#allocation7 + $0x438] sm:$0xf]
    %v2825 = vld [vmem:[#allocation7 + $0x43c] sm:$0xf]
    %v2826 = vld [vmem:[#allocation7 + $0x440] sm:$0xf]
    %v2827 = vld [vmem:[#allocation7 + $0x444] sm:$0xf]
    %v2828 = vld [vmem:[#allocation7 + $0x448] sm:$0xf]
    %v2829 = vld [vmem:[#allocation7 + $0x44c] sm:$0xf]
    %v2830 = vrot.slane %v2616, 2
    %v2848 = vunpack.c.l.b16 %v2814
    %v2849 = vunpack.c.l.b16 %v2815
    %v2850 = vunpack.c.l.b16 %v2816
    %v2851 = vunpack.c.l.b16 %v2817
    %v2852 = vunpack.c.l.b16 %v2818
    %v2853 = vunpack.c.l.b16 %v2819
    %v2854 = vunpack.c.l.b16 %v2820
    %v2855 = vunpack.c.l.b16 %v2821
    %v2856 = vunpack.c.l.b16 %v2822
    %v2857 = vunpack.c.l.b16 %v2823
    %v2858 = vunpack.c.l.b16 %v2824
    %v2859 = vunpack.c.l.b16 %v2825
    %v2860 = vunpack.c.l.b16 %v2826
    %v2861 = vunpack.c.l.b16 %v2827
    %v2862 = vunpack.c.l.b16 %v2828
    %v2863 = vunpack.c.l.b16 %v2829
    %v2864 = vpack.c.b16 %v2849, %v2848
    %v2865 = vpack.c.b16 %v2851, %v2850
    %v2866 = vpack.c.b16 %v2853, %v2852
    %v2867 = vpack.c.b16 %v2855, %v2854
    %v2868 = vpack.c.b16 %v2857, %v2856
    %v2869 = vpack.c.b16 %v2859, %v2858
    %v2870 = vpack.c.b16 %v2861, %v2860
    %v2871 = vpack.c.b16 %v2863, %v2862
    %2880 = vmatprep.subr.bf16.mxu0 0
    %2881 = vmatpush1.bf16.msra.mxu0 %v2871
    %2882 = vmatprep.subr.bf16.mxu0 0
    %2883 = vmatpush1.bf16.msra.mxu0 %v2870
    %2884 = vmatprep.subr.bf16.mxu0 0
    %2885 = vmatpush1.bf16.msra.mxu0 %v2869
    %2886 = vmatprep.subr.bf16.mxu0 0
    %2887 = vmatpush1.bf16.msra.mxu0 %v2868
    %2888 = vmatprep.subr.bf16.mxu0 0
    %2889 = vmatpush1.bf16.msra.mxu0 %v2867
    %2890 = vmatprep.subr.bf16.mxu0 0
    %2891 = vmatpush1.bf16.msra.mxu0 %v2866
    %2892 = vmatprep.subr.bf16.mxu0 0
    %2893 = vmatpush1.bf16.msra.mxu0 %v2865
    %2894 = vmatprep.subr.bf16.mxu0 0
    %2895 = vmatpush1.bf16.msra.mxu0 %v2864
    %2896 = vmatprep.subr.bf16.mxu0 0
    %2897 = vmatpush2.bf16.msra.mxu0 0
    %2898 = vmatprep.subr.bf16.mxu0 0
    %2899 = vmatpush2.bf16.msra.mxu0 0
    %2900 = vmatprep.subr.bf16.mxu0 0
    %2901 = vmatpush2.bf16.msra.mxu0 0
    %2902 = vmatprep.subr.bf16.mxu0 0
    %2903 = vmatpush2.bf16.msra.mxu0 0
    %2904 = vmatprep.subr.bf16.mxu0 0
    %2905 = vmatpush2.bf16.msra.mxu0 0
    %2906 = vmatprep.subr.bf16.mxu0 0
    %2907 = vmatpush2.bf16.msra.mxu0 0
    %2908 = vmatprep.subr.bf16.mxu0 0
    %2909 = vmatpush2.bf16.msra.mxu0 0
    %2910 = vmatprep.subr.bf16.mxu0 0
    %2911 = vmatpush2.bf16.msra.mxu0 0
    %2912 = vmatprep.mubr.bf16.mxu0 0
    %2913 = vmatmul.mubr.bf16.gmra.mxu0 %v2830
    %v2914 = vpop.f32.mrf.mxu0
    %v2915 = vadd.f32 0.0, %v2914
    %v2916 = vpop.f32.mrf.mxu0
    %v2917 = vpop.f32.mrf.mxu0
    %v2918 = vpop.f32.mrf.mxu0
    %2919 = vdwg.mxu0
    %v2920 = vadd.f32 %v2813, %v2915
    %v2921 = vld [vmem:[#allocation7 + $0x450] sm:$0xf]
    %v2922 = vld [vmem:[#allocation7 + $0x454] sm:$0xf]
    %v2923 = vld [vmem:[#allocation7 + $0x458] sm:$0xf]
    %v2924 = vld [vmem:[#allocation7 + $0x45c] sm:$0xf]
    %v2925 = vld [vmem:[#allocation7 + $0x460] sm:$0xf]
    %v2926 = vld [vmem:[#allocation7 + $0x464] sm:$0xf]
    %v2927 = vld [vmem:[#allocation7 + $0x468] sm:$0xf]
    %v2928 = vld [vmem:[#allocation7 + $0x46c] sm:$0xf]
    %v2929 = vld [vmem:[#allocation7 + $0x470] sm:$0xf]
    %v2930 = vld [vmem:[#allocation7 + $0x474] sm:$0xf]
    %v2931 = vld [vmem:[#allocation7 + $0x478] sm:$0xf]
    %v2932 = vld [vmem:[#allocation7 + $0x47c] sm:$0xf]
    %v2933 = vld [vmem:[#allocation7 + $0x480] sm:$0xf]
    %v2934 = vld [vmem:[#allocation7 + $0x484] sm:$0xf]
    %v2935 = vld [vmem:[#allocation7 + $0x488] sm:$0xf]
    %v2936 = vld [vmem:[#allocation7 + $0x48c] sm:$0xf]
    %v2937 = vrot.slane %v2616, 3
    %v2955 = vunpack.c.l.b16 %v2921
    %v2956 = vunpack.c.l.b16 %v2922
    %v2957 = vunpack.c.l.b16 %v2923
    %v2958 = vunpack.c.l.b16 %v2924
    %v2959 = vunpack.c.l.b16 %v2925
    %v2960 = vunpack.c.l.b16 %v2926
    %v2961 = vunpack.c.l.b16 %v2927
    %v2962 = vunpack.c.l.b16 %v2928
    %v2963 = vunpack.c.l.b16 %v2929
    %v2964 = vunpack.c.l.b16 %v2930
    %v2965 = vunpack.c.l.b16 %v2931
    %v2966 = vunpack.c.l.b16 %v2932
    %v2967 = vunpack.c.l.b16 %v2933
    %v2968 = vunpack.c.l.b16 %v2934
    %v2969 = vunpack.c.l.b16 %v2935
    %v2970 = vunpack.c.l.b16 %v2936
    %v2971 = vpack.c.b16 %v2956, %v2955
    %v2972 = vpack.c.b16 %v2958, %v2957
    %v2973 = vpack.c.b16 %v2960, %v2959
    %v2974 = vpack.c.b16 %v2962, %v2961
    %v2975 = vpack.c.b16 %v2964, %v2963
    %v2976 = vpack.c.b16 %v2966, %v2965
    %v2977 = vpack.c.b16 %v2968, %v2967
    %v2978 = vpack.c.b16 %v2970, %v2969
    %2987 = vmatprep.subr.bf16.mxu0 0
    %2988 = vmatpush1.bf16.msra.mxu0 %v2978
    %2989 = vmatprep.subr.bf16.mxu0 0
    %2990 = vmatpush1.bf16.msra.mxu0 %v2977
    %2991 = vmatprep.subr.bf16.mxu0 0
    %2992 = vmatpush1.bf16.msra.mxu0 %v2976
    %2993 = vmatprep.subr.bf16.mxu0 0
    %2994 = vmatpush1.bf16.msra.mxu0 %v2975
    %2995 = vmatprep.subr.bf16.mxu0 0
    %2996 = vmatpush1.bf16.msra.mxu0 %v2974
    %2997 = vmatprep.subr.bf16.mxu0 0
    %2998 = vmatpush1.bf16.msra.mxu0 %v2973
    %2999 = vmatprep.subr.bf16.mxu0 0
    %3000 = vmatpush1.bf16.msra.mxu0 %v2972
    %3001 = vmatprep.subr.bf16.mxu0 0
    %3002 = vmatpush1.bf16.msra.mxu0 %v2971
    %3003 = vmatprep.subr.bf16.mxu0 0
    %3004 = vmatpush2.bf16.msra.mxu0 0
    %3005 = vmatprep.subr.bf16.mxu0 0
    %3006 = vmatpush2.bf16.msra.mxu0 0
    %3007 = vmatprep.subr.bf16.mxu0 0
    %3008 = vmatpush2.bf16.msra.mxu0 0
    %3009 = vmatprep.subr.bf16.mxu0 0
    %3010 = vmatpush2.bf16.msra.mxu0 0
    %3011 = vmatprep.subr.bf16.mxu0 0
    %3012 = vmatpush2.bf16.msra.mxu0 0
    %3013 = vmatprep.subr.bf16.mxu0 0
    %3014 = vmatpush2.bf16.msra.mxu0 0
    %3015 = vmatprep.subr.bf16.mxu0 0
    %3016 = vmatpush2.bf16.msra.mxu0 0
    %3017 = vmatprep.subr.bf16.mxu0 0
    %3018 = vmatpush2.bf16.msra.mxu0 0
    %3019 = vmatprep.mubr.bf16.mxu0 0
    %3020 = vmatmul.mubr.bf16.gmra.mxu0 %v2937
    %v3021 = vpop.f32.mrf.mxu0
    %v3022 = vadd.f32 0.0, %v3021
    %v3023 = vpop.f32.mrf.mxu0
    %v3024 = vpop.f32.mrf.mxu0
    %v3025 = vpop.f32.mrf.mxu0
    %3026 = vdwg.mxu0
    %v3027 = vadd.f32 %v2920, %v3022
    %v3028 = vld [vmem:[#allocation7 + $0x80] sm:$0xf]
    %v3029 = vld [vmem:[#allocation7 + $0x84] sm:$0xf]
    %v3030 = vld [vmem:[#allocation7 + $0x88] sm:$0xf]
    %v3031 = vld [vmem:[#allocation7 + $0x8c] sm:$0xf]
    %v3032 = vld [vmem:[#allocation7 + $0x90] sm:$0xf]
    %v3033 = vld [vmem:[#allocation7 + $0x94] sm:$0xf]
    %v3034 = vld [vmem:[#allocation7 + $0x98] sm:$0xf]
    %v3035 = vld [vmem:[#allocation7 + $0x9c] sm:$0xf]
    %v3036 = vld [vmem:[#allocation7 + $0xa0] sm:$0xf]
    %v3037 = vld [vmem:[#allocation7 + $0xa4] sm:$0xf]
    %v3038 = vld [vmem:[#allocation7 + $0xa8] sm:$0xf]
    %v3039 = vld [vmem:[#allocation7 + $0xac] sm:$0xf]
    %v3040 = vld [vmem:[#allocation7 + $0xb0] sm:$0xf]
    %v3041 = vld [vmem:[#allocation7 + $0xb4] sm:$0xf]
    %v3042 = vld [vmem:[#allocation7 + $0xb8] sm:$0xf]
    %v3043 = vld [vmem:[#allocation7 + $0xbc] sm:$0xf]
    %v3044 = vpack.c.bf16 %v407, %v407
    %v3045 = vld [vmem:[#allocation7 + $0xc0] sm:$0xf]
    %v3046 = vld [vmem:[#allocation7 + $0xc4] sm:$0xf]
    %v3047 = vld [vmem:[#allocation7 + $0xc8] sm:$0xf]
    %v3048 = vld [vmem:[#allocation7 + $0xcc] sm:$0xf]
    %v3049 = vld [vmem:[#allocation7 + $0xd0] sm:$0xf]
    %v3050 = vld [vmem:[#allocation7 + $0xd4] sm:$0xf]
    %v3051 = vld [vmem:[#allocation7 + $0xd8] sm:$0xf]
    %v3052 = vld [vmem:[#allocation7 + $0xdc] sm:$0xf]
    %v3053 = vld [vmem:[#allocation7 + $0xe0] sm:$0xf]
    %v3054 = vld [vmem:[#allocation7 + $0xe4] sm:$0xf]
    %v3055 = vld [vmem:[#allocation7 + $0xe8] sm:$0xf]
    %v3056 = vld [vmem:[#allocation7 + $0xec] sm:$0xf]
    %v3057 = vld [vmem:[#allocation7 + $0xf0] sm:$0xf]
    %v3058 = vld [vmem:[#allocation7 + $0xf4] sm:$0xf]
    %v3059 = vld [vmem:[#allocation7 + $0xf8] sm:$0xf]
    %v3060 = vld [vmem:[#allocation7 + $0xfc] sm:$0xf]
    %v3061 = vpack.c.bf16 %v3027, %v3027
    %v3078 = vunpack.c.l.b16 %v3045
    %v3079 = vunpack.c.l.b16 %v3046
    %v3080 = vunpack.c.l.b16 %v3047
    %v3081 = vunpack.c.l.b16 %v3048
    %v3082 = vunpack.c.l.b16 %v3049
    %v3083 = vunpack.c.l.b16 %v3050
    %v3084 = vunpack.c.l.b16 %v3051
    %v3085 = vunpack.c.l.b16 %v3052
    %v3086 = vunpack.c.l.b16 %v3053
    %v3087 = vunpack.c.l.b16 %v3054
    %v3088 = vunpack.c.l.b16 %v3055
    %v3089 = vunpack.c.l.b16 %v3056
    %v3090 = vunpack.c.l.b16 %v3057
    %v3091 = vunpack.c.l.b16 %v3058
    %v3092 = vunpack.c.l.b16 %v3059
    %v3093 = vunpack.c.l.b16 %v3060
    %v3094 = vpack.c.b16 %v3079, %v3078
    %v3095 = vpack.c.b16 %v3081, %v3080
    %v3096 = vpack.c.b16 %v3083, %v3082
    %v3097 = vpack.c.b16 %v3085, %v3084
    %v3098 = vpack.c.b16 %v3087, %v3086
    %v3099 = vpack.c.b16 %v3089, %v3088
    %v3100 = vpack.c.b16 %v3091, %v3090
    %v3101 = vpack.c.b16 %v3093, %v3092
    %3110 = vmatprep.subr.bf16.mxu0 0
    %3111 = vmatpush1.bf16.msra.mxu0 %v3101
    %3112 = vmatprep.subr.bf16.mxu0 0
    %3113 = vmatpush1.bf16.msra.mxu0 %v3100
    %3114 = vmatprep.subr.bf16.mxu0 0
    %3115 = vmatpush1.bf16.msra.mxu0 %v3099
    %3116 = vmatprep.subr.bf16.mxu0 0
    %3117 = vmatpush1.bf16.msra.mxu0 %v3098
    %3118 = vmatprep.subr.bf16.mxu0 0
    %3119 = vmatpush1.bf16.msra.mxu0 %v3097
    %3120 = vmatprep.subr.bf16.mxu0 0
    %3121 = vmatpush1.bf16.msra.mxu0 %v3096
    %3122 = vmatprep.subr.bf16.mxu0 0
    %3123 = vmatpush1.bf16.msra.mxu0 %v3095
    %3124 = vmatprep.subr.bf16.mxu0 0
    %3125 = vmatpush1.bf16.msra.mxu0 %v3094
    %3126 = vmatprep.subr.bf16.mxu0 0
    %3127 = vmatpush2.bf16.msra.mxu0 0
    %3128 = vmatprep.subr.bf16.mxu0 0
    %3129 = vmatpush2.bf16.msra.mxu0 0
    %3130 = vmatprep.subr.bf16.mxu0 0
    %3131 = vmatpush2.bf16.msra.mxu0 0
    %3132 = vmatprep.subr.bf16.mxu0 0
    %3133 = vmatpush2.bf16.msra.mxu0 0
    %3134 = vmatprep.subr.bf16.mxu0 0
    %3135 = vmatpush2.bf16.msra.mxu0 0
    %3136 = vmatprep.subr.bf16.mxu0 0
    %3137 = vmatpush2.bf16.msra.mxu0 0
    %3138 = vmatprep.subr.bf16.mxu0 0
    %3139 = vmatpush2.bf16.msra.mxu0 0
    %3140 = vmatprep.subr.bf16.mxu0 0
    %3141 = vmatpush2.bf16.msra.mxu0 0
    %3142 = vmatprep.mubr.bf16.mxu0 0
    %3143 = vmatmul.mubr.bf16.gmra.mxu0 %v3061
    %v3144 = vpop.f32.mrf.mxu0
    %v3145 = vadd.f32 0.0, %v3144
    %v3146 = vpop.f32.mrf.mxu0
    %v3147 = vpop.f32.mrf.mxu0
    %v3148 = vpop.f32.mrf.mxu0
    %3149 = vdwg.mxu0
    %v3166 = vunpack.c.l.b16 %v3028
    %v3167 = vunpack.c.l.b16 %v3029
    %v3168 = vunpack.c.l.b16 %v3030
    %v3169 = vunpack.c.l.b16 %v3031
    %v3170 = vunpack.c.l.b16 %v3032
    %v3171 = vunpack.c.l.b16 %v3033
    %v3172 = vunpack.c.l.b16 %v3034
    %v3173 = vunpack.c.l.b16 %v3035
    %v3174 = vunpack.c.l.b16 %v3036
    %v3175 = vunpack.c.l.b16 %v3037
    %v3176 = vunpack.c.l.b16 %v3038
    %v3177 = vunpack.c.l.b16 %v3039
    %v3178 = vunpack.c.l.b16 %v3040
    %v3179 = vunpack.c.l.b16 %v3041
    %v3180 = vunpack.c.l.b16 %v3042
    %v3181 = vunpack.c.l.b16 %v3043
    %v3182 = vpack.c.b16 %v3167, %v3166
    %v3183 = vpack.c.b16 %v3169, %v3168
    %v3184 = vpack.c.b16 %v3171, %v3170
    %v3185 = vpack.c.b16 %v3173, %v3172
    %v3186 = vpack.c.b16 %v3175, %v3174
    %v3187 = vpack.c.b16 %v3177, %v3176
    %v3188 = vpack.c.b16 %v3179, %v3178
    %v3189 = vpack.c.b16 %v3181, %v3180
    %3198 = vmatprep.subr.bf16.mxu0 0
    %3199 = vmatpush1.bf16.msra.mxu0 %v3189
    %3200 = vmatprep.subr.bf16.mxu0 0
    %3201 = vmatpush1.bf16.msra.mxu0 %v3188
    %3202 = vmatprep.subr.bf16.mxu0 0
    %3203 = vmatpush1.bf16.msra.mxu0 %v3187
    %3204 = vmatprep.subr.bf16.mxu0 0
    %3205 = vmatpush1.bf16.msra.mxu0 %v3186
    %3206 = vmatprep.subr.bf16.mxu0 0
    %3207 = vmatpush1.bf16.msra.mxu0 %v3185
    %3208 = vmatprep.subr.bf16.mxu0 0
    %3209 = vmatpush1.bf16.msra.mxu0 %v3184
    %3210 = vmatprep.subr.bf16.mxu0 0
    %3211 = vmatpush1.bf16.msra.mxu0 %v3183
    %3212 = vmatprep.subr.bf16.mxu0 0
    %3213 = vmatpush1.bf16.msra.mxu0 %v3182
    %3214 = vmatprep.subr.bf16.mxu0 0
    %3215 = vmatpush2.bf16.msra.mxu0 0
    %3216 = vmatprep.subr.bf16.mxu0 0
    %3217 = vmatpush2.bf16.msra.mxu0 0
    %3218 = vmatprep.subr.bf16.mxu0 0
    %3219 = vmatpush2.bf16.msra.mxu0 0
    %3220 = vmatprep.subr.bf16.mxu0 0
    %3221 = vmatpush2.bf16.msra.mxu0 0
    %3222 = vmatprep.subr.bf16.mxu0 0
    %3223 = vmatpush2.bf16.msra.mxu0 0
    %3224 = vmatprep.subr.bf16.mxu0 0
    %3225 = vmatpush2.bf16.msra.mxu0 0
    %3226 = vmatprep.subr.bf16.mxu0 0
    %3227 = vmatpush2.bf16.msra.mxu0 0
    %3228 = vmatprep.subr.bf16.mxu0 0
    %3229 = vmatpush2.bf16.msra.mxu0 0
    %3230 = vmatprep.mubr.bf16.mxu0 0
    %3231 = vmatmul.mubr.bf16.gmra.mxu0 %v3044
    %v3232 = vpop.f32.mrf.mxu0
    %v3233 = vadd.f32 %v3145, %v3232
    %v3234 = vpop.f32.mrf.mxu0
    %v3235 = vpop.f32.mrf.mxu0
    %v3236 = vpop.f32.mrf.mxu0
    %3237 = vdwg.mxu0
    %v3238 = vld [vmem:[#allocation5 + $0x52] ss:$0 sm:$0xff]
    %v3239 = vadd.f32 %v3233, %v3238
    %vm3240 = vcmp.gt.f32.partialorder %v3239, 0.0
    %v3241 = vmin.f32 %v3239, 0.0
    %v3242 = vmul.f32 %v3241, 1.442695
    %v3243 = vpow.pop %v3242
    %v3244 = vsub.f32 %v3243, 1.0
    %v3245 = vsel %vm3240, %v3239, %v3244
    %v3246 = vld [vmem:[#allocation7 + $0x100] sm:$0xf]
    %v3247 = vld [vmem:[#allocation7 + $0x104] sm:$0xf]
    %v3248 = vld [vmem:[#allocation7 + $0x108] sm:$0xf]
    %v3249 = vld [vmem:[#allocation7 + $0x10c] sm:$0xf]
    %v3250 = vld [vmem:[#allocation7 + $0x110] sm:$0xf]
    %v3251 = vld [vmem:[#allocation7 + $0x114] sm:$0xf]
    %v3252 = vld [vmem:[#allocation7 + $0x118] sm:$0xf]
    %v3253 = vld [vmem:[#allocation7 + $0x11c] sm:$0xf]
    %v3254 = vld [vmem:[#allocation7 + $0x120] sm:$0xf]
    %v3255 = vld [vmem:[#allocation7 + $0x124] sm:$0xf]
    %v3256 = vld [vmem:[#allocation7 + $0x128] sm:$0xf]
    %v3257 = vld [vmem:[#allocation7 + $0x12c] sm:$0xf]
    %v3258 = vld [vmem:[#allocation7 + $0x130] sm:$0xf]
    %v3259 = vld [vmem:[#allocation7 + $0x134] sm:$0xf]
    %v3260 = vld [vmem:[#allocation7 + $0x138] sm:$0xf]
    %v3261 = vld [vmem:[#allocation7 + $0x13c] sm:$0xf]
    %v3262 = vpack.c.bf16 %v3245, %v3245
    %v3263 = vld [vmem:[#allocation5 + $0x53] ss:$0 sm:$0xff]
    %v3280 = vunpack.c.l.b16 %v3246
    %v3281 = vunpack.c.l.b16 %v3247
    %v3282 = vunpack.c.l.b16 %v3248
    %v3283 = vunpack.c.l.b16 %v3249
    %v3284 = vunpack.c.l.b16 %v3250
    %v3285 = vunpack.c.l.b16 %v3251
    %v3286 = vunpack.c.l.b16 %v3252
    %v3287 = vunpack.c.l.b16 %v3253
    %v3288 = vunpack.c.l.b16 %v3254
    %v3289 = vunpack.c.l.b16 %v3255
    %v3290 = vunpack.c.l.b16 %v3256
    %v3291 = vunpack.c.l.b16 %v3257
    %v3292 = vunpack.c.l.b16 %v3258
    %v3293 = vunpack.c.l.b16 %v3259
    %v3294 = vunpack.c.l.b16 %v3260
    %v3295 = vunpack.c.l.b16 %v3261
    %v3296 = vpack.c.b16 %v3281, %v3280
    %v3297 = vpack.c.b16 %v3283, %v3282
    %v3298 = vpack.c.b16 %v3285, %v3284
    %v3299 = vpack.c.b16 %v3287, %v3286
    %v3300 = vpack.c.b16 %v3289, %v3288
    %v3301 = vpack.c.b16 %v3291, %v3290
    %v3302 = vpack.c.b16 %v3293, %v3292
    %v3303 = vpack.c.b16 %v3295, %v3294
    %3312 = vmatprep.subr.bf16.mxu0 0
    %3313 = vmatpush1.bf16.msra.mxu0 %v3303
    %3314 = vmatprep.subr.bf16.mxu0 0
    %3315 = vmatpush1.bf16.msra.mxu0 %v3302
    %3316 = vmatprep.subr.bf16.mxu0 0
    %3317 = vmatpush1.bf16.msra.mxu0 %v3301
    %3318 = vmatprep.subr.bf16.mxu0 0
    %3319 = vmatpush1.bf16.msra.mxu0 %v3300
    %3320 = vmatprep.subr.bf16.mxu0 0
    %3321 = vmatpush1.bf16.msra.mxu0 %v3299
    %3322 = vmatprep.subr.bf16.mxu0 0
    %3323 = vmatpush1.bf16.msra.mxu0 %v3298
    %3324 = vmatprep.subr.bf16.mxu0 0
    %3325 = vmatpush1.bf16.msra.mxu0 %v3297
    %3326 = vmatprep.subr.bf16.mxu0 0
    %3327 = vmatpush1.bf16.msra.mxu0 %v3296
    %3328 = vmatprep.subr.bf16.mxu0 0
    %3329 = vmatpush2.bf16.msra.mxu0 0
    %3330 = vmatprep.subr.bf16.mxu0 0
    %3331 = vmatpush2.bf16.msra.mxu0 0
    %3332 = vmatprep.subr.bf16.mxu0 0
    %3333 = vmatpush2.bf16.msra.mxu0 0
    %3334 = vmatprep.subr.bf16.mxu0 0
    %3335 = vmatpush2.bf16.msra.mxu0 0
    %3336 = vmatprep.subr.bf16.mxu0 0
    %3337 = vmatpush2.bf16.msra.mxu0 0
    %3338 = vmatprep.subr.bf16.mxu0 0
    %3339 = vmatpush2.bf16.msra.mxu0 0
    %3340 = vmatprep.subr.bf16.mxu0 0
    %3341 = vmatpush2.bf16.msra.mxu0 0
    %3342 = vmatprep.subr.bf16.mxu0 0
    %3343 = vmatpush2.bf16.msra.mxu0 0
    %3344 = vmatprep.mubr.bf16.mxu0 0
    %3345 = vmatmul.mubr.bf16.gmra.mxu0 %v3262
    %v3346 = vpop.f32.mrf.mxu0
    %v3347 = vadd.f32 %v3263, %v3346
    %v3348 = vpop.f32.mrf.mxu0
    %v3349 = vpop.f32.mrf.mxu0
    %v3350 = vpop.f32.mrf.mxu0
    %3351 = vdwg.mxu0
    %vm3352 = vcmask 58368
    %3353 = vst.msk [vmem:[#allocation10] sm:$0x3] %vm3352, %v3347
    // Predicated region
    $region38: #{actor_forward.1} parent=1 // pred_check
      _
    $region39: #{actor_forward.1} parent=1 // pred_check_branch
      %3355 = sbr.rel (0) target = $region41
    $region40: #{actor_forward.1} parent=1 // pred_region
      %s3357 = ssub.s32 32, 32
      %3358 = vsyncadd [#allocation4], %s3357
      %s3360 = sshll.u32 [#allocation10], 4
      %s3361 = int_to_ptr.vmem [resolvable:$true] %s3360
      %3363 = dma.vmem_to_hbm [thread:$0]  %s3361, 32, %s5, [#allocation4]
    $region41: #{actor_forward.1} parent=1 // pred_fallthru
      _
    // Predicated region
    $region42: #{actor_forward.1} parent=1 // pred_check
      _
    $region43: #{actor_forward.1} parent=1 // pred_check_branch
      %3365 = sbr.rel (0) target = $region45
    $region44: #{actor_forward.1} parent=1 // pred_region
      %3366 = dma.done [#allocation4], 32
    $region45: #{actor_forward.1} parent=1 // pred_fallthru
      _
    %3367 = vsyncpa [#allocation3], 1
    %3368 = vsyncpa [#allocation6], 1
    %3369 = vsyncpa [#allocation9], 1
    %3370 = vsyncpa [#allocation4], 1

</llo_original>
